<compile_context>
chip_gen: v5e
topology: v5e:2x2
jax: 0.10.0
libtpu: 0.0.40
codegen_flags: <defaults>
</compile_context>

<pallas_src>
import numpy as np

import jax
import jax.numpy as jnp
from jax.experimental import pallas as pl
from jax.experimental.pallas import tpu as pltpu

_EPS = 1e-5


def _rup(v, m):
    return (v + m - 1) // m * m


# --------------------------------------------------------------------------
# Host-side slab packer: many small f32 matrices -> one 2-D slab, one DMA.
# --------------------------------------------------------------------------

class _SlabPacker:
    def __init__(self):
        self._off = 0
        self._blocks = []

    def add(self, arr):
        a = np.asarray(arr, np.float32)
        if a.ndim == 1:
            a = a[None, :]
        assert a.ndim == 2
        handle = (self._off, a.shape[0], a.shape[1])   # (row_off, rows, cols)
        self._blocks.append((self._off, a))
        self._off += _rup(a.shape[0], 8)               # keep every block 8-row aligned
        return handle

    def finalize(self):
        lanes = _rup(max(a.shape[1] for _, a in self._blocks), 128)
        rows = _rup(max(self._off, 8), 8)
        slab = np.zeros((rows, lanes), np.float32)
        for off, a in self._blocks:
            slab[off:off + a.shape[0], :a.shape[1]] = a
        return jnp.asarray(slab)


# --------------------------------------------------------------------------
# Structural operator constants (built with numpy at build time)
# --------------------------------------------------------------------------

def _shift_matrices(n, l):
    """Block-diag operators: (sdn @ z)[i] = z[i-1], (sup @ z)[i] = z[i+1],
    zero at the per-sample segment edges (== conv zero padding)."""
    sdn = np.zeros((n * l, n * l), np.float32)
    sup = np.zeros((n * l, n * l), np.float32)
    for b in range(n):
        for i in range(l):
            if i > 0:
                sdn[b * l + i, b * l + i - 1] = 1.0
            if i < l - 1:
                sup[b * l + i, b * l + i + 1] = 1.0
    return sdn, sup


def _pool_matrix(n, l):
    """AvgPool1d(3, stride=2, pad=1, count_include_pad=True) as one operator."""
    lout = l // 2
    a = np.zeros((n * lout, n * l), np.float32)
    for b in range(n):
        for j in range(lout):
            for t in (2 * j - 1, 2 * j, 2 * j + 1):
                if 0 <= t < l:
                    a[b * lout + j, b * l + t] = 1.0 / 3.0
    return a


def _interleave_matrices(n, l):
    """Even/odd phase interleave for ConvTranspose1d(k=2, s=2)."""
    u0 = np.zeros((n * 2 * l, n * l), np.float32)
    u1 = np.zeros((n * 2 * l, n * l), np.float32)
    for b in range(n):
        for j in range(l):
            u0[b * 2 * l + 2 * j, b * l + j] = 1.0
            u1[b * 2 * l + 2 * j + 1, b * l + j] = 1.0
    return u0, u1


# --------------------------------------------------------------------------
# Build: init params (PyTorch-style fresh init), pack into one slab, emit plan
# --------------------------------------------------------------------------

def build_unet1d(key, in_channels, start_channels, out_channels, N, L0):
    assert L0 % 16 == 0, "L must be divisible by 16 (4 pooling levels)"
    ch = [in_channels, start_channels, 2 * start_channels,
          4 * start_channels, 8 * start_channels]
    keys = iter(jax.random.split(key, 256))
    pk = _SlabPacker()

    def uni(shape, bound):
        return np.asarray(
            jax.random.uniform(next(keys), shape, jnp.float32, -bound, bound))

    sh_cache, pool_cache, ui_cache = {}, {}, {}

    def shift_handles(L):
        if L not in sh_cache:
            sdn, sup = _shift_matrices(N, L)
            sh_cache[L] = (pk.add(sdn), pk.add(sup))
        return sh_cache[L]

    def pool_handle(L):
        if L not in pool_cache:
            pool_cache[L] = pk.add(_pool_matrix(N, L))
        return pool_cache[L]

    def interleave_handles(L):
        if L not in ui_cache:
            u0, u1 = _interleave_matrices(N, L)
            ui_cache[L] = (pk.add(u0), pk.add(u1))
        return ui_cache[L]

    def conv3_plan(cins, cout, L):
        # Conv1d(k=3, pad=1) stored as per-part, per-tap (cin, cout) blocks.
        # Conv bias dropped: it feeds a training-mode BatchNorm whose batch-mean
        # subtraction cancels any per-channel constant exactly.
        bound = 1.0 / np.sqrt(3.0 * sum(cins))
        taps = []
        for cin in cins:
            hc = pk.add(uni((cin, cout), bound))
            if L > 1:
                hl = pk.add(uni((cin, cout), bound))
                hr = pk.add(uni((cin, cout), bound))
            else:                 # length-1 signal: both neighbours are padding
                hl = hr = None
            taps.append((hl, hc, hr))
        g = pk.add(np.asarray(jax.random.uniform(next(keys), (1, cout),
                                                 jnp.float32, 0.5, 1.5)))
        b = pk.add(np.asarray(jax.random.uniform(next(keys), (1, cout),
                                                 jnp.float32, -0.1, 0.1)))
        cp = {"taps": taps, "g": g, "b": b}
        if L > 1:
            cp["sdn"], cp["sup"] = shift_handles(L)
        return cp

    def deconv_plan(cin, cout, Lin):
        # ConvTranspose1d(k=2, s=2): even/odd phase weights fused into one
        # (cin, 2*cout) matmul weight.
        bound = 1.0 / np.sqrt(2.0 * cout)
        hu0, hu1 = interleave_handles(Lin)
        return {"cout": cout,
                "w": pk.add(uni((cin, 2 * cout), bound)),
                "b": pk.add(uni((1, cout), bound)),
                "u0": hu0, "u1": hu1}

    plan = {"N": N, "L0": L0, "out_ch": out_channels,
            "encoder": [], "decoder": []}

    L = L0
    for i in range(len(ch) - 1):
        cin, cout = ch[i], ch[i + 1]
        plan["encoder"].append({"conv1": conv3_plan([cin], cout, L),
                                "conv2": conv3_plan([cout], cout, L),
                                "pool": pool_handle(L)})
        L //= 2

    mid, amid = ch[-1], 2 * ch[-1]
    plan["mid"] = {"conv1": conv3_plan([mid], amid, L),
                   "conv2": conv3_plan([amid], amid, L),
                   "deconv": deconv_plan(amid, mid, L)}
    L *= 2

    for i in range(len(ch) - 1, 1, -1):
        ci, co, cs = ch[i], ch[i - 1], ch[i]
        rb = 1.0 / np.sqrt(float(ci + cs))
        plan["decoder"].append({
            "red": {"wu": pk.add(uni((ci, ci), rb)),
                    "ws": pk.add(uni((cs, ci), rb)),
                    "b": pk.add(uni((1, ci), rb))},
            "conv": conv3_plan([ci], co, L),
            "deconv": deconv_plan(co, co, L)})
        L *= 2

    ob = 1.0 / np.sqrt(float(start_channels))
    plan["out"] = {"conv": conv3_plan([start_channels, start_channels],
                                      start_channels, L),
                   "w2": pk.add(uni((start_channels, out_channels), ob)),
                   "b2": pk.add(uni((1, out_channels), ob))}
    assert L == L0
    return pk.finalize(), plan


# --------------------------------------------------------------------------
# The fused kernel (whole forward pass, grid-less, everything in VMEM/vregs)
# --------------------------------------------------------------------------

def _make_kernel(plan):
    def kernel(x_ref, slab_ref, o_ref):

        def tk(h):                       # load one packed block from the slab
            off, r, c = h
            return slab_ref[off:off + r, 0:c]

        def conv3_bn_relu(parts, cp):
            # Conv1d(k=3, pad=1): 3 weight matmuls + 2 block-diag shift matmuls.
            yc = None
            yl = None
            yr = None
            for p, (hl, hc, hr) in zip(parts, cp["taps"]):
                d = jnp.dot(p, tk(hc), preferred_element_type=jnp.float32)
                yc = d if yc is None else yc + d
                if hl is not None:
                    dl = jnp.dot(p, tk(hl), preferred_element_type=jnp.float32)
                    yl = dl if yl is None else yl + dl
                    dr = jnp.dot(p, tk(hr), preferred_element_type=jnp.float32)
                    yr = dr if yr is None else yr + dr
            y = yc
            if yl is not None:
                y = (y
                     + jnp.dot(tk(cp["sdn"]), yl, preferred_element_type=jnp.float32)
                     + jnp.dot(tk(cp["sup"]), yr, preferred_element_type=jnp.float32))
            # Training-mode BatchNorm1d (batch stats over the N*L rows), affine
            # folded into y*s + t, ReLU fused.  One-pass variance, clamped at 0.
            inv_n = 1.0 / float(y.shape[0])
            mean = jnp.sum(y, axis=0, keepdims=True) * inv_n
            msq = jnp.sum(y * y, axis=0, keepdims=True) * inv_n
            var = jnp.maximum(msq - mean * mean, 0.0)
            s = tk(cp["g"]) * jax.lax.rsqrt(var + _EPS)
            t = tk(cp["b"]) - mean * s
            return jnp.maximum(y * s + t, 0.0)

        def avgpool(x, hp):
            # AvgPool1d(3, s=2, p=1, count_include_pad) as one constant matmul.
            return jnp.dot(tk(hp), x, preferred_element_type=jnp.float32)

        def deconv(x, dp):
            # ConvTranspose1d(k=2, s=2): one fused weight matmul, then the
            # even/odd phases are interleaved with two constant matmuls.
            c = dp["cout"]
            z = jnp.dot(x, tk(dp["w"]), preferred_element_type=jnp.float32)
            even = z[:, 0:c]
            odd = z[:, c:2 * c]
            return (jnp.dot(tk(dp["u0"]), even, preferred_element_type=jnp.float32)
                    + jnp.dot(tk(dp["u1"]), odd, preferred_element_type=jnp.float32)
                    + tk(dp["b"]))

        def ch_reduce(xu, xs, rp):
            # 1x1 conv on the (implicit) [upsampled, skip] channel concat.
            y = (jnp.dot(xu, tk(rp["wu"]), preferred_element_type=jnp.float32)
                 + jnp.dot(xs, tk(rp["ws"]), preferred_element_type=jnp.float32)
                 + tk(rp["b"]))
            return jnp.maximum(y, 0.0)

        x = x_ref[...]                        # (N*L0, Cin), channels on lanes

        # ----- encoder -----
        skips = []
        for ep in plan["encoder"]:
            x = conv3_bn_relu([x], ep["conv1"])
            x = conv3_bn_relu([x], ep["conv2"])
            skips.append(x)                   # pre-pool activation is the skip
            x = avgpool(x, ep["pool"])

        # ----- mid layer -----
        mp = plan["mid"]
        x = conv3_bn_relu([x], mp["conv1"])
        x = conv3_bn_relu([x], mp["conv2"])
        x = deconv(x, mp["deconv"])

        # ----- decoder (skip concat folded into ch_reduce / output conv) -----
        # TODO(synk): `self.skips[...].to('cpu')` host offload in the PyTorch
        # forward has no numeric effect and is not reproduced.
        skip = skips[-1]
        for i, dp in enumerate(plan["decoder"]):
            x = ch_reduce(x, skip, dp["red"])
            x = conv3_bn_relu([x], dp["conv"])
            x = deconv(x, dp["deconv"])
            skip = skips[-i - 2]

        # ----- output head -----
        op = plan["out"]
        x = conv3_bn_relu([x, skip], op["conv"])
        o_ref[...] = (jnp.dot(x, tk(op["w2"]), preferred_element_type=jnp.float32)
                      + tk(op["b2"]))

    return kernel


# --------------------------------------------------------------------------
# Forward-pass wrapper: one fused grid-less pallas_call, two input DMAs
# --------------------------------------------------------------------------

def make_unet1d_forward(plan):
    kernel = _make_kernel(plan)
    N, L0, out_ch = plan["N"], plan["L0"], plan["out_ch"]
    vmem = pl.BlockSpec(memory_space=pltpu.MemorySpace.VMEM)
    call = pl.pallas_call(
        kernel,
        out_shape=jax.ShapeDtypeStruct((N * L0, out_ch), jnp.float32),
        in_specs=[vmem, vmem],
        out_specs=vmem,
        compiler_params=pltpu.CompilerParams(
            vmem_limit_bytes=32 * 1024 * 1024),   # footprint ~1.3 MiB, ample headroom
    )

    def forward(slab, x):
        # x: (N, L0, Cin) channels-last (PyTorch input (N, Cin, L) transposed).
        xf = x.reshape(N * L0, x.shape[-1])
        y = call(xf, slab)
        return y.reshape(N, L0, out_ch)

    return forward


# --------------------------------------------------------------------------

if __name__ == "__main__":
    N, L = 2, 16                        # L divisible by 16 (4 pooling levels)
    in_channels, start_channels, out_channels = 3, 8, 2

    key = jax.random.PRNGKey(0)
    kx, kp = jax.random.split(key)
    # PyTorch input would be (N, C, L) = (2, 3, 16); channels-last here.
    x = jax.random.normal(kx, (N, L, in_channels), jnp.float32)

    slab, plan = build_unet1d(kp, in_channels, start_channels, out_channels, N, L)

    fwd = jax.jit(make_unet1d_forward(plan))
    y = jax.block_until_ready(fwd(slab, x))

    assert y.shape == (N, L, out_channels), y.shape
    assert bool(jnp.all(jnp.isfinite(y)))
    print("KERNEL_OK")
</pallas_src>

<mosaic_0001>
module attributes {stable_mosaic.version = 11 : i64} {
  func.func @kernel(%arg0: memref<32x3xf32, #tpu.memory_space<vmem>>, %arg1: memref<2128x128xf32, #tpu.memory_space<vmem>>, %arg2: memref<32x2xf32, #tpu.memory_space<vmem>>) attributes {dimension_semantics = [], scalar_prefetch = 0 : i64, scratch_operands = 0 : i64, tpu.core_type = #tpu.core_type<tc>} {
    %c0 = arith.constant 0 : index
    %c0_0 = arith.constant 0 : index
    %0 = vector.load %arg0[%c0, %c0_0] : memref<32x3xf32, #tpu.memory_space<vmem>>, vector<32x3xf32>
    %c0_1 = arith.constant 0 : index
    %c0_2 = arith.constant 0 : index
    %1 = vector.load %arg1[%c0_1, %c0_2] : memref<2128x128xf32, #tpu.memory_space<vmem>>, vector<3x8xf32>
    %cst = arith.constant dense<0.000000e+00> : vector<32x8xf32>
    %2 = tpu.matmul %0, %1, %cst {dimension_numbers = #tpu.dot_dimension_numbers<[1], [0], [0], [1], [0, 0, 1, 1], [], []>} : vector<32x3xf32>, vector<3x8xf32>, vector<32x8xf32> -> vector<32x8xf32>
    %c8 = arith.constant 8 : index
    %c0_3 = arith.constant 0 : index
    %3 = vector.load %arg1[%c8, %c0_3] : memref<2128x128xf32, #tpu.memory_space<vmem>>, vector<3x8xf32>
    %cst_4 = arith.constant dense<0.000000e+00> : vector<32x8xf32>
    %4 = tpu.matmul %0, %3, %cst_4 {dimension_numbers = #tpu.dot_dimension_numbers<[1], [0], [0], [1], [0, 0, 1, 1], [], []>} : vector<32x3xf32>, vector<3x8xf32>, vector<32x8xf32> -> vector<32x8xf32>
    %c16 = arith.constant 16 : index
    %c0_5 = arith.constant 0 : index
    %5 = vector.load %arg1[%c16, %c0_5] : memref<2128x128xf32, #tpu.memory_space<vmem>>, vector<3x8xf32>
    %cst_6 = arith.constant dense<0.000000e+00> : vector<32x8xf32>
    %6 = tpu.matmul %0, %5, %cst_6 {dimension_numbers = #tpu.dot_dimension_numbers<[1], [0], [0], [1], [0, 0, 1, 1], [], []>} : vector<32x3xf32>, vector<3x8xf32>, vector<32x8xf32> -> vector<32x8xf32>
    %c40 = arith.constant 40 : index
    %c0_7 = arith.constant 0 : index
    %7 = vector.load %arg1[%c40, %c0_7] : memref<2128x128xf32, #tpu.memory_space<vmem>>, vector<32x32xf32>
    %cst_8 = arith.constant dense<0.000000e+00> : vector<32x8xf32>
    %8 = tpu.matmul %7, %4, %cst_8 {dimension_numbers = #tpu.dot_dimension_numbers<[1], [0], [0], [1], [0, 0, 1, 1], [], []>} : vector<32x32xf32>, vector<32x8xf32>, vector<32x8xf32> -> vector<32x8xf32>
    %9 = arith.addf %2, %8 : vector<32x8xf32>
    %c72 = arith.constant 72 : index
    %c0_9 = arith.constant 0 : index
    %10 = vector.load %arg1[%c72, %c0_9] : memref<2128x128xf32, #tpu.memory_space<vmem>>, vector<32x32xf32>
    %cst_10 = arith.constant dense<0.000000e+00> : vector<32x8xf32>
    %11 = tpu.matmul %10, %6, %cst_10 {dimension_numbers = #tpu.dot_dimension_numbers<[1], [0], [0], [1], [0, 0, 1, 1], [], []>} : vector<32x32xf32>, vector<32x8xf32>, vector<32x8xf32> -> vector<32x8xf32>
    %12 = arith.addf %9, %11 : vector<32x8xf32>
    %cst_11 = arith.constant dense<0.000000e+00> : vector<8xf32>
    %13 = vector.multi_reduction <add>, %12, %cst_11 [0] : vector<32x8xf32> to vector<8xf32>
    %14 = vector.shape_cast %13 : vector<8xf32> to vector<1x8xf32>
    %cst_12 = arith.constant 3.125000e-02 : f32
    %15 = vector.broadcast %cst_12 : f32 to vector<1x8xf32>
    %16 = arith.mulf %14, %15 : vector<1x8xf32>
    %17 = arith.mulf %12, %12 : vector<32x8xf32>
    %cst_13 = arith.constant dense<0.000000e+00> : vector<8xf32>
    %18 = vector.multi_reduction <add>, %17, %cst_13 [0] : vector<32x8xf32> to vector<8xf32>
    %19 = vector.shape_cast %18 : vector<8xf32> to vector<1x8xf32>
    %cst_14 = arith.constant 3.125000e-02 : f32
    %20 = vector.broadcast %cst_14 : f32 to vector<1x8xf32>
    %21 = arith.mulf %19, %20 : vector<1x8xf32>
    %22 = arith.mulf %16, %16 : vector<1x8xf32>
    %23 = arith.subf %21, %22 : vector<1x8xf32>
    %cst_15 = arith.constant 0.000000e+00 : f32
    %24 = vector.broadcast %cst_15 : f32 to vector<1x8xf32>
    %25 = arith.maximumf %23, %24 : vector<1x8xf32>
    %c24 = arith.constant 24 : index
    %c0_16 = arith.constant 0 : index
    %26 = vector.load %arg1[%c24, %c0_16] : memref<2128x128xf32, #tpu.memory_space<vmem>>, vector<1x8xf32>
    %cst_17 = arith.constant 9.99999974E-6 : f32
    %27 = vector.broadcast %cst_17 : f32 to vector<1x8xf32>
    %28 = arith.addf %25, %27 : vector<1x8xf32>
    %29 = math.rsqrt %28 : vector<1x8xf32>
    %30 = arith.mulf %26, %29 : vector<1x8xf32>
    %c32 = arith.constant 32 : index
    %c0_18 = arith.constant 0 : index
    %31 = vector.load %arg1[%c32, %c0_18] : memref<2128x128xf32, #tpu.memory_space<vmem>>, vector<1x8xf32>
    %32 = arith.mulf %16, %30 : vector<1x8xf32>
    %33 = arith.subf %31, %32 : vector<1x8xf32>
    %34 = vector.broadcast %30 : vector<1x8xf32> to vector<32x8xf32>
    %35 = arith.mulf %12, %34 : vector<32x8xf32>
    %36 = vector.broadcast %33 : vector<1x8xf32> to vector<32x8xf32>
    %37 = arith.addf %35, %36 : vector<32x8xf32>
    %cst_19 = arith.constant 0.000000e+00 : f32
    %38 = vector.broadcast %cst_19 : f32 to vector<32x8xf32>
    %39 = arith.maximumf %37, %38 : vector<32x8xf32>
    %c104 = arith.constant 104 : index
    %c0_20 = arith.constant 0 : index
    %40 = vector.load %arg1[%c104, %c0_20] : memref<2128x128xf32, #tpu.memory_space<vmem>>, vector<8x8xf32>
    %cst_21 = arith.constant dense<0.000000e+00> : vector<32x8xf32>
    %41 = tpu.matmul %39, %40, %cst_21 {dimension_numbers = #tpu.dot_dimension_numbers<[1], [0], [0], [1], [0, 0, 1, 1], [], []>} : vector<32x8xf32>, vector<8x8xf32>, vector<32x8xf32> -> vector<32x8xf32>
    %c112 = arith.constant 112 : index
    %c0_22 = arith.constant 0 : index
    %42 = vector.load %arg1[%c112, %c0_22] : memref<2128x128xf32, #tpu.memory_space<vmem>>, vector<8x8xf32>
    %cst_23 = arith.constant dense<0.000000e+00> : vector<32x8xf32>
    %43 = tpu.matmul %39, %42, %cst_23 {dimension_numbers = #tpu.dot_dimension_numbers<[1], [0], [0], [1], [0, 0, 1, 1], [], []>} : vector<32x8xf32>, vector<8x8xf32>, vector<32x8xf32> -> vector<32x8xf32>
    %c120 = arith.constant 120 : index
    %c0_24 = arith.constant 0 : index
    %44 = vector.load %arg1[%c120, %c0_24] : memref<2128x128xf32, #tpu.memory_space<vmem>>, vector<8x8xf32>
    %cst_25 = arith.constant dense<0.000000e+00> : vector<32x8xf32>
    %45 = tpu.matmul %39, %44, %cst_25 {dimension_numbers = #tpu.dot_dimension_numbers<[1], [0], [0], [1], [0, 0, 1, 1], [], []>} : vector<32x8xf32>, vector<8x8xf32>, vector<32x8xf32> -> vector<32x8xf32>
    %c40_26 = arith.constant 40 : index
    %c0_27 = arith.constant 0 : index
    %46 = vector.load %arg1[%c40_26, %c0_27] : memref<2128x128xf32, #tpu.memory_space<vmem>>, vector<32x32xf32>
    %cst_28 = arith.constant dense<0.000000e+00> : vector<32x8xf32>
    %47 = tpu.matmul %46, %43, %cst_28 {dimension_numbers = #tpu.dot_dimension_numbers<[1], [0], [0], [1], [0, 0, 1, 1], [], []>} : vector<32x32xf32>, vector<32x8xf32>, vector<32x8xf32> -> vector<32x8xf32>
    %48 = arith.addf %41, %47 : vector<32x8xf32>
    %c72_29 = arith.constant 72 : index
    %c0_30 = arith.constant 0 : index
    %49 = vector.load %arg1[%c72_29, %c0_30] : memref<2128x128xf32, #tpu.memory_space<vmem>>, vector<32x32xf32>
    %cst_31 = arith.constant dense<0.000000e+00> : vector<32x8xf32>
    %50 = tpu.matmul %49, %45, %cst_31 {dimension_numbers = #tpu.dot_dimension_numbers<[1], [0], [0], [1], [0, 0, 1, 1], [], []>} : vector<32x32xf32>, vector<32x8xf32>, vector<32x8xf32> -> vector<32x8xf32>
    %51 = arith.addf %48, %50 : vector<32x8xf32>
    %cst_32 = arith.constant dense<0.000000e+00> : vector<8xf32>
    %52 = vector.multi_reduction <add>, %51, %cst_32 [0] : vector<32x8xf32> to vector<8xf32>
    %53 = vector.shape_cast %52 : vector<8xf32> to vector<1x8xf32>
    %cst_33 = arith.constant 3.125000e-02 : f32
    %54 = vector.broadcast %cst_33 : f32 to vector<1x8xf32>
    %55 = arith.mulf %53, %54 : vector<1x8xf32>
    %56 = arith.mulf %51, %51 : vector<32x8xf32>
    %cst_34 = arith.constant dense<0.000000e+00> : vector<8xf32>
    %57 = vector.multi_reduction <add>, %56, %cst_34 [0] : vector<32x8xf32> to vector<8xf32>
    %58 = vector.shape_cast %57 : vector<8xf32> to vector<1x8xf32>
    %cst_35 = arith.constant 3.125000e-02 : f32
    %59 = vector.broadcast %cst_35 : f32 to vector<1x8xf32>
    %60 = arith.mulf %58, %59 : vector<1x8xf32>
    %61 = arith.mulf %55, %55 : vector<1x8xf32>
    %62 = arith.subf %60, %61 : vector<1x8xf32>
    %cst_36 = arith.constant 0.000000e+00 : f32
    %63 = vector.broadcast %cst_36 : f32 to vector<1x8xf32>
    %64 = arith.maximumf %62, %63 : vector<1x8xf32>
    %c128 = arith.constant 128 : index
    %c0_37 = arith.constant 0 : index
    %65 = vector.load %arg1[%c128, %c0_37] : memref<2128x128xf32, #tpu.memory_space<vmem>>, vector<1x8xf32>
    %cst_38 = arith.constant 9.99999974E-6 : f32
    %66 = vector.broadcast %cst_38 : f32 to vector<1x8xf32>
    %67 = arith.addf %64, %66 : vector<1x8xf32>
    %68 = math.rsqrt %67 : vector<1x8xf32>
    %69 = arith.mulf %65, %68 : vector<1x8xf32>
    %c136 = arith.constant 136 : index
    %c0_39 = arith.constant 0 : index
    %70 = vector.load %arg1[%c136, %c0_39] : memref<2128x128xf32, #tpu.memory_space<vmem>>, vector<1x8xf32>
    %71 = arith.mulf %55, %69 : vector<1x8xf32>
    %72 = arith.subf %70, %71 : vector<1x8xf32>
    %73 = vector.broadcast %69 : vector<1x8xf32> to vector<32x8xf32>
    %74 = arith.mulf %51, %73 : vector<32x8xf32>
    %75 = vector.broadcast %72 : vector<1x8xf32> to vector<32x8xf32>
    %76 = arith.addf %74, %75 : vector<32x8xf32>
    %cst_40 = arith.constant 0.000000e+00 : f32
    %77 = vector.broadcast %cst_40 : f32 to vector<32x8xf32>
    %78 = arith.maximumf %76, %77 : vector<32x8xf32>
    %c144 = arith.constant 144 : index
    %c0_41 = arith.constant 0 : index
    %79 = vector.load %arg1[%c144, %c0_41] : memref<2128x128xf32, #tpu.memory_space<vmem>>, vector<16x32xf32>
    %cst_42 = arith.constant dense<0.000000e+00> : vector<16x8xf32>
    %80 = tpu.matmul %79, %78, %cst_42 {dimension_numbers = #tpu.dot_dimension_numbers<[1], [0], [0], [1], [0, 0, 1, 1], [], []>} : vector<16x32xf32>, vector<32x8xf32>, vector<16x8xf32> -> vector<16x8xf32>
    %c160 = arith.constant 160 : index
    %c0_43 = arith.constant 0 : index
    %81 = vector.load %arg1[%c160, %c0_43] : memref<2128x128xf32, #tpu.memory_space<vmem>>, vector<8x16xf32>
    %cst_44 = arith.constant dense<0.000000e+00> : vector<16x16xf32>
    %82 = tpu.matmul %80, %81, %cst_44 {dimension_numbers = #tpu.dot_dimension_numbers<[1], [0], [0], [1], [0, 0, 1, 1], [], []>} : vector<16x8xf32>, vector<8x16xf32>, vector<16x16xf32> -> vector<16x16xf32>
    %c168 = arith.constant 168 : index
    %c0_45 = arith.constant 0 : index
    %83 = vector.load %arg1[%c168, %c0_45] : memref<2128x128xf32, #tpu.memory_space<vmem>>, vector<8x16xf32>
    %cst_46 = arith.constant dense<0.000000e+00> : vector<16x16xf32>
    %84 = tpu.matmul %80, %83, %cst_46 {dimension_numbers = #tpu.dot_dimension_numbers<[1], [0], [0], [1], [0, 0, 1, 1], [], []>} : vector<16x8xf32>, vector<8x16xf32>, vector<16x16xf32> -> vector<16x16xf32>
    %c176 = arith.constant 176 : index
    %c0_47 = arith.constant 0 : index
    %85 = vector.load %arg1[%c176, %c0_47] : memref<2128x128xf32, #tpu.memory_space<vmem>>, vector<8x16xf32>
    %cst_48 = arith.constant dense<0.000000e+00> : vector<16x16xf32>
    %86 = tpu.matmul %80, %85, %cst_48 {dimension_numbers = #tpu.dot_dimension_numbers<[1], [0], [0], [1], [0, 0, 1, 1], [], []>} : vector<16x8xf32>, vector<8x16xf32>, vector<16x16xf32> -> vector<16x16xf32>
    %c200 = arith.constant 200 : index
    %c0_49 = arith.constant 0 : index
    %87 = vector.load %arg1[%c200, %c0_49] : memref<2128x128xf32, #tpu.memory_space<vmem>>, vector<16x16xf32>
    %cst_50 = arith.constant dense<0.000000e+00> : vector<16x16xf32>
    %88 = tpu.matmul %87, %84, %cst_50 {dimension_numbers = #tpu.dot_dimension_numbers<[1], [0], [0], [1], [0, 0, 1, 1], [], []>} : vector<16x16xf32>, vector<16x16xf32>, vector<16x16xf32> -> vector<16x16xf32>
    %89 = arith.addf %82, %88 : vector<16x16xf32>
    %c216 = arith.constant 216 : index
    %c0_51 = arith.constant 0 : index
    %90 = vector.load %arg1[%c216, %c0_51] : memref<2128x128xf32, #tpu.memory_space<vmem>>, vector<16x16xf32>
    %cst_52 = arith.constant dense<0.000000e+00> : vector<16x16xf32>
    %91 = tpu.matmul %90, %86, %cst_52 {dimension_numbers = #tpu.dot_dimension_numbers<[1], [0], [0], [1], [0, 0, 1, 1], [], []>} : vector<16x16xf32>, vector<16x16xf32>, vector<16x16xf32> -> vector<16x16xf32>
    %92 = arith.addf %89, %91 : vector<16x16xf32>
    %cst_53 = arith.constant dense<0.000000e+00> : vector<16xf32>
    %93 = vector.multi_reduction <add>, %92, %cst_53 [0] : vector<16x16xf32> to vector<16xf32>
    %94 = vector.shape_cast %93 : vector<16xf32> to vector<1x16xf32>
    %cst_54 = arith.constant 6.250000e-02 : f32
    %95 = vector.broadcast %cst_54 : f32 to vector<1x16xf32>
    %96 = arith.mulf %94, %95 : vector<1x16xf32>
    %97 = arith.mulf %92, %92 : vector<16x16xf32>
    %cst_55 = arith.constant dense<0.000000e+00> : vector<16xf32>
    %98 = vector.multi_reduction <add>, %97, %cst_55 [0] : vector<16x16xf32> to vector<16xf32>
    %99 = vector.shape_cast %98 : vector<16xf32> to vector<1x16xf32>
    %cst_56 = arith.constant 6.250000e-02 : f32
    %100 = vector.broadcast %cst_56 : f32 to vector<1x16xf32>
    %101 = arith.mulf %99, %100 : vector<1x16xf32>
    %102 = arith.mulf %96, %96 : vector<1x16xf32>
    %103 = arith.subf %101, %102 : vector<1x16xf32>
    %cst_57 = arith.constant 0.000000e+00 : f32
    %104 = vector.broadcast %cst_57 : f32 to vector<1x16xf32>
    %105 = arith.maximumf %103, %104 : vector<1x16xf32>
    %c184 = arith.constant 184 : index
    %c0_58 = arith.constant 0 : index
    %106 = vector.load %arg1[%c184, %c0_58] : memref<2128x128xf32, #tpu.memory_space<vmem>>, vector<1x16xf32>
    %cst_59 = arith.constant 9.99999974E-6 : f32
    %107 = vector.broadcast %cst_59 : f32 to vector<1x16xf32>
    %108 = arith.addf %105, %107 : vector<1x16xf32>
    %109 = math.rsqrt %108 : vector<1x16xf32>
    %110 = arith.mulf %106, %109 : vector<1x16xf32>
    %c192 = arith.constant 192 : index
    %c0_60 = arith.constant 0 : index
    %111 = vector.load %arg1[%c192, %c0_60] : memref<2128x128xf32, #tpu.memory_space<vmem>>, vector<1x16xf32>
    %112 = arith.mulf %96, %110 : vector<1x16xf32>
    %113 = arith.subf %111, %112 : vector<1x16xf32>
    %114 = vector.broadcast %110 : vector<1x16xf32> to vector<16x16xf32>
    %115 = arith.mulf %92, %114 : vector<16x16xf32>
    %116 = vector.broadcast %113 : vector<1x16xf32> to vector<16x16xf32>
    %117 = arith.addf %115, %116 : vector<16x16xf32>
    %cst_61 = arith.constant 0.000000e+00 : f32
    %118 = vector.broadcast %cst_61 : f32 to vector<16x16xf32>
    %119 = arith.maximumf %117, %118 : vector<16x16xf32>
    %c232 = arith.constant 232 : index
    %c0_62 = arith.constant 0 : index
    %120 = vector.load %arg1[%c232, %c0_62] : memref<2128x128xf32, #tpu.memory_space<vmem>>, vector<16x16xf32>
    %cst_63 = arith.constant dense<0.000000e+00> : vector<16x16xf32>
    %121 = tpu.matmul %119, %120, %cst_63 {dimension_numbers = #tpu.dot_dimension_numbers<[1], [0], [0], [1], [0, 0, 1, 1], [], []>} : vector<16x16xf32>, vector<16x16xf32>, vector<16x16xf32> -> vector<16x16xf32>
    %c248 = arith.constant 248 : index
    %c0_64 = arith.constant 0 : index
    %122 = vector.load %arg1[%c248, %c0_64] : memref<2128x128xf32, #tpu.memory_space<vmem>>, vector<16x16xf32>
    %cst_65 = arith.constant dense<0.000000e+00> : vector<16x16xf32>
    %123 = tpu.matmul %119, %122, %cst_65 {dimension_numbers = #tpu.dot_dimension_numbers<[1], [0], [0], [1], [0, 0, 1, 1], [], []>} : vector<16x16xf32>, vector<16x16xf32>, vector<16x16xf32> -> vector<16x16xf32>
    %c264 = arith.constant 264 : index
    %c0_66 = arith.constant 0 : index
    %124 = vector.load %arg1[%c264, %c0_66] : memref<2128x128xf32, #tpu.memory_space<vmem>>, vector<16x16xf32>
    %cst_67 = arith.constant dense<0.000000e+00> : vector<16x16xf32>
    %125 = tpu.matmul %119, %124, %cst_67 {dimension_numbers = #tpu.dot_dimension_numbers<[1], [0], [0], [1], [0, 0, 1, 1], [], []>} : vector<16x16xf32>, vector<16x16xf32>, vector<16x16xf32> -> vector<16x16xf32>
    %c200_68 = arith.constant 200 : index
    %c0_69 = arith.constant 0 : index
    %126 = vector.load %arg1[%c200_68, %c0_69] : memref<2128x128xf32, #tpu.memory_space<vmem>>, vector<16x16xf32>
    %cst_70 = arith.constant dense<0.000000e+00> : vector<16x16xf32>
    %127 = tpu.matmul %126, %123, %cst_70 {dimension_numbers = #tpu.dot_dimension_numbers<[1], [0], [0], [1], [0, 0, 1, 1], [], []>} : vector<16x16xf32>, vector<16x16xf32>, vector<16x16xf32> -> vector<16x16xf32>
    %128 = arith.addf %121, %127 : vector<16x16xf32>
    %c216_71 = arith.constant 216 : index
    %c0_72 = arith.constant 0 : index
    %129 = vector.load %arg1[%c216_71, %c0_72] : memref<2128x128xf32, #tpu.memory_space<vmem>>, vector<16x16xf32>
    %cst_73 = arith.constant dense<0.000000e+00> : vector<16x16xf32>
    %130 = tpu.matmul %129, %125, %cst_73 {dimension_numbers = #tpu.dot_dimension_numbers<[1], [0], [0], [1], [0, 0, 1, 1], [], []>} : vector<16x16xf32>, vector<16x16xf32>, vector<16x16xf32> -> vector<16x16xf32>
    %131 = arith.addf %128, %130 : vector<16x16xf32>
    %cst_74 = arith.constant dense<0.000000e+00> : vector<16xf32>
    %132 = vector.multi_reduction <add>, %131, %cst_74 [0] : vector<16x16xf32> to vector<16xf32>
    %133 = vector.shape_cast %132 : vector<16xf32> to vector<1x16xf32>
    %cst_75 = arith.constant 6.250000e-02 : f32
    %134 = vector.broadcast %cst_75 : f32 to vector<1x16xf32>
    %135 = arith.mulf %133, %134 : vector<1x16xf32>
    %136 = arith.mulf %131, %131 : vector<16x16xf32>
    %cst_76 = arith.constant dense<0.000000e+00> : vector<16xf32>
    %137 = vector.multi_reduction <add>, %136, %cst_76 [0] : vector<16x16xf32> to vector<16xf32>
    %138 = vector.shape_cast %137 : vector<16xf32> to vector<1x16xf32>
    %cst_77 = arith.constant 6.250000e-02 : f32
    %139 = vector.broadcast %cst_77 : f32 to vector<1x16xf32>
    %140 = arith.mulf %138, %139 : vector<1x16xf32>
    %141 = arith.mulf %135, %135 : vector<1x16xf32>
    %142 = arith.subf %140, %141 : vector<1x16xf32>
    %cst_78 = arith.constant 0.000000e+00 : f32
    %143 = vector.broadcast %cst_78 : f32 to vector<1x16xf32>
    %144 = arith.maximumf %142, %143 : vector<1x16xf32>
    %c280 = arith.constant 280 : index
    %c0_79 = arith.constant 0 : index
    %145 = vector.load %arg1[%c280, %c0_79] : memref<2128x128xf32, #tpu.memory_space<vmem>>, vector<1x16xf32>
    %cst_80 = arith.constant 9.99999974E-6 : f32
    %146 = vector.broadcast %cst_80 : f32 to vector<1x16xf32>
    %147 = arith.addf %144, %146 : vector<1x16xf32>
    %148 = math.rsqrt %147 : vector<1x16xf32>
    %149 = arith.mulf %145, %148 : vector<1x16xf32>
    %c288 = arith.constant 288 : index
    %c0_81 = arith.constant 0 : index
    %150 = vector.load %arg1[%c288, %c0_81] : memref<2128x128xf32, #tpu.memory_space<vmem>>, vector<1x16xf32>
    %151 = arith.mulf %135, %149 : vector<1x16xf32>
    %152 = arith.subf %150, %151 : vector<1x16xf32>
    %153 = vector.broadcast %149 : vector<1x16xf32> to vector<16x16xf32>
    %154 = arith.mulf %131, %153 : vector<16x16xf32>
    %155 = vector.broadcast %152 : vector<1x16xf32> to vector<16x16xf32>
    %156 = arith.addf %154, %155 : vector<16x16xf32>
    %cst_82 = arith.constant 0.000000e+00 : f32
    %157 = vector.broadcast %cst_82 : f32 to vector<16x16xf32>
    %158 = arith.maximumf %156, %157 : vector<16x16xf32>
    %c296 = arith.constant 296 : index
    %c0_83 = arith.constant 0 : index
    %159 = vector.load %arg1[%c296, %c0_83] : memref<2128x128xf32, #tpu.memory_space<vmem>>, vector<8x16xf32>
    %cst_84 = arith.constant dense<0.000000e+00> : vector<8x16xf32>
    %160 = tpu.matmul %159, %158, %cst_84 {dimension_numbers = #tpu.dot_dimension_numbers<[1], [0], [0], [1], [0, 0, 1, 1], [], []>} : vector<8x16xf32>, vector<16x16xf32>, vector<8x16xf32> -> vector<8x16xf32>
    %c304 = arith.constant 304 : index
    %c0_85 = arith.constant 0 : index
    %161 = vector.load %arg1[%c304, %c0_85] : memref<2128x128xf32, #tpu.memory_space<vmem>>, vector<16x32xf32>
    %cst_86 = arith.constant dense<0.000000e+00> : vector<8x32xf32>
    %162 = tpu.matmul %160, %161, %cst_86 {dimension_numbers = #tpu.dot_dimension_numbers<[1], [0], [0], [1], [0, 0, 1, 1], [], []>} : vector<8x16xf32>, vector<16x32xf32>, vector<8x32xf32> -> vector<8x32xf32>
    %c320 = arith.constant 320 : index
    %c0_87 = arith.constant 0 : index
    %163 = vector.load %arg1[%c320, %c0_87] : memref<2128x128xf32, #tpu.memory_space<vmem>>, vector<16x32xf32>
    %cst_88 = arith.constant dense<0.000000e+00> : vector<8x32xf32>
    %164 = tpu.matmul %160, %163, %cst_88 {dimension_numbers = #tpu.dot_dimension_numbers<[1], [0], [0], [1], [0, 0, 1, 1], [], []>} : vector<8x16xf32>, vector<16x32xf32>, vector<8x32xf32> -> vector<8x32xf32>
    %c336 = arith.constant 336 : index
    %c0_89 = arith.constant 0 : index
    %165 = vector.load %arg1[%c336, %c0_89] : memref<2128x128xf32, #tpu.memory_space<vmem>>, vector<16x32xf32>
    %cst_90 = arith.constant dense<0.000000e+00> : vector<8x32xf32>
    %166 = tpu.matmul %160, %165, %cst_90 {dimension_numbers = #tpu.dot_dimension_numbers<[1], [0], [0], [1], [0, 0, 1, 1], [], []>} : vector<8x16xf32>, vector<16x32xf32>, vector<8x32xf32> -> vector<8x32xf32>
    %c368 = arith.constant 368 : index
    %c0_91 = arith.constant 0 : index
    %167 = vector.load %arg1[%c368, %c0_91] : memref<2128x128xf32, #tpu.memory_space<vmem>>, vector<8x8xf32>
    %cst_92 = arith.constant dense<0.000000e+00> : vector<8x32xf32>
    %168 = tpu.matmul %167, %164, %cst_92 {dimension_numbers = #tpu.dot_dimension_numbers<[1], [0], [0], [1], [0, 0, 1, 1], [], []>} : vector<8x8xf32>, vector<8x32xf32>, vector<8x32xf32> -> vector<8x32xf32>
    %169 = arith.addf %162, %168 : vector<8x32xf32>
    %c376 = arith.constant 376 : index
    %c0_93 = arith.constant 0 : index
    %170 = vector.load %arg1[%c376, %c0_93] : memref<2128x128xf32, #tpu.memory_space<vmem>>, vector<8x8xf32>
    %cst_94 = arith.constant dense<0.000000e+00> : vector<8x32xf32>
    %171 = tpu.matmul %170, %166, %cst_94 {dimension_numbers = #tpu.dot_dimension_numbers<[1], [0], [0], [1], [0, 0, 1, 1], [], []>} : vector<8x8xf32>, vector<8x32xf32>, vector<8x32xf32> -> vector<8x32xf32>
    %172 = arith.addf %169, %171 : vector<8x32xf32>
    %cst_95 = arith.constant dense<0.000000e+00> : vector<32xf32>
    %173 = vector.multi_reduction <add>, %172, %cst_95 [0] : vector<8x32xf32> to vector<32xf32>
    %174 = vector.shape_cast %173 : vector<32xf32> to vector<1x32xf32>
    %cst_96 = arith.constant 1.250000e-01 : f32
    %175 = vector.broadcast %cst_96 : f32 to vector<1x32xf32>
    %176 = arith.mulf %174, %175 : vector<1x32xf32>
    %177 = arith.mulf %172, %172 : vector<8x32xf32>
    %cst_97 = arith.constant dense<0.000000e+00> : vector<32xf32>
    %178 = vector.multi_reduction <add>, %177, %cst_97 [0] : vector<8x32xf32> to vector<32xf32>
    %179 = vector.shape_cast %178 : vector<32xf32> to vector<1x32xf32>
    %cst_98 = arith.constant 1.250000e-01 : f32
    %180 = vector.broadcast %cst_98 : f32 to vector<1x32xf32>
    %181 = arith.mulf %179, %180 : vector<1x32xf32>
    %182 = arith.mulf %176, %176 : vector<1x32xf32>
    %183 = arith.subf %181, %182 : vector<1x32xf32>
    %cst_99 = arith.constant 0.000000e+00 : f32
    %184 = vector.broadcast %cst_99 : f32 to vector<1x32xf32>
    %185 = arith.maximumf %183, %184 : vector<1x32xf32>
    %c352 = arith.constant 352 : index
    %c0_100 = arith.constant 0 : index
    %186 = vector.load %arg1[%c352, %c0_100] : memref<2128x128xf32, #tpu.memory_space<vmem>>, vector<1x32xf32>
    %cst_101 = arith.constant 9.99999974E-6 : f32
    %187 = vector.broadcast %cst_101 : f32 to vector<1x32xf32>
    %188 = arith.addf %185, %187 : vector<1x32xf32>
    %189 = math.rsqrt %188 : vector<1x32xf32>
    %190 = arith.mulf %186, %189 : vector<1x32xf32>
    %c360 = arith.constant 360 : index
    %c0_102 = arith.constant 0 : index
    %191 = vector.load %arg1[%c360, %c0_102] : memref<2128x128xf32, #tpu.memory_space<vmem>>, vector<1x32xf32>
    %192 = arith.mulf %176, %190 : vector<1x32xf32>
    %193 = arith.subf %191, %192 : vector<1x32xf32>
    %194 = vector.broadcast %190 : vector<1x32xf32> to vector<8x32xf32>
    %195 = arith.mulf %172, %194 : vector<8x32xf32>
    %196 = vector.broadcast %193 : vector<1x32xf32> to vector<8x32xf32>
    %197 = arith.addf %195, %196 : vector<8x32xf32>
    %cst_103 = arith.constant 0.000000e+00 : f32
    %198 = vector.broadcast %cst_103 : f32 to vector<8x32xf32>
    %199 = arith.maximumf %197, %198 : vector<8x32xf32>
    %c384 = arith.constant 384 : index
    %c0_104 = arith.constant 0 : index
    %200 = vector.load %arg1[%c384, %c0_104] : memref<2128x128xf32, #tpu.memory_space<vmem>>, vector<32x32xf32>
    %cst_105 = arith.constant dense<0.000000e+00> : vector<8x32xf32>
    %201 = tpu.matmul %199, %200, %cst_105 {dimension_numbers = #tpu.dot_dimension_numbers<[1], [0], [0], [1], [0, 0, 1, 1], [], []>} : vector<8x32xf32>, vector<32x32xf32>, vector<8x32xf32> -> vector<8x32xf32>
    %c416 = arith.constant 416 : index
    %c0_106 = arith.constant 0 : index
    %202 = vector.load %arg1[%c416, %c0_106] : memref<2128x128xf32, #tpu.memory_space<vmem>>, vector<32x32xf32>
    %cst_107 = arith.constant dense<0.000000e+00> : vector<8x32xf32>
    %203 = tpu.matmul %199, %202, %cst_107 {dimension_numbers = #tpu.dot_dimension_numbers<[1], [0], [0], [1], [0, 0, 1, 1], [], []>} : vector<8x32xf32>, vector<32x32xf32>, vector<8x32xf32> -> vector<8x32xf32>
    %c448 = arith.constant 448 : index
    %c0_108 = arith.constant 0 : index
    %204 = vector.load %arg1[%c448, %c0_108] : memref<2128x128xf32, #tpu.memory_space<vmem>>, vector<32x32xf32>
    %cst_109 = arith.constant dense<0.000000e+00> : vector<8x32xf32>
    %205 = tpu.matmul %199, %204, %cst_109 {dimension_numbers = #tpu.dot_dimension_numbers<[1], [0], [0], [1], [0, 0, 1, 1], [], []>} : vector<8x32xf32>, vector<32x32xf32>, vector<8x32xf32> -> vector<8x32xf32>
    %c368_110 = arith.constant 368 : index
    %c0_111 = arith.constant 0 : index
    %206 = vector.load %arg1[%c368_110, %c0_111] : memref<2128x128xf32, #tpu.memory_space<vmem>>, vector<8x8xf32>
    %cst_112 = arith.constant dense<0.000000e+00> : vector<8x32xf32>
    %207 = tpu.matmul %206, %203, %cst_112 {dimension_numbers = #tpu.dot_dimension_numbers<[1], [0], [0], [1], [0, 0, 1, 1], [], []>} : vector<8x8xf32>, vector<8x32xf32>, vector<8x32xf32> -> vector<8x32xf32>
    %208 = arith.addf %201, %207 : vector<8x32xf32>
    %c376_113 = arith.constant 376 : index
    %c0_114 = arith.constant 0 : index
    %209 = vector.load %arg1[%c376_113, %c0_114] : memref<2128x128xf32, #tpu.memory_space<vmem>>, vector<8x8xf32>
    %cst_115 = arith.constant dense<0.000000e+00> : vector<8x32xf32>
    %210 = tpu.matmul %209, %205, %cst_115 {dimension_numbers = #tpu.dot_dimension_numbers<[1], [0], [0], [1], [0, 0, 1, 1], [], []>} : vector<8x8xf32>, vector<8x32xf32>, vector<8x32xf32> -> vector<8x32xf32>
    %211 = arith.addf %208, %210 : vector<8x32xf32>
    %cst_116 = arith.constant dense<0.000000e+00> : vector<32xf32>
    %212 = vector.multi_reduction <add>, %211, %cst_116 [0] : vector<8x32xf32> to vector<32xf32>
    %213 = vector.shape_cast %212 : vector<32xf32> to vector<1x32xf32>
    %cst_117 = arith.constant 1.250000e-01 : f32
    %214 = vector.broadcast %cst_117 : f32 to vector<1x32xf32>
    %215 = arith.mulf %213, %214 : vector<1x32xf32>
    %216 = arith.mulf %211, %211 : vector<8x32xf32>
    %cst_118 = arith.constant dense<0.000000e+00> : vector<32xf32>
    %217 = vector.multi_reduction <add>, %216, %cst_118 [0] : vector<8x32xf32> to vector<32xf32>
    %218 = vector.shape_cast %217 : vector<32xf32> to vector<1x32xf32>
    %cst_119 = arith.constant 1.250000e-01 : f32
    %219 = vector.broadcast %cst_119 : f32 to vector<1x32xf32>
    %220 = arith.mulf %218, %219 : vector<1x32xf32>
    %221 = arith.mulf %215, %215 : vector<1x32xf32>
    %222 = arith.subf %220, %221 : vector<1x32xf32>
    %cst_120 = arith.constant 0.000000e+00 : f32
    %223 = vector.broadcast %cst_120 : f32 to vector<1x32xf32>
    %224 = arith.maximumf %222, %223 : vector<1x32xf32>
    %c480 = arith.constant 480 : index
    %c0_121 = arith.constant 0 : index
    %225 = vector.load %arg1[%c480, %c0_121] : memref<2128x128xf32, #tpu.memory_space<vmem>>, vector<1x32xf32>
    %cst_122 = arith.constant 9.99999974E-6 : f32
    %226 = vector.broadcast %cst_122 : f32 to vector<1x32xf32>
    %227 = arith.addf %224, %226 : vector<1x32xf32>
    %228 = math.rsqrt %227 : vector<1x32xf32>
    %229 = arith.mulf %225, %228 : vector<1x32xf32>
    %c488 = arith.constant 488 : index
    %c0_123 = arith.constant 0 : index
    %230 = vector.load %arg1[%c488, %c0_123] : memref<2128x128xf32, #tpu.memory_space<vmem>>, vector<1x32xf32>
    %231 = arith.mulf %215, %229 : vector<1x32xf32>
    %232 = arith.subf %230, %231 : vector<1x32xf32>
    %233 = vector.broadcast %229 : vector<1x32xf32> to vector<8x32xf32>
    %234 = arith.mulf %211, %233 : vector<8x32xf32>
    %235 = vector.broadcast %232 : vector<1x32xf32> to vector<8x32xf32>
    %236 = arith.addf %234, %235 : vector<8x32xf32>
    %cst_124 = arith.constant 0.000000e+00 : f32
    %237 = vector.broadcast %cst_124 : f32 to vector<8x32xf32>
    %238 = arith.maximumf %236, %237 : vector<8x32xf32>
    %c496 = arith.constant 496 : index
    %c0_125 = arith.constant 0 : index
    %239 = vector.load %arg1[%c496, %c0_125] : memref<2128x128xf32, #tpu.memory_space<vmem>>, vector<4x8xf32>
    %cst_126 = arith.constant dense<0.000000e+00> : vector<4x32xf32>
    %240 = tpu.matmul %239, %238, %cst_126 {dimension_numbers = #tpu.dot_dimension_numbers<[1], [0], [0], [1], [0, 0, 1, 1], [], []>} : vector<4x8xf32>, vector<8x32xf32>, vector<4x32xf32> -> vector<4x32xf32>
    %c504 = arith.constant 504 : index
    %c0_127 = arith.constant 0 : index
    %241 = vector.load %arg1[%c504, %c0_127] : memref<2128x128xf32, #tpu.memory_space<vmem>>, vector<32x64xf32>
    %cst_128 = arith.constant dense<0.000000e+00> : vector<4x64xf32>
    %242 = tpu.matmul %240, %241, %cst_128 {dimension_numbers = #tpu.dot_dimension_numbers<[1], [0], [0], [1], [0, 0, 1, 1], [], []>} : vector<4x32xf32>, vector<32x64xf32>, vector<4x64xf32> -> vector<4x64xf32>
    %c536 = arith.constant 536 : index
    %c0_129 = arith.constant 0 : index
    %243 = vector.load %arg1[%c536, %c0_129] : memref<2128x128xf32, #tpu.memory_space<vmem>>, vector<32x64xf32>
    %cst_130 = arith.constant dense<0.000000e+00> : vector<4x64xf32>
    %244 = tpu.matmul %240, %243, %cst_130 {dimension_numbers = #tpu.dot_dimension_numbers<[1], [0], [0], [1], [0, 0, 1, 1], [], []>} : vector<4x32xf32>, vector<32x64xf32>, vector<4x64xf32> -> vector<4x64xf32>
    %c568 = arith.constant 568 : index
    %c0_131 = arith.constant 0 : index
    %245 = vector.load %arg1[%c568, %c0_131] : memref<2128x128xf32, #tpu.memory_space<vmem>>, vector<32x64xf32>
    %cst_132 = arith.constant dense<0.000000e+00> : vector<4x64xf32>
    %246 = tpu.matmul %240, %245, %cst_132 {dimension_numbers = #tpu.dot_dimension_numbers<[1], [0], [0], [1], [0, 0, 1, 1], [], []>} : vector<4x32xf32>, vector<32x64xf32>, vector<4x64xf32> -> vector<4x64xf32>
    %c616 = arith.constant 616 : index
    %c0_133 = arith.constant 0 : index
    %247 = vector.load %arg1[%c616, %c0_133] : memref<2128x128xf32, #tpu.memory_space<vmem>>, vector<4x4xf32>
    %cst_134 = arith.constant dense<0.000000e+00> : vector<4x64xf32>
    %248 = tpu.matmul %247, %244, %cst_134 {dimension_numbers = #tpu.dot_dimension_numbers<[1], [0], [0], [1], [0, 0, 1, 1], [], []>} : vector<4x4xf32>, vector<4x64xf32>, vector<4x64xf32> -> vector<4x64xf32>
    %249 = arith.addf %242, %248 : vector<4x64xf32>
    %c624 = arith.constant 624 : index
    %c0_135 = arith.constant 0 : index
    %250 = vector.load %arg1[%c624, %c0_135] : memref<2128x128xf32, #tpu.memory_space<vmem>>, vector<4x4xf32>
    %cst_136 = arith.constant dense<0.000000e+00> : vector<4x64xf32>
    %251 = tpu.matmul %250, %246, %cst_136 {dimension_numbers = #tpu.dot_dimension_numbers<[1], [0], [0], [1], [0, 0, 1, 1], [], []>} : vector<4x4xf32>, vector<4x64xf32>, vector<4x64xf32> -> vector<4x64xf32>
    %252 = arith.addf %249, %251 : vector<4x64xf32>
    %cst_137 = arith.constant dense<0.000000e+00> : vector<64xf32>
    %253 = vector.multi_reduction <add>, %252, %cst_137 [0] : vector<4x64xf32> to vector<64xf32>
    %254 = vector.shape_cast %253 : vector<64xf32> to vector<1x64xf32>
    %cst_138 = arith.constant 2.500000e-01 : f32
    %255 = vector.broadcast %cst_138 : f32 to vector<1x64xf32>
    %256 = arith.mulf %254, %255 : vector<1x64xf32>
    %257 = arith.mulf %252, %252 : vector<4x64xf32>
    %cst_139 = arith.constant dense<0.000000e+00> : vector<64xf32>
    %258 = vector.multi_reduction <add>, %257, %cst_139 [0] : vector<4x64xf32> to vector<64xf32>
    %259 = vector.shape_cast %258 : vector<64xf32> to vector<1x64xf32>
    %cst_140 = arith.constant 2.500000e-01 : f32
    %260 = vector.broadcast %cst_140 : f32 to vector<1x64xf32>
    %261 = arith.mulf %259, %260 : vector<1x64xf32>
    %262 = arith.mulf %256, %256 : vector<1x64xf32>
    %263 = arith.subf %261, %262 : vector<1x64xf32>
    %cst_141 = arith.constant 0.000000e+00 : f32
    %264 = vector.broadcast %cst_141 : f32 to vector<1x64xf32>
    %265 = arith.maximumf %263, %264 : vector<1x64xf32>
    %c600 = arith.constant 600 : index
    %c0_142 = arith.constant 0 : index
    %266 = vector.load %arg1[%c600, %c0_142] : memref<2128x128xf32, #tpu.memory_space<vmem>>, vector<1x64xf32>
    %cst_143 = arith.constant 9.99999974E-6 : f32
    %267 = vector.broadcast %cst_143 : f32 to vector<1x64xf32>
    %268 = arith.addf %265, %267 : vector<1x64xf32>
    %269 = math.rsqrt %268 : vector<1x64xf32>
    %270 = arith.mulf %266, %269 : vector<1x64xf32>
    %c608 = arith.constant 608 : index
    %c0_144 = arith.constant 0 : index
    %271 = vector.load %arg1[%c608, %c0_144] : memref<2128x128xf32, #tpu.memory_space<vmem>>, vector<1x64xf32>
    %272 = arith.mulf %256, %270 : vector<1x64xf32>
    %273 = arith.subf %271, %272 : vector<1x64xf32>
    %274 = vector.broadcast %270 : vector<1x64xf32> to vector<4x64xf32>
    %275 = arith.mulf %252, %274 : vector<4x64xf32>
    %276 = vector.broadcast %273 : vector<1x64xf32> to vector<4x64xf32>
    %277 = arith.addf %275, %276 : vector<4x64xf32>
    %cst_145 = arith.constant 0.000000e+00 : f32
    %278 = vector.broadcast %cst_145 : f32 to vector<4x64xf32>
    %279 = arith.maximumf %277, %278 : vector<4x64xf32>
    %c632 = arith.constant 632 : index
    %c0_146 = arith.constant 0 : index
    %280 = vector.load %arg1[%c632, %c0_146] : memref<2128x128xf32, #tpu.memory_space<vmem>>, vector<64x64xf32>
    %cst_147 = arith.constant dense<0.000000e+00> : vector<4x64xf32>
    %281 = tpu.matmul %279, %280, %cst_147 {dimension_numbers = #tpu.dot_dimension_numbers<[1], [0], [0], [1], [0, 0, 1, 1], [], []>} : vector<4x64xf32>, vector<64x64xf32>, vector<4x64xf32> -> vector<4x64xf32>
    %c696 = arith.constant 696 : index
    %c0_148 = arith.constant 0 : index
    %282 = vector.load %arg1[%c696, %c0_148] : memref<2128x128xf32, #tpu.memory_space<vmem>>, vector<64x64xf32>
    %cst_149 = arith.constant dense<0.000000e+00> : vector<4x64xf32>
    %283 = tpu.matmul %279, %282, %cst_149 {dimension_numbers = #tpu.dot_dimension_numbers<[1], [0], [0], [1], [0, 0, 1, 1], [], []>} : vector<4x64xf32>, vector<64x64xf32>, vector<4x64xf32> -> vector<4x64xf32>
    %c760 = arith.constant 760 : index
    %c0_150 = arith.constant 0 : index
    %284 = vector.load %arg1[%c760, %c0_150] : memref<2128x128xf32, #tpu.memory_space<vmem>>, vector<64x64xf32>
    %cst_151 = arith.constant dense<0.000000e+00> : vector<4x64xf32>
    %285 = tpu.matmul %279, %284, %cst_151 {dimension_numbers = #tpu.dot_dimension_numbers<[1], [0], [0], [1], [0, 0, 1, 1], [], []>} : vector<4x64xf32>, vector<64x64xf32>, vector<4x64xf32> -> vector<4x64xf32>
    %c616_152 = arith.constant 616 : index
    %c0_153 = arith.constant 0 : index
    %286 = vector.load %arg1[%c616_152, %c0_153] : memref<2128x128xf32, #tpu.memory_space<vmem>>, vector<4x4xf32>
    %cst_154 = arith.constant dense<0.000000e+00> : vector<4x64xf32>
    %287 = tpu.matmul %286, %283, %cst_154 {dimension_numbers = #tpu.dot_dimension_numbers<[1], [0], [0], [1], [0, 0, 1, 1], [], []>} : vector<4x4xf32>, vector<4x64xf32>, vector<4x64xf32> -> vector<4x64xf32>
    %288 = arith.addf %281, %287 : vector<4x64xf32>
    %c624_155 = arith.constant 624 : index
    %c0_156 = arith.constant 0 : index
    %289 = vector.load %arg1[%c624_155, %c0_156] : memref<2128x128xf32, #tpu.memory_space<vmem>>, vector<4x4xf32>
    %cst_157 = arith.constant dense<0.000000e+00> : vector<4x64xf32>
    %290 = tpu.matmul %289, %285, %cst_157 {dimension_numbers = #tpu.dot_dimension_numbers<[1], [0], [0], [1], [0, 0, 1, 1], [], []>} : vector<4x4xf32>, vector<4x64xf32>, vector<4x64xf32> -> vector<4x64xf32>
    %291 = arith.addf %288, %290 : vector<4x64xf32>
    %cst_158 = arith.constant dense<0.000000e+00> : vector<64xf32>
    %292 = vector.multi_reduction <add>, %291, %cst_158 [0] : vector<4x64xf32> to vector<64xf32>
    %293 = vector.shape_cast %292 : vector<64xf32> to vector<1x64xf32>
    %cst_159 = arith.constant 2.500000e-01 : f32
    %294 = vector.broadcast %cst_159 : f32 to vector<1x64xf32>
    %295 = arith.mulf %293, %294 : vector<1x64xf32>
    %296 = arith.mulf %291, %291 : vector<4x64xf32>
    %cst_160 = arith.constant dense<0.000000e+00> : vector<64xf32>
    %297 = vector.multi_reduction <add>, %296, %cst_160 [0] : vector<4x64xf32> to vector<64xf32>
    %298 = vector.shape_cast %297 : vector<64xf32> to vector<1x64xf32>
    %cst_161 = arith.constant 2.500000e-01 : f32
    %299 = vector.broadcast %cst_161 : f32 to vector<1x64xf32>
    %300 = arith.mulf %298, %299 : vector<1x64xf32>
    %301 = arith.mulf %295, %295 : vector<1x64xf32>
    %302 = arith.subf %300, %301 : vector<1x64xf32>
    %cst_162 = arith.constant 0.000000e+00 : f32
    %303 = vector.broadcast %cst_162 : f32 to vector<1x64xf32>
    %304 = arith.maximumf %302, %303 : vector<1x64xf32>
    %c824 = arith.constant 824 : index
    %c0_163 = arith.constant 0 : index
    %305 = vector.load %arg1[%c824, %c0_163] : memref<2128x128xf32, #tpu.memory_space<vmem>>, vector<1x64xf32>
    %cst_164 = arith.constant 9.99999974E-6 : f32
    %306 = vector.broadcast %cst_164 : f32 to vector<1x64xf32>
    %307 = arith.addf %304, %306 : vector<1x64xf32>
    %308 = math.rsqrt %307 : vector<1x64xf32>
    %309 = arith.mulf %305, %308 : vector<1x64xf32>
    %c832 = arith.constant 832 : index
    %c0_165 = arith.constant 0 : index
    %310 = vector.load %arg1[%c832, %c0_165] : memref<2128x128xf32, #tpu.memory_space<vmem>>, vector<1x64xf32>
    %311 = arith.mulf %295, %309 : vector<1x64xf32>
    %312 = arith.subf %310, %311 : vector<1x64xf32>
    %313 = vector.broadcast %309 : vector<1x64xf32> to vector<4x64xf32>
    %314 = arith.mulf %291, %313 : vector<4x64xf32>
    %315 = vector.broadcast %312 : vector<1x64xf32> to vector<4x64xf32>
    %316 = arith.addf %314, %315 : vector<4x64xf32>
    %cst_166 = arith.constant 0.000000e+00 : f32
    %317 = vector.broadcast %cst_166 : f32 to vector<4x64xf32>
    %318 = arith.maximumf %316, %317 : vector<4x64xf32>
    %c840 = arith.constant 840 : index
    %c0_167 = arith.constant 0 : index
    %319 = vector.load %arg1[%c840, %c0_167] : memref<2128x128xf32, #tpu.memory_space<vmem>>, vector<2x4xf32>
    %cst_168 = arith.constant dense<0.000000e+00> : vector<2x64xf32>
    %320 = tpu.matmul %319, %318, %cst_168 {dimension_numbers = #tpu.dot_dimension_numbers<[1], [0], [0], [1], [0, 0, 1, 1], [], []>} : vector<2x4xf32>, vector<4x64xf32>, vector<2x64xf32> -> vector<2x64xf32>
    %c848 = arith.constant 848 : index
    %c0_169 = arith.constant 0 : index
    %321 = vector.load %arg1[%c848, %c0_169] : memref<2128x128xf32, #tpu.memory_space<vmem>>, vector<64x128xf32>
    %cst_170 = arith.constant dense<0.000000e+00> : vector<2x128xf32>
    %322 = tpu.matmul %320, %321, %cst_170 {dimension_numbers = #tpu.dot_dimension_numbers<[1], [0], [0], [1], [0, 0, 1, 1], [], []>} : vector<2x64xf32>, vector<64x128xf32>, vector<2x128xf32> -> vector<2x128xf32>
    %cst_171 = arith.constant dense<0.000000e+00> : vector<128xf32>
    %323 = vector.multi_reduction <add>, %322, %cst_171 [0] : vector<2x128xf32> to vector<128xf32>
    %324 = vector.shape_cast %323 : vector<128xf32> to vector<1x128xf32>
    %cst_172 = arith.constant 5.000000e-01 : f32
    %325 = vector.broadcast %cst_172 : f32 to vector<1x128xf32>
    %326 = arith.mulf %324, %325 : vector<1x128xf32>
    %327 = arith.mulf %322, %322 : vector<2x128xf32>
    %cst_173 = arith.constant dense<0.000000e+00> : vector<128xf32>
    %328 = vector.multi_reduction <add>, %327, %cst_173 [0] : vector<2x128xf32> to vector<128xf32>
    %329 = vector.shape_cast %328 : vector<128xf32> to vector<1x128xf32>
    %cst_174 = arith.constant 5.000000e-01 : f32
    %330 = vector.broadcast %cst_174 : f32 to vector<1x128xf32>
    %331 = arith.mulf %329, %330 : vector<1x128xf32>
    %332 = arith.mulf %326, %326 : vector<1x128xf32>
    %333 = arith.subf %331, %332 : vector<1x128xf32>
    %cst_175 = arith.constant 0.000000e+00 : f32
    %334 = vector.broadcast %cst_175 : f32 to vector<1x128xf32>
    %335 = arith.maximumf %333, %334 : vector<1x128xf32>
    %c912 = arith.constant 912 : index
    %c0_176 = arith.constant 0 : index
    %336 = vector.load %arg1[%c912, %c0_176] : memref<2128x128xf32, #tpu.memory_space<vmem>>, vector<1x128xf32>
    %cst_177 = arith.constant 9.99999974E-6 : f32
    %337 = vector.broadcast %cst_177 : f32 to vector<1x128xf32>
    %338 = arith.addf %335, %337 : vector<1x128xf32>
    %339 = math.rsqrt %338 : vector<1x128xf32>
    %340 = arith.mulf %336, %339 : vector<1x128xf32>
    %c920 = arith.constant 920 : index
    %c0_178 = arith.constant 0 : index
    %341 = vector.load %arg1[%c920, %c0_178] : memref<2128x128xf32, #tpu.memory_space<vmem>>, vector<1x128xf32>
    %342 = arith.mulf %326, %340 : vector<1x128xf32>
    %343 = arith.subf %341, %342 : vector<1x128xf32>
    %344 = vector.broadcast %340 : vector<1x128xf32> to vector<2x128xf32>
    %345 = arith.mulf %322, %344 : vector<2x128xf32>
    %346 = vector.broadcast %343 : vector<1x128xf32> to vector<2x128xf32>
    %347 = arith.addf %345, %346 : vector<2x128xf32>
    %cst_179 = arith.constant 0.000000e+00 : f32
    %348 = vector.broadcast %cst_179 : f32 to vector<2x128xf32>
    %349 = arith.maximumf %347, %348 : vector<2x128xf32>
    %c928 = arith.constant 928 : index
    %c0_180 = arith.constant 0 : index
    %350 = vector.load %arg1[%c928, %c0_180] : memref<2128x128xf32, #tpu.memory_space<vmem>>, vector<128x128xf32>
    %cst_181 = arith.constant dense<0.000000e+00> : vector<2x128xf32>
    %351 = tpu.matmul %349, %350, %cst_181 {dimension_numbers = #tpu.dot_dimension_numbers<[1], [0], [0], [1], [0, 0, 1, 1], [], []>} : vector<2x128xf32>, vector<128x128xf32>, vector<2x128xf32> -> vector<2x128xf32>
    %cst_182 = arith.constant dense<0.000000e+00> : vector<128xf32>
    %352 = vector.multi_reduction <add>, %351, %cst_182 [0] : vector<2x128xf32> to vector<128xf32>
    %353 = vector.shape_cast %352 : vector<128xf32> to vector<1x128xf32>
    %cst_183 = arith.constant 5.000000e-01 : f32
    %354 = vector.broadcast %cst_183 : f32 to vector<1x128xf32>
    %355 = arith.mulf %353, %354 : vector<1x128xf32>
    %356 = arith.mulf %351, %351 : vector<2x128xf32>
    %cst_184 = arith.constant dense<0.000000e+00> : vector<128xf32>
    %357 = vector.multi_reduction <add>, %356, %cst_184 [0] : vector<2x128xf32> to vector<128xf32>
    %358 = vector.shape_cast %357 : vector<128xf32> to vector<1x128xf32>
    %cst_185 = arith.constant 5.000000e-01 : f32
    %359 = vector.broadcast %cst_185 : f32 to vector<1x128xf32>
    %360 = arith.mulf %358, %359 : vector<1x128xf32>
    %361 = arith.mulf %355, %355 : vector<1x128xf32>
    %362 = arith.subf %360, %361 : vector<1x128xf32>
    %cst_186 = arith.constant 0.000000e+00 : f32
    %363 = vector.broadcast %cst_186 : f32 to vector<1x128xf32>
    %364 = arith.maximumf %362, %363 : vector<1x128xf32>
    %c1056 = arith.constant 1056 : index
    %c0_187 = arith.constant 0 : index
    %365 = vector.load %arg1[%c1056, %c0_187] : memref<2128x128xf32, #tpu.memory_space<vmem>>, vector<1x128xf32>
    %cst_188 = arith.constant 9.99999974E-6 : f32
    %366 = vector.broadcast %cst_188 : f32 to vector<1x128xf32>
    %367 = arith.addf %364, %366 : vector<1x128xf32>
    %368 = math.rsqrt %367 : vector<1x128xf32>
    %369 = arith.mulf %365, %368 : vector<1x128xf32>
    %c1064 = arith.constant 1064 : index
    %c0_189 = arith.constant 0 : index
    %370 = vector.load %arg1[%c1064, %c0_189] : memref<2128x128xf32, #tpu.memory_space<vmem>>, vector<1x128xf32>
    %371 = arith.mulf %355, %369 : vector<1x128xf32>
    %372 = arith.subf %370, %371 : vector<1x128xf32>
    %373 = vector.broadcast %369 : vector<1x128xf32> to vector<2x128xf32>
    %374 = arith.mulf %351, %373 : vector<2x128xf32>
    %375 = vector.broadcast %372 : vector<1x128xf32> to vector<2x128xf32>
    %376 = arith.addf %374, %375 : vector<2x128xf32>
    %cst_190 = arith.constant 0.000000e+00 : f32
    %377 = vector.broadcast %cst_190 : f32 to vector<2x128xf32>
    %378 = arith.maximumf %376, %377 : vector<2x128xf32>
    %c1088 = arith.constant 1088 : index
    %c0_191 = arith.constant 0 : index
    %379 = vector.load %arg1[%c1088, %c0_191] : memref<2128x128xf32, #tpu.memory_space<vmem>>, vector<128x128xf32>
    %cst_192 = arith.constant dense<0.000000e+00> : vector<2x128xf32>
    %380 = tpu.matmul %378, %379, %cst_192 {dimension_numbers = #tpu.dot_dimension_numbers<[1], [0], [0], [1], [0, 0, 1, 1], [], []>} : vector<2x128xf32>, vector<128x128xf32>, vector<2x128xf32> -> vector<2x128xf32>
    %381 = vector.extract_strided_slice %380 {offsets = [0, 0], sizes = [2, 64], strides = [1, 1]} : vector<2x128xf32> to vector<2x64xf32>
    %382 = vector.extract_strided_slice %380 {offsets = [0, 64], sizes = [2, 64], strides = [1, 1]} : vector<2x128xf32> to vector<2x64xf32>
    %c1072 = arith.constant 1072 : index
    %c0_193 = arith.constant 0 : index
    %383 = vector.load %arg1[%c1072, %c0_193] : memref<2128x128xf32, #tpu.memory_space<vmem>>, vector<4x2xf32>
    %cst_194 = arith.constant dense<0.000000e+00> : vector<4x64xf32>
    %384 = tpu.matmul %383, %381, %cst_194 {dimension_numbers = #tpu.dot_dimension_numbers<[1], [0], [0], [1], [0, 0, 1, 1], [], []>} : vector<4x2xf32>, vector<2x64xf32>, vector<4x64xf32> -> vector<4x64xf32>
    %c1080 = arith.constant 1080 : index
    %c0_195 = arith.constant 0 : index
    %385 = vector.load %arg1[%c1080, %c0_195] : memref<2128x128xf32, #tpu.memory_space<vmem>>, vector<4x2xf32>
    %cst_196 = arith.constant dense<0.000000e+00> : vector<4x64xf32>
    %386 = tpu.matmul %385, %382, %cst_196 {dimension_numbers = #tpu.dot_dimension_numbers<[1], [0], [0], [1], [0, 0, 1, 1], [], []>} : vector<4x2xf32>, vector<2x64xf32>, vector<4x64xf32> -> vector<4x64xf32>
    %387 = arith.addf %384, %386 : vector<4x64xf32>
    %c1216 = arith.constant 1216 : index
    %c0_197 = arith.constant 0 : index
    %388 = vector.load %arg1[%c1216, %c0_197] : memref<2128x128xf32, #tpu.memory_space<vmem>>, vector<1x64xf32>
    %389 = vector.broadcast %388 : vector<1x64xf32> to vector<4x64xf32>
    %390 = arith.addf %387, %389 : vector<4x64xf32>
    %c1224 = arith.constant 1224 : index
    %c0_198 = arith.constant 0 : index
    %391 = vector.load %arg1[%c1224, %c0_198] : memref<2128x128xf32, #tpu.memory_space<vmem>>, vector<64x64xf32>
    %cst_199 = arith.constant dense<0.000000e+00> : vector<4x64xf32>
    %392 = tpu.matmul %390, %391, %cst_199 {dimension_numbers = #tpu.dot_dimension_numbers<[1], [0], [0], [1], [0, 0, 1, 1], [], []>} : vector<4x64xf32>, vector<64x64xf32>, vector<4x64xf32> -> vector<4x64xf32>
    %c1288 = arith.constant 1288 : index
    %c0_200 = arith.constant 0 : index
    %393 = vector.load %arg1[%c1288, %c0_200] : memref<2128x128xf32, #tpu.memory_space<vmem>>, vector<64x64xf32>
    %cst_201 = arith.constant dense<0.000000e+00> : vector<4x64xf32>
    %394 = tpu.matmul %318, %393, %cst_201 {dimension_numbers = #tpu.dot_dimension_numbers<[1], [0], [0], [1], [0, 0, 1, 1], [], []>} : vector<4x64xf32>, vector<64x64xf32>, vector<4x64xf32> -> vector<4x64xf32>
    %395 = arith.addf %392, %394 : vector<4x64xf32>
    %c1352 = arith.constant 1352 : index
    %c0_202 = arith.constant 0 : index
    %396 = vector.load %arg1[%c1352, %c0_202] : memref<2128x128xf32, #tpu.memory_space<vmem>>, vector<1x64xf32>
    %397 = vector.broadcast %396 : vector<1x64xf32> to vector<4x64xf32>
    %398 = arith.addf %395, %397 : vector<4x64xf32>
    %cst_203 = arith.constant 0.000000e+00 : f32
    %399 = vector.broadcast %cst_203 : f32 to vector<4x64xf32>
    %400 = arith.maximumf %398, %399 : vector<4x64xf32>
    %c1360 = arith.constant 1360 : index
    %c0_204 = arith.constant 0 : index
    %401 = vector.load %arg1[%c1360, %c0_204] : memref<2128x128xf32, #tpu.memory_space<vmem>>, vector<64x32xf32>
    %cst_205 = arith.constant dense<0.000000e+00> : vector<4x32xf32>
    %402 = tpu.matmul %400, %401, %cst_205 {dimension_numbers = #tpu.dot_dimension_numbers<[1], [0], [0], [1], [0, 0, 1, 1], [], []>} : vector<4x64xf32>, vector<64x32xf32>, vector<4x32xf32> -> vector<4x32xf32>
    %c1424 = arith.constant 1424 : index
    %c0_206 = arith.constant 0 : index
    %403 = vector.load %arg1[%c1424, %c0_206] : memref<2128x128xf32, #tpu.memory_space<vmem>>, vector<64x32xf32>
    %cst_207 = arith.constant dense<0.000000e+00> : vector<4x32xf32>
    %404 = tpu.matmul %400, %403, %cst_207 {dimension_numbers = #tpu.dot_dimension_numbers<[1], [0], [0], [1], [0, 0, 1, 1], [], []>} : vector<4x64xf32>, vector<64x32xf32>, vector<4x32xf32> -> vector<4x32xf32>
    %c1488 = arith.constant 1488 : index
    %c0_208 = arith.constant 0 : index
    %405 = vector.load %arg1[%c1488, %c0_208] : memref<2128x128xf32, #tpu.memory_space<vmem>>, vector<64x32xf32>
    %cst_209 = arith.constant dense<0.000000e+00> : vector<4x32xf32>
    %406 = tpu.matmul %400, %405, %cst_209 {dimension_numbers = #tpu.dot_dimension_numbers<[1], [0], [0], [1], [0, 0, 1, 1], [], []>} : vector<4x64xf32>, vector<64x32xf32>, vector<4x32xf32> -> vector<4x32xf32>
    %c616_210 = arith.constant 616 : index
    %c0_211 = arith.constant 0 : index
    %407 = vector.load %arg1[%c616_210, %c0_211] : memref<2128x128xf32, #tpu.memory_space<vmem>>, vector<4x4xf32>
    %cst_212 = arith.constant dense<0.000000e+00> : vector<4x32xf32>
    %408 = tpu.matmul %407, %404, %cst_212 {dimension_numbers = #tpu.dot_dimension_numbers<[1], [0], [0], [1], [0, 0, 1, 1], [], []>} : vector<4x4xf32>, vector<4x32xf32>, vector<4x32xf32> -> vector<4x32xf32>
    %409 = arith.addf %402, %408 : vector<4x32xf32>
    %c624_213 = arith.constant 624 : index
    %c0_214 = arith.constant 0 : index
    %410 = vector.load %arg1[%c624_213, %c0_214] : memref<2128x128xf32, #tpu.memory_space<vmem>>, vector<4x4xf32>
    %cst_215 = arith.constant dense<0.000000e+00> : vector<4x32xf32>
    %411 = tpu.matmul %410, %406, %cst_215 {dimension_numbers = #tpu.dot_dimension_numbers<[1], [0], [0], [1], [0, 0, 1, 1], [], []>} : vector<4x4xf32>, vector<4x32xf32>, vector<4x32xf32> -> vector<4x32xf32>
    %412 = arith.addf %409, %411 : vector<4x32xf32>
    %cst_216 = arith.constant dense<0.000000e+00> : vector<32xf32>
    %413 = vector.multi_reduction <add>, %412, %cst_216 [0] : vector<4x32xf32> to vector<32xf32>
    %414 = vector.shape_cast %413 : vector<32xf32> to vector<1x32xf32>
    %cst_217 = arith.constant 2.500000e-01 : f32
    %415 = vector.broadcast %cst_217 : f32 to vector<1x32xf32>
    %416 = arith.mulf %414, %415 : vector<1x32xf32>
    %417 = arith.mulf %412, %412 : vector<4x32xf32>
    %cst_218 = arith.constant dense<0.000000e+00> : vector<32xf32>
    %418 = vector.multi_reduction <add>, %417, %cst_218 [0] : vector<4x32xf32> to vector<32xf32>
    %419 = vector.shape_cast %418 : vector<32xf32> to vector<1x32xf32>
    %cst_219 = arith.constant 2.500000e-01 : f32
    %420 = vector.broadcast %cst_219 : f32 to vector<1x32xf32>
    %421 = arith.mulf %419, %420 : vector<1x32xf32>
    %422 = arith.mulf %416, %416 : vector<1x32xf32>
    %423 = arith.subf %421, %422 : vector<1x32xf32>
    %cst_220 = arith.constant 0.000000e+00 : f32
    %424 = vector.broadcast %cst_220 : f32 to vector<1x32xf32>
    %425 = arith.maximumf %423, %424 : vector<1x32xf32>
    %c1552 = arith.constant 1552 : index
    %c0_221 = arith.constant 0 : index
    %426 = vector.load %arg1[%c1552, %c0_221] : memref<2128x128xf32, #tpu.memory_space<vmem>>, vector<1x32xf32>
    %cst_222 = arith.constant 9.99999974E-6 : f32
    %427 = vector.broadcast %cst_222 : f32 to vector<1x32xf32>
    %428 = arith.addf %425, %427 : vector<1x32xf32>
    %429 = math.rsqrt %428 : vector<1x32xf32>
    %430 = arith.mulf %426, %429 : vector<1x32xf32>
    %c1560 = arith.constant 1560 : index
    %c0_223 = arith.constant 0 : index
    %431 = vector.load %arg1[%c1560, %c0_223] : memref<2128x128xf32, #tpu.memory_space<vmem>>, vector<1x32xf32>
    %432 = arith.mulf %416, %430 : vector<1x32xf32>
    %433 = arith.subf %431, %432 : vector<1x32xf32>
    %434 = vector.broadcast %430 : vector<1x32xf32> to vector<4x32xf32>
    %435 = arith.mulf %412, %434 : vector<4x32xf32>
    %436 = vector.broadcast %433 : vector<1x32xf32> to vector<4x32xf32>
    %437 = arith.addf %435, %436 : vector<4x32xf32>
    %cst_224 = arith.constant 0.000000e+00 : f32
    %438 = vector.broadcast %cst_224 : f32 to vector<4x32xf32>
    %439 = arith.maximumf %437, %438 : vector<4x32xf32>
    %c1584 = arith.constant 1584 : index
    %c0_225 = arith.constant 0 : index
    %440 = vector.load %arg1[%c1584, %c0_225] : memref<2128x128xf32, #tpu.memory_space<vmem>>, vector<32x64xf32>
    %cst_226 = arith.constant dense<0.000000e+00> : vector<4x64xf32>
    %441 = tpu.matmul %439, %440, %cst_226 {dimension_numbers = #tpu.dot_dimension_numbers<[1], [0], [0], [1], [0, 0, 1, 1], [], []>} : vector<4x32xf32>, vector<32x64xf32>, vector<4x64xf32> -> vector<4x64xf32>
    %442 = vector.extract_strided_slice %441 {offsets = [0, 0], sizes = [4, 32], strides = [1, 1]} : vector<4x64xf32> to vector<4x32xf32>
    %443 = vector.extract_strided_slice %441 {offsets = [0, 32], sizes = [4, 32], strides = [1, 1]} : vector<4x64xf32> to vector<4x32xf32>
    %c1568 = arith.constant 1568 : index
    %c0_227 = arith.constant 0 : index
    %444 = vector.load %arg1[%c1568, %c0_227] : memref<2128x128xf32, #tpu.memory_space<vmem>>, vector<8x4xf32>
    %cst_228 = arith.constant dense<0.000000e+00> : vector<8x32xf32>
    %445 = tpu.matmul %444, %442, %cst_228 {dimension_numbers = #tpu.dot_dimension_numbers<[1], [0], [0], [1], [0, 0, 1, 1], [], []>} : vector<8x4xf32>, vector<4x32xf32>, vector<8x32xf32> -> vector<8x32xf32>
    %c1576 = arith.constant 1576 : index
    %c0_229 = arith.constant 0 : index
    %446 = vector.load %arg1[%c1576, %c0_229] : memref<2128x128xf32, #tpu.memory_space<vmem>>, vector<8x4xf32>
    %cst_230 = arith.constant dense<0.000000e+00> : vector<8x32xf32>
    %447 = tpu.matmul %446, %443, %cst_230 {dimension_numbers = #tpu.dot_dimension_numbers<[1], [0], [0], [1], [0, 0, 1, 1], [], []>} : vector<8x4xf32>, vector<4x32xf32>, vector<8x32xf32> -> vector<8x32xf32>
    %448 = arith.addf %445, %447 : vector<8x32xf32>
    %c1616 = arith.constant 1616 : index
    %c0_231 = arith.constant 0 : index
    %449 = vector.load %arg1[%c1616, %c0_231] : memref<2128x128xf32, #tpu.memory_space<vmem>>, vector<1x32xf32>
    %450 = vector.broadcast %449 : vector<1x32xf32> to vector<8x32xf32>
    %451 = arith.addf %448, %450 : vector<8x32xf32>
    %c1624 = arith.constant 1624 : index
    %c0_232 = arith.constant 0 : index
    %452 = vector.load %arg1[%c1624, %c0_232] : memref<2128x128xf32, #tpu.memory_space<vmem>>, vector<32x32xf32>
    %cst_233 = arith.constant dense<0.000000e+00> : vector<8x32xf32>
    %453 = tpu.matmul %451, %452, %cst_233 {dimension_numbers = #tpu.dot_dimension_numbers<[1], [0], [0], [1], [0, 0, 1, 1], [], []>} : vector<8x32xf32>, vector<32x32xf32>, vector<8x32xf32> -> vector<8x32xf32>
    %c1656 = arith.constant 1656 : index
    %c0_234 = arith.constant 0 : index
    %454 = vector.load %arg1[%c1656, %c0_234] : memref<2128x128xf32, #tpu.memory_space<vmem>>, vector<32x32xf32>
    %cst_235 = arith.constant dense<0.000000e+00> : vector<8x32xf32>
    %455 = tpu.matmul %238, %454, %cst_235 {dimension_numbers = #tpu.dot_dimension_numbers<[1], [0], [0], [1], [0, 0, 1, 1], [], []>} : vector<8x32xf32>, vector<32x32xf32>, vector<8x32xf32> -> vector<8x32xf32>
    %456 = arith.addf %453, %455 : vector<8x32xf32>
    %c1688 = arith.constant 1688 : index
    %c0_236 = arith.constant 0 : index
    %457 = vector.load %arg1[%c1688, %c0_236] : memref<2128x128xf32, #tpu.memory_space<vmem>>, vector<1x32xf32>
    %458 = vector.broadcast %457 : vector<1x32xf32> to vector<8x32xf32>
    %459 = arith.addf %456, %458 : vector<8x32xf32>
    %cst_237 = arith.constant 0.000000e+00 : f32
    %460 = vector.broadcast %cst_237 : f32 to vector<8x32xf32>
    %461 = arith.maximumf %459, %460 : vector<8x32xf32>
    %c1696 = arith.constant 1696 : index
    %c0_238 = arith.constant 0 : index
    %462 = vector.load %arg1[%c1696, %c0_238] : memref<2128x128xf32, #tpu.memory_space<vmem>>, vector<32x16xf32>
    %cst_239 = arith.constant dense<0.000000e+00> : vector<8x16xf32>
    %463 = tpu.matmul %461, %462, %cst_239 {dimension_numbers = #tpu.dot_dimension_numbers<[1], [0], [0], [1], [0, 0, 1, 1], [], []>} : vector<8x32xf32>, vector<32x16xf32>, vector<8x16xf32> -> vector<8x16xf32>
    %c1728 = arith.constant 1728 : index
    %c0_240 = arith.constant 0 : index
    %464 = vector.load %arg1[%c1728, %c0_240] : memref<2128x128xf32, #tpu.memory_space<vmem>>, vector<32x16xf32>
    %cst_241 = arith.constant dense<0.000000e+00> : vector<8x16xf32>
    %465 = tpu.matmul %461, %464, %cst_241 {dimension_numbers = #tpu.dot_dimension_numbers<[1], [0], [0], [1], [0, 0, 1, 1], [], []>} : vector<8x32xf32>, vector<32x16xf32>, vector<8x16xf32> -> vector<8x16xf32>
    %c1760 = arith.constant 1760 : index
    %c0_242 = arith.constant 0 : index
    %466 = vector.load %arg1[%c1760, %c0_242] : memref<2128x128xf32, #tpu.memory_space<vmem>>, vector<32x16xf32>
    %cst_243 = arith.constant dense<0.000000e+00> : vector<8x16xf32>
    %467 = tpu.matmul %461, %466, %cst_243 {dimension_numbers = #tpu.dot_dimension_numbers<[1], [0], [0], [1], [0, 0, 1, 1], [], []>} : vector<8x32xf32>, vector<32x16xf32>, vector<8x16xf32> -> vector<8x16xf32>
    %c368_244 = arith.constant 368 : index
    %c0_245 = arith.constant 0 : index
    %468 = vector.load %arg1[%c368_244, %c0_245] : memref<2128x128xf32, #tpu.memory_space<vmem>>, vector<8x8xf32>
    %cst_246 = arith.constant dense<0.000000e+00> : vector<8x16xf32>
    %469 = tpu.matmul %468, %465, %cst_246 {dimension_numbers = #tpu.dot_dimension_numbers<[1], [0], [0], [1], [0, 0, 1, 1], [], []>} : vector<8x8xf32>, vector<8x16xf32>, vector<8x16xf32> -> vector<8x16xf32>
    %470 = arith.addf %463, %469 : vector<8x16xf32>
    %c376_247 = arith.constant 376 : index
    %c0_248 = arith.constant 0 : index
    %471 = vector.load %arg1[%c376_247, %c0_248] : memref<2128x128xf32, #tpu.memory_space<vmem>>, vector<8x8xf32>
    %cst_249 = arith.constant dense<0.000000e+00> : vector<8x16xf32>
    %472 = tpu.matmul %471, %467, %cst_249 {dimension_numbers = #tpu.dot_dimension_numbers<[1], [0], [0], [1], [0, 0, 1, 1], [], []>} : vector<8x8xf32>, vector<8x16xf32>, vector<8x16xf32> -> vector<8x16xf32>
    %473 = arith.addf %470, %472 : vector<8x16xf32>
    %cst_250 = arith.constant dense<0.000000e+00> : vector<16xf32>
    %474 = vector.multi_reduction <add>, %473, %cst_250 [0] : vector<8x16xf32> to vector<16xf32>
    %475 = vector.shape_cast %474 : vector<16xf32> to vector<1x16xf32>
    %cst_251 = arith.constant 1.250000e-01 : f32
    %476 = vector.broadcast %cst_251 : f32 to vector<1x16xf32>
    %477 = arith.mulf %475, %476 : vector<1x16xf32>
    %478 = arith.mulf %473, %473 : vector<8x16xf32>
    %cst_252 = arith.constant dense<0.000000e+00> : vector<16xf32>
    %479 = vector.multi_reduction <add>, %478, %cst_252 [0] : vector<8x16xf32> to vector<16xf32>
    %480 = vector.shape_cast %479 : vector<16xf32> to vector<1x16xf32>
    %cst_253 = arith.constant 1.250000e-01 : f32
    %481 = vector.broadcast %cst_253 : f32 to vector<1x16xf32>
    %482 = arith.mulf %480, %481 : vector<1x16xf32>
    %483 = arith.mulf %477, %477 : vector<1x16xf32>
    %484 = arith.subf %482, %483 : vector<1x16xf32>
    %cst_254 = arith.constant 0.000000e+00 : f32
    %485 = vector.broadcast %cst_254 : f32 to vector<1x16xf32>
    %486 = arith.maximumf %484, %485 : vector<1x16xf32>
    %c1792 = arith.constant 1792 : index
    %c0_255 = arith.constant 0 : index
    %487 = vector.load %arg1[%c1792, %c0_255] : memref<2128x128xf32, #tpu.memory_space<vmem>>, vector<1x16xf32>
    %cst_256 = arith.constant 9.99999974E-6 : f32
    %488 = vector.broadcast %cst_256 : f32 to vector<1x16xf32>
    %489 = arith.addf %486, %488 : vector<1x16xf32>
    %490 = math.rsqrt %489 : vector<1x16xf32>
    %491 = arith.mulf %487, %490 : vector<1x16xf32>
    %c1800 = arith.constant 1800 : index
    %c0_257 = arith.constant 0 : index
    %492 = vector.load %arg1[%c1800, %c0_257] : memref<2128x128xf32, #tpu.memory_space<vmem>>, vector<1x16xf32>
    %493 = arith.mulf %477, %491 : vector<1x16xf32>
    %494 = arith.subf %492, %493 : vector<1x16xf32>
    %495 = vector.broadcast %491 : vector<1x16xf32> to vector<8x16xf32>
    %496 = arith.mulf %473, %495 : vector<8x16xf32>
    %497 = vector.broadcast %494 : vector<1x16xf32> to vector<8x16xf32>
    %498 = arith.addf %496, %497 : vector<8x16xf32>
    %cst_258 = arith.constant 0.000000e+00 : f32
    %499 = vector.broadcast %cst_258 : f32 to vector<8x16xf32>
    %500 = arith.maximumf %498, %499 : vector<8x16xf32>
    %c1840 = arith.constant 1840 : index
    %c0_259 = arith.constant 0 : index
    %501 = vector.load %arg1[%c1840, %c0_259] : memref<2128x128xf32, #tpu.memory_space<vmem>>, vector<16x32xf32>
    %cst_260 = arith.constant dense<0.000000e+00> : vector<8x32xf32>
    %502 = tpu.matmul %500, %501, %cst_260 {dimension_numbers = #tpu.dot_dimension_numbers<[1], [0], [0], [1], [0, 0, 1, 1], [], []>} : vector<8x16xf32>, vector<16x32xf32>, vector<8x32xf32> -> vector<8x32xf32>
    %503 = vector.extract_strided_slice %502 {offsets = [0, 0], sizes = [8, 16], strides = [1, 1]} : vector<8x32xf32> to vector<8x16xf32>
    %504 = vector.extract_strided_slice %502 {offsets = [0, 16], sizes = [8, 16], strides = [1, 1]} : vector<8x32xf32> to vector<8x16xf32>
    %c1808 = arith.constant 1808 : index
    %c0_261 = arith.constant 0 : index
    %505 = vector.load %arg1[%c1808, %c0_261] : memref<2128x128xf32, #tpu.memory_space<vmem>>, vector<16x8xf32>
    %cst_262 = arith.constant dense<0.000000e+00> : vector<16x16xf32>
    %506 = tpu.matmul %505, %503, %cst_262 {dimension_numbers = #tpu.dot_dimension_numbers<[1], [0], [0], [1], [0, 0, 1, 1], [], []>} : vector<16x8xf32>, vector<8x16xf32>, vector<16x16xf32> -> vector<16x16xf32>
    %c1824 = arith.constant 1824 : index
    %c0_263 = arith.constant 0 : index
    %507 = vector.load %arg1[%c1824, %c0_263] : memref<2128x128xf32, #tpu.memory_space<vmem>>, vector<16x8xf32>
    %cst_264 = arith.constant dense<0.000000e+00> : vector<16x16xf32>
    %508 = tpu.matmul %507, %504, %cst_264 {dimension_numbers = #tpu.dot_dimension_numbers<[1], [0], [0], [1], [0, 0, 1, 1], [], []>} : vector<16x8xf32>, vector<8x16xf32>, vector<16x16xf32> -> vector<16x16xf32>
    %509 = arith.addf %506, %508 : vector<16x16xf32>
    %c1856 = arith.constant 1856 : index
    %c0_265 = arith.constant 0 : index
    %510 = vector.load %arg1[%c1856, %c0_265] : memref<2128x128xf32, #tpu.memory_space<vmem>>, vector<1x16xf32>
    %511 = vector.broadcast %510 : vector<1x16xf32> to vector<16x16xf32>
    %512 = arith.addf %509, %511 : vector<16x16xf32>
    %c1864 = arith.constant 1864 : index
    %c0_266 = arith.constant 0 : index
    %513 = vector.load %arg1[%c1864, %c0_266] : memref<2128x128xf32, #tpu.memory_space<vmem>>, vector<16x16xf32>
    %cst_267 = arith.constant dense<0.000000e+00> : vector<16x16xf32>
    %514 = tpu.matmul %512, %513, %cst_267 {dimension_numbers = #tpu.dot_dimension_numbers<[1], [0], [0], [1], [0, 0, 1, 1], [], []>} : vector<16x16xf32>, vector<16x16xf32>, vector<16x16xf32> -> vector<16x16xf32>
    %c1880 = arith.constant 1880 : index
    %c0_268 = arith.constant 0 : index
    %515 = vector.load %arg1[%c1880, %c0_268] : memref<2128x128xf32, #tpu.memory_space<vmem>>, vector<16x16xf32>
    %cst_269 = arith.constant dense<0.000000e+00> : vector<16x16xf32>
    %516 = tpu.matmul %158, %515, %cst_269 {dimension_numbers = #tpu.dot_dimension_numbers<[1], [0], [0], [1], [0, 0, 1, 1], [], []>} : vector<16x16xf32>, vector<16x16xf32>, vector<16x16xf32> -> vector<16x16xf32>
    %517 = arith.addf %514, %516 : vector<16x16xf32>
    %c1896 = arith.constant 1896 : index
    %c0_270 = arith.constant 0 : index
    %518 = vector.load %arg1[%c1896, %c0_270] : memref<2128x128xf32, #tpu.memory_space<vmem>>, vector<1x16xf32>
    %519 = vector.broadcast %518 : vector<1x16xf32> to vector<16x16xf32>
    %520 = arith.addf %517, %519 : vector<16x16xf32>
    %cst_271 = arith.constant 0.000000e+00 : f32
    %521 = vector.broadcast %cst_271 : f32 to vector<16x16xf32>
    %522 = arith.maximumf %520, %521 : vector<16x16xf32>
    %c1904 = arith.constant 1904 : index
    %c0_272 = arith.constant 0 : index
    %523 = vector.load %arg1[%c1904, %c0_272] : memref<2128x128xf32, #tpu.memory_space<vmem>>, vector<16x8xf32>
    %cst_273 = arith.constant dense<0.000000e+00> : vector<16x8xf32>
    %524 = tpu.matmul %522, %523, %cst_273 {dimension_numbers = #tpu.dot_dimension_numbers<[1], [0], [0], [1], [0, 0, 1, 1], [], []>} : vector<16x16xf32>, vector<16x8xf32>, vector<16x8xf32> -> vector<16x8xf32>
    %c1920 = arith.constant 1920 : index
    %c0_274 = arith.constant 0 : index
    %525 = vector.load %arg1[%c1920, %c0_274] : memref<2128x128xf32, #tpu.memory_space<vmem>>, vector<16x8xf32>
    %cst_275 = arith.constant dense<0.000000e+00> : vector<16x8xf32>
    %526 = tpu.matmul %522, %525, %cst_275 {dimension_numbers = #tpu.dot_dimension_numbers<[1], [0], [0], [1], [0, 0, 1, 1], [], []>} : vector<16x16xf32>, vector<16x8xf32>, vector<16x8xf32> -> vector<16x8xf32>
    %c1936 = arith.constant 1936 : index
    %c0_276 = arith.constant 0 : index
    %527 = vector.load %arg1[%c1936, %c0_276] : memref<2128x128xf32, #tpu.memory_space<vmem>>, vector<16x8xf32>
    %cst_277 = arith.constant dense<0.000000e+00> : vector<16x8xf32>
    %528 = tpu.matmul %522, %527, %cst_277 {dimension_numbers = #tpu.dot_dimension_numbers<[1], [0], [0], [1], [0, 0, 1, 1], [], []>} : vector<16x16xf32>, vector<16x8xf32>, vector<16x8xf32> -> vector<16x8xf32>
    %c200_278 = arith.constant 200 : index
    %c0_279 = arith.constant 0 : index
    %529 = vector.load %arg1[%c200_278, %c0_279] : memref<2128x128xf32, #tpu.memory_space<vmem>>, vector<16x16xf32>
    %cst_280 = arith.constant dense<0.000000e+00> : vector<16x8xf32>
    %530 = tpu.matmul %529, %526, %cst_280 {dimension_numbers = #tpu.dot_dimension_numbers<[1], [0], [0], [1], [0, 0, 1, 1], [], []>} : vector<16x16xf32>, vector<16x8xf32>, vector<16x8xf32> -> vector<16x8xf32>
    %531 = arith.addf %524, %530 : vector<16x8xf32>
    %c216_281 = arith.constant 216 : index
    %c0_282 = arith.constant 0 : index
    %532 = vector.load %arg1[%c216_281, %c0_282] : memref<2128x128xf32, #tpu.memory_space<vmem>>, vector<16x16xf32>
    %cst_283 = arith.constant dense<0.000000e+00> : vector<16x8xf32>
    %533 = tpu.matmul %532, %528, %cst_283 {dimension_numbers = #tpu.dot_dimension_numbers<[1], [0], [0], [1], [0, 0, 1, 1], [], []>} : vector<16x16xf32>, vector<16x8xf32>, vector<16x8xf32> -> vector<16x8xf32>
    %534 = arith.addf %531, %533 : vector<16x8xf32>
    %cst_284 = arith.constant dense<0.000000e+00> : vector<8xf32>
    %535 = vector.multi_reduction <add>, %534, %cst_284 [0] : vector<16x8xf32> to vector<8xf32>
    %536 = vector.shape_cast %535 : vector<8xf32> to vector<1x8xf32>
    %cst_285 = arith.constant 6.250000e-02 : f32
    %537 = vector.broadcast %cst_285 : f32 to vector<1x8xf32>
    %538 = arith.mulf %536, %537 : vector<1x8xf32>
    %539 = arith.mulf %534, %534 : vector<16x8xf32>
    %cst_286 = arith.constant dense<0.000000e+00> : vector<8xf32>
    %540 = vector.multi_reduction <add>, %539, %cst_286 [0] : vector<16x8xf32> to vector<8xf32>
    %541 = vector.shape_cast %540 : vector<8xf32> to vector<1x8xf32>
    %cst_287 = arith.constant 6.250000e-02 : f32
    %542 = vector.broadcast %cst_287 : f32 to vector<1x8xf32>
    %543 = arith.mulf %541, %542 : vector<1x8xf32>
    %544 = arith.mulf %538, %538 : vector<1x8xf32>
    %545 = arith.subf %543, %544 : vector<1x8xf32>
    %cst_288 = arith.constant 0.000000e+00 : f32
    %546 = vector.broadcast %cst_288 : f32 to vector<1x8xf32>
    %547 = arith.maximumf %545, %546 : vector<1x8xf32>
    %c1952 = arith.constant 1952 : index
    %c0_289 = arith.constant 0 : index
    %548 = vector.load %arg1[%c1952, %c0_289] : memref<2128x128xf32, #tpu.memory_space<vmem>>, vector<1x8xf32>
    %cst_290 = arith.constant 9.99999974E-6 : f32
    %549 = vector.broadcast %cst_290 : f32 to vector<1x8xf32>
    %550 = arith.addf %547, %549 : vector<1x8xf32>
    %551 = math.rsqrt %550 : vector<1x8xf32>
    %552 = arith.mulf %548, %551 : vector<1x8xf32>
    %c1960 = arith.constant 1960 : index
    %c0_291 = arith.constant 0 : index
    %553 = vector.load %arg1[%c1960, %c0_291] : memref<2128x128xf32, #tpu.memory_space<vmem>>, vector<1x8xf32>
    %554 = arith.mulf %538, %552 : vector<1x8xf32>
    %555 = arith.subf %553, %554 : vector<1x8xf32>
    %556 = vector.broadcast %552 : vector<1x8xf32> to vector<16x8xf32>
    %557 = arith.mulf %534, %556 : vector<16x8xf32>
    %558 = vector.broadcast %555 : vector<1x8xf32> to vector<16x8xf32>
    %559 = arith.addf %557, %558 : vector<16x8xf32>
    %cst_292 = arith.constant 0.000000e+00 : f32
    %560 = vector.broadcast %cst_292 : f32 to vector<16x8xf32>
    %561 = arith.maximumf %559, %560 : vector<16x8xf32>
    %c2032 = arith.constant 2032 : index
    %c0_293 = arith.constant 0 : index
    %562 = vector.load %arg1[%c2032, %c0_293] : memref<2128x128xf32, #tpu.memory_space<vmem>>, vector<8x16xf32>
    %cst_294 = arith.constant dense<0.000000e+00> : vector<16x16xf32>
    %563 = tpu.matmul %561, %562, %cst_294 {dimension_numbers = #tpu.dot_dimension_numbers<[1], [0], [0], [1], [0, 0, 1, 1], [], []>} : vector<16x8xf32>, vector<8x16xf32>, vector<16x16xf32> -> vector<16x16xf32>
    %564 = vector.extract_strided_slice %563 {offsets = [0, 0], sizes = [16, 8], strides = [1, 1]} : vector<16x16xf32> to vector<16x8xf32>
    %565 = vector.extract_strided_slice %563 {offsets = [0, 8], sizes = [16, 8], strides = [1, 1]} : vector<16x16xf32> to vector<16x8xf32>
    %c1968 = arith.constant 1968 : index
    %c0_295 = arith.constant 0 : index
    %566 = vector.load %arg1[%c1968, %c0_295] : memref<2128x128xf32, #tpu.memory_space<vmem>>, vector<32x16xf32>
    %cst_296 = arith.constant dense<0.000000e+00> : vector<32x8xf32>
    %567 = tpu.matmul %566, %564, %cst_296 {dimension_numbers = #tpu.dot_dimension_numbers<[1], [0], [0], [1], [0, 0, 1, 1], [], []>} : vector<32x16xf32>, vector<16x8xf32>, vector<32x8xf32> -> vector<32x8xf32>
    %c2000 = arith.constant 2000 : index
    %c0_297 = arith.constant 0 : index
    %568 = vector.load %arg1[%c2000, %c0_297] : memref<2128x128xf32, #tpu.memory_space<vmem>>, vector<32x16xf32>
    %cst_298 = arith.constant dense<0.000000e+00> : vector<32x8xf32>
    %569 = tpu.matmul %568, %565, %cst_298 {dimension_numbers = #tpu.dot_dimension_numbers<[1], [0], [0], [1], [0, 0, 1, 1], [], []>} : vector<32x16xf32>, vector<16x8xf32>, vector<32x8xf32> -> vector<32x8xf32>
    %570 = arith.addf %567, %569 : vector<32x8xf32>
    %c2040 = arith.constant 2040 : index
    %c0_299 = arith.constant 0 : index
    %571 = vector.load %arg1[%c2040, %c0_299] : memref<2128x128xf32, #tpu.memory_space<vmem>>, vector<1x8xf32>
    %572 = vector.broadcast %571 : vector<1x8xf32> to vector<32x8xf32>
    %573 = arith.addf %570, %572 : vector<32x8xf32>
    %c2048 = arith.constant 2048 : index
    %c0_300 = arith.constant 0 : index
    %574 = vector.load %arg1[%c2048, %c0_300] : memref<2128x128xf32, #tpu.memory_space<vmem>>, vector<8x8xf32>
    %cst_301 = arith.constant dense<0.000000e+00> : vector<32x8xf32>
    %575 = tpu.matmul %573, %574, %cst_301 {dimension_numbers = #tpu.dot_dimension_numbers<[1], [0], [0], [1], [0, 0, 1, 1], [], []>} : vector<32x8xf32>, vector<8x8xf32>, vector<32x8xf32> -> vector<32x8xf32>
    %c2056 = arith.constant 2056 : index
    %c0_302 = arith.constant 0 : index
    %576 = vector.load %arg1[%c2056, %c0_302] : memref<2128x128xf32, #tpu.memory_space<vmem>>, vector<8x8xf32>
    %cst_303 = arith.constant dense<0.000000e+00> : vector<32x8xf32>
    %577 = tpu.matmul %573, %576, %cst_303 {dimension_numbers = #tpu.dot_dimension_numbers<[1], [0], [0], [1], [0, 0, 1, 1], [], []>} : vector<32x8xf32>, vector<8x8xf32>, vector<32x8xf32> -> vector<32x8xf32>
    %c2064 = arith.constant 2064 : index
    %c0_304 = arith.constant 0 : index
    %578 = vector.load %arg1[%c2064, %c0_304] : memref<2128x128xf32, #tpu.memory_space<vmem>>, vector<8x8xf32>
    %cst_305 = arith.constant dense<0.000000e+00> : vector<32x8xf32>
    %579 = tpu.matmul %573, %578, %cst_305 {dimension_numbers = #tpu.dot_dimension_numbers<[1], [0], [0], [1], [0, 0, 1, 1], [], []>} : vector<32x8xf32>, vector<8x8xf32>, vector<32x8xf32> -> vector<32x8xf32>
    %c2072 = arith.constant 2072 : index
    %c0_306 = arith.constant 0 : index
    %580 = vector.load %arg1[%c2072, %c0_306] : memref<2128x128xf32, #tpu.memory_space<vmem>>, vector<8x8xf32>
    %cst_307 = arith.constant dense<0.000000e+00> : vector<32x8xf32>
    %581 = tpu.matmul %78, %580, %cst_307 {dimension_numbers = #tpu.dot_dimension_numbers<[1], [0], [0], [1], [0, 0, 1, 1], [], []>} : vector<32x8xf32>, vector<8x8xf32>, vector<32x8xf32> -> vector<32x8xf32>
    %582 = arith.addf %575, %581 : vector<32x8xf32>
    %c2080 = arith.constant 2080 : index
    %c0_308 = arith.constant 0 : index
    %583 = vector.load %arg1[%c2080, %c0_308] : memref<2128x128xf32, #tpu.memory_space<vmem>>, vector<8x8xf32>
    %cst_309 = arith.constant dense<0.000000e+00> : vector<32x8xf32>
    %584 = tpu.matmul %78, %583, %cst_309 {dimension_numbers = #tpu.dot_dimension_numbers<[1], [0], [0], [1], [0, 0, 1, 1], [], []>} : vector<32x8xf32>, vector<8x8xf32>, vector<32x8xf32> -> vector<32x8xf32>
    %585 = arith.addf %577, %584 : vector<32x8xf32>
    %c2088 = arith.constant 2088 : index
    %c0_310 = arith.constant 0 : index
    %586 = vector.load %arg1[%c2088, %c0_310] : memref<2128x128xf32, #tpu.memory_space<vmem>>, vector<8x8xf32>
    %cst_311 = arith.constant dense<0.000000e+00> : vector<32x8xf32>
    %587 = tpu.matmul %78, %586, %cst_311 {dimension_numbers = #tpu.dot_dimension_numbers<[1], [0], [0], [1], [0, 0, 1, 1], [], []>} : vector<32x8xf32>, vector<8x8xf32>, vector<32x8xf32> -> vector<32x8xf32>
    %588 = arith.addf %579, %587 : vector<32x8xf32>
    %c40_312 = arith.constant 40 : index
    %c0_313 = arith.constant 0 : index
    %589 = vector.load %arg1[%c40_312, %c0_313] : memref<2128x128xf32, #tpu.memory_space<vmem>>, vector<32x32xf32>
    %cst_314 = arith.constant dense<0.000000e+00> : vector<32x8xf32>
    %590 = tpu.matmul %589, %585, %cst_314 {dimension_numbers = #tpu.dot_dimension_numbers<[1], [0], [0], [1], [0, 0, 1, 1], [], []>} : vector<32x32xf32>, vector<32x8xf32>, vector<32x8xf32> -> vector<32x8xf32>
    %591 = arith.addf %582, %590 : vector<32x8xf32>
    %c72_315 = arith.constant 72 : index
    %c0_316 = arith.constant 0 : index
    %592 = vector.load %arg1[%c72_315, %c0_316] : memref<2128x128xf32, #tpu.memory_space<vmem>>, vector<32x32xf32>
    %cst_317 = arith.constant dense<0.000000e+00> : vector<32x8xf32>
    %593 = tpu.matmul %592, %588, %cst_317 {dimension_numbers = #tpu.dot_dimension_numbers<[1], [0], [0], [1], [0, 0, 1, 1], [], []>} : vector<32x32xf32>, vector<32x8xf32>, vector<32x8xf32> -> vector<32x8xf32>
    %594 = arith.addf %591, %593 : vector<32x8xf32>
    %cst_318 = arith.constant dense<0.000000e+00> : vector<8xf32>
    %595 = vector.multi_reduction <add>, %594, %cst_318 [0] : vector<32x8xf32> to vector<8xf32>
    %596 = vector.shape_cast %595 : vector<8xf32> to vector<1x8xf32>
    %cst_319 = arith.constant 3.125000e-02 : f32
    %597 = vector.broadcast %cst_319 : f32 to vector<1x8xf32>
    %598 = arith.mulf %596, %597 : vector<1x8xf32>
    %599 = arith.mulf %594, %594 : vector<32x8xf32>
    %cst_320 = arith.constant dense<0.000000e+00> : vector<8xf32>
    %600 = vector.multi_reduction <add>, %599, %cst_320 [0] : vector<32x8xf32> to vector<8xf32>
    %601 = vector.shape_cast %600 : vector<8xf32> to vector<1x8xf32>
    %cst_321 = arith.constant 3.125000e-02 : f32
    %602 = vector.broadcast %cst_321 : f32 to vector<1x8xf32>
    %603 = arith.mulf %601, %602 : vector<1x8xf32>
    %604 = arith.mulf %598, %598 : vector<1x8xf32>
    %605 = arith.subf %603, %604 : vector<1x8xf32>
    %cst_322 = arith.constant 0.000000e+00 : f32
    %606 = vector.broadcast %cst_322 : f32 to vector<1x8xf32>
    %607 = arith.maximumf %605, %606 : vector<1x8xf32>
    %c2096 = arith.constant 2096 : index
    %c0_323 = arith.constant 0 : index
    %608 = vector.load %arg1[%c2096, %c0_323] : memref<2128x128xf32, #tpu.memory_space<vmem>>, vector<1x8xf32>
    %cst_324 = arith.constant 9.99999974E-6 : f32
    %609 = vector.broadcast %cst_324 : f32 to vector<1x8xf32>
    %610 = arith.addf %607, %609 : vector<1x8xf32>
    %611 = math.rsqrt %610 : vector<1x8xf32>
    %612 = arith.mulf %608, %611 : vector<1x8xf32>
    %c2104 = arith.constant 2104 : index
    %c0_325 = arith.constant 0 : index
    %613 = vector.load %arg1[%c2104, %c0_325] : memref<2128x128xf32, #tpu.memory_space<vmem>>, vector<1x8xf32>
    %614 = arith.mulf %598, %612 : vector<1x8xf32>
    %615 = arith.subf %613, %614 : vector<1x8xf32>
    %616 = vector.broadcast %612 : vector<1x8xf32> to vector<32x8xf32>
    %617 = arith.mulf %594, %616 : vector<32x8xf32>
    %618 = vector.broadcast %615 : vector<1x8xf32> to vector<32x8xf32>
    %619 = arith.addf %617, %618 : vector<32x8xf32>
    %cst_326 = arith.constant 0.000000e+00 : f32
    %620 = vector.broadcast %cst_326 : f32 to vector<32x8xf32>
    %621 = arith.maximumf %619, %620 : vector<32x8xf32>
    %c2112 = arith.constant 2112 : index
    %c0_327 = arith.constant 0 : index
    %622 = vector.load %arg1[%c2112, %c0_327] : memref<2128x128xf32, #tpu.memory_space<vmem>>, vector<8x2xf32>
    %cst_328 = arith.constant dense<0.000000e+00> : vector<32x2xf32>
    %623 = tpu.matmul %621, %622, %cst_328 {dimension_numbers = #tpu.dot_dimension_numbers<[1], [0], [0], [1], [0, 0, 1, 1], [], []>} : vector<32x8xf32>, vector<8x2xf32>, vector<32x2xf32> -> vector<32x2xf32>
    %c2120 = arith.constant 2120 : index
    %c0_329 = arith.constant 0 : index
    %624 = vector.load %arg1[%c2120, %c0_329] : memref<2128x128xf32, #tpu.memory_space<vmem>>, vector<1x2xf32>
    %625 = vector.broadcast %624 : vector<1x2xf32> to vector<32x2xf32>
    %626 = arith.addf %623, %625 : vector<32x2xf32>
    %c0_330 = arith.constant 0 : index
    %c0_331 = arith.constant 0 : index
    %627 = vector.load %arg2[%c0_330, %c0_331] : memref<32x2xf32, #tpu.memory_space<vmem>>, vector<32x2xf32>
    tpu.vector_store %arg2[%c0_330, %c0_331], %626 {strides = array<i32>} : memref<32x2xf32, #tpu.memory_space<vmem>>, vector<32x2xf32>,
    return
  }
}

</mosaic_0001>

<llo_original>
// kernel: forward.1
$region0: #{forward.1}
  #allocation0 [shape = 'u32[]', space=smem, size = 0x4, offset = 0x4, fixed_abs, tag = 'smem constant byte address 0x4 - core index']
  #allocation1 [shape = 'u32[72,128]{1,0:T(1,128)}', space=vmem, size = 0x9000, scoped, tag = 'internal scratch']
  %s0 = inlined_call_operand.vmem [shape: f32[32,3], index: 0, kind: input, shape index: {}]
  %s1 = inlined_call_operand.hbm [shape: f32[2128,128], index: 1, kind: input, shape index: {}]
  %s2 = inlined_call_operand.vmem [shape: f32[32,2], index: 2, kind: output, shape index: {}]
  %s3 = sld [smem:[#allocation0]]
  $region22: #{forward.1} parent=0
    _
  %s5 = ssub.s32 1, %s3
  %s6 = scalar_select 0, %s5, %s3
  $region1: #{forward.1} parent=0
    #allocation2 [shape = 'u8[1089536]{0}', space=vmem, size = 0x10a000, scoped, tag = 'input window, operand 1, single buffered']
    #allocation3 [shape = 's32[1]{0}', space=sflag, size = 0x4, scoped, tag = 'scoped memory for forward.1']
    %7 = vsyncpa [#allocation3], 0
    // Predicated region
    $region2: #{forward.1} parent=1 // pred_check
      _
    $region3: #{forward.1} parent=1 // pred_check_branch
      %9 = sbr.rel (0) target = $region5
    $region4: #{forward.1} parent=1 // pred_region
      _
    $region5: #{forward.1} parent=1 // pred_fallthru
      _
    // Predicated region
    $region6: #{forward.1} parent=1 // pred_check
      _
    $region7: #{forward.1} parent=1 // pred_check_branch
      %11 = sbr.rel (0) target = $region9
    $region8: #{forward.1} parent=1 // pred_region
      %13 = vsyncadd [#allocation3], 0
      %s14 = sshll.u32 %s1, 4
      %s15 = int_to_ptr.hbm [resolvable:$true] %s14
      %s16 = sshll.u32 [#allocation2], 4
      %s17 = int_to_ptr.vmem [resolvable:$true] %s16
      %22 = dma.hbm_to_vmem [thread:$0]  %s15, 34048, %s17, [#allocation3], 128, 128, 8
    $region9: #{forward.1} parent=1 // pred_fallthru
      _
    // Predicated region
    $region10: #{forward.1} parent=1 // pred_check
      _
    $region11: #{forward.1} parent=1 // pred_check_branch
      %24 = sbr.rel (0) target = $region13
    $region12: #{forward.1} parent=1 // pred_region
      %26 = dma.done [#allocation3], 34048
    $region13: #{forward.1} parent=1 // pred_fallthru
      _
    %v27 = vld [vmem:[%s0] sm:$0xff]
    %v28 = vld [vmem:[%s0 + $0x8] sm:$0xff]
    %v29 = vld [vmem:[%s0 + $0x10] sm:$0xff]
    %v30 = vld [vmem:[%s0 + $0x18] sm:$0xff]
    %v31 = vld [vmem:[#allocation2] sm:$0x7]
    %v32 = vld [vmem:[#allocation2 + $0x8] sm:$0x7]
    %vm33 = vcmask 23552
    %v35 = vsel %vm33, %v27, 0
    %v38 = vsel %vm33, %v28, 0
    %v41 = vsel %vm33, %v29, 0
    %v44 = vsel %vm33, %v30, 0
    %vm46 = vcmask 1042432
    %v48 = vsel %vm46, %v32, 0
    %50 = vmatpush.msra.mxu0 0.0
    %51 = vmatpush.msra.mxu0 0.0
    %52 = vmatpush.msra.mxu0 0.0
    %53 = vmatpush.msra.mxu0 0.0
    %54 = vmatpush.msra.mxu0 0.0
    %55 = vmatpush.msra.mxu0 0.0
    %56 = vmatpush.msra.mxu0 0.0
    %57 = vmatpush.msra.mxu0 0.0
    %58 = vmatpush.msra.mxu0 0.0
    %59 = vmatpush.msra.mxu0 0.0
    %60 = vmatpush.msra.mxu0 0.0
    %61 = vmatpush.msra.mxu0 0.0
    %62 = vmatpush.msra.mxu0 0.0
    %63 = vmatpush.msra.mxu0 0.0
    %64 = vmatpush.msra.mxu0 0.0
    %65 = vmatpush.msra.mxu0 %v48
    %66 = vmatmul.f32.gmra.mxu0 %v35
    %v67 = vpop.f32.mrf.mxu0
    %v68 = vadd.f32 0.0, %v67
    %69 = vmatmul.f32.gmra.mxu0 %v38
    %v70 = vpop.f32.mrf.mxu0
    %v71 = vadd.f32 0.0, %v70
    %72 = vmatmul.f32.gmra.mxu0 %v41
    %v73 = vpop.f32.mrf.mxu0
    %v74 = vadd.f32 0.0, %v73
    %75 = vmatmul.f32.gmra.mxu0 %v44
    %v76 = vpop.f32.mrf.mxu0
    %v77 = vadd.f32 0.0, %v76
    %78 = vdwg.mxu0
    %v79 = vld [vmem:[#allocation2 + $0x10] sm:$0x7]
    %v81 = vsel %vm46, %v79, 0
    %83 = vmatpush.msra.mxu0 0.0
    %84 = vmatpush.msra.mxu0 0.0
    %85 = vmatpush.msra.mxu0 0.0
    %86 = vmatpush.msra.mxu0 0.0
    %87 = vmatpush.msra.mxu0 0.0
    %88 = vmatpush.msra.mxu0 0.0
    %89 = vmatpush.msra.mxu0 0.0
    %90 = vmatpush.msra.mxu0 0.0
    %91 = vmatpush.msra.mxu0 0.0
    %92 = vmatpush.msra.mxu0 0.0
    %93 = vmatpush.msra.mxu0 0.0
    %94 = vmatpush.msra.mxu0 0.0
    %95 = vmatpush.msra.mxu0 0.0
    %96 = vmatpush.msra.mxu0 0.0
    %97 = vmatpush.msra.mxu0 0.0
    %98 = vmatpush.msra.mxu0 %v81
    %99 = vmatmul.f32.gmra.mxu0 %v35
    %v100 = vpop.f32.mrf.mxu0
    %v101 = vadd.f32 0.0, %v100
    %102 = vmatmul.f32.gmra.mxu0 %v38
    %v103 = vpop.f32.mrf.mxu0
    %v104 = vadd.f32 0.0, %v103
    %105 = vmatmul.f32.gmra.mxu0 %v41
    %v106 = vpop.f32.mrf.mxu0
    %v107 = vadd.f32 0.0, %v106
    %108 = vmatmul.f32.gmra.mxu0 %v44
    %v109 = vpop.f32.mrf.mxu0
    %v110 = vadd.f32 0.0, %v109
    %111 = vdwg.mxu0
    %v112 = vld [vmem:[#allocation2 + $0x28] sm:$0xff]
    %v113 = vld [vmem:[#allocation2 + $0x30] sm:$0xff]
    %v114 = vld [vmem:[#allocation2 + $0x38] sm:$0xff]
    %v115 = vld [vmem:[#allocation2 + $0x40] sm:$0xff]
    %vm116 = vcmask 261120
    %v118 = vsel %vm116, %v112, 0
    %v121 = vsel %vm116, %v113, 0
    %v124 = vsel %vm116, %v114, 0
    %v127 = vsel %vm116, %v115, 0
    %129 = vmatpush.msra.mxu0 0.0
    %130 = vmatpush.msra.mxu0 0.0
    %131 = vmatpush.msra.mxu0 0.0
    %132 = vmatpush.msra.mxu0 0.0
    %133 = vmatpush.msra.mxu0 0.0
    %134 = vmatpush.msra.mxu0 0.0
    %135 = vmatpush.msra.mxu0 0.0
    %136 = vmatpush.msra.mxu0 0.0
    %137 = vmatpush.msra.mxu0 0.0
    %138 = vmatpush.msra.mxu0 0.0
    %139 = vmatpush.msra.mxu0 0.0
    %140 = vmatpush.msra.mxu0 0.0
    %141 = vmatpush.msra.mxu0 %v77
    %142 = vmatpush.msra.mxu0 %v74
    %143 = vmatpush.msra.mxu0 %v71
    %144 = vmatpush.msra.mxu0 %v68
    %145 = vmatmul.f32.gmra.mxu0 %v118
    %v146 = vpop.f32.mrf.mxu0
    %v147 = vadd.f32 0.0, %v146
    %148 = vmatmul.f32.gmra.mxu0 %v121
    %v149 = vpop.f32.mrf.mxu0
    %v150 = vadd.f32 0.0, %v149
    %151 = vmatmul.f32.gmra.mxu0 %v124
    %v152 = vpop.f32.mrf.mxu0
    %v153 = vadd.f32 0.0, %v152
    %154 = vmatmul.f32.gmra.mxu0 %v127
    %v155 = vpop.f32.mrf.mxu0
    %v156 = vadd.f32 0.0, %v155
    %157 = vdwg.mxu0
    %v159 = vsel %vm46, %v31, 0
    %161 = vmatpush.msra.mxu0 0.0
    %162 = vmatpush.msra.mxu0 0.0
    %163 = vmatpush.msra.mxu0 0.0
    %164 = vmatpush.msra.mxu0 0.0
    %165 = vmatpush.msra.mxu0 0.0
    %166 = vmatpush.msra.mxu0 0.0
    %167 = vmatpush.msra.mxu0 0.0
    %168 = vmatpush.msra.mxu0 0.0
    %169 = vmatpush.msra.mxu0 0.0
    %170 = vmatpush.msra.mxu0 0.0
    %171 = vmatpush.msra.mxu0 0.0
    %172 = vmatpush.msra.mxu0 0.0
    %173 = vmatpush.msra.mxu0 0.0
    %174 = vmatpush.msra.mxu0 0.0
    %175 = vmatpush.msra.mxu0 0.0
    %176 = vmatpush.msra.mxu0 %v159
    %177 = vmatmul.f32.gmra.mxu0 %v35
    %v178 = vpop.f32.mrf.mxu0
    %v179 = vadd.f32 %v147, %v178
    %180 = vmatmul.f32.gmra.mxu0 %v38
    %v181 = vpop.f32.mrf.mxu0
    %v182 = vadd.f32 %v150, %v181
    %183 = vmatmul.f32.gmra.mxu0 %v41
    %v184 = vpop.f32.mrf.mxu0
    %v185 = vadd.f32 %v153, %v184
    %186 = vmatmul.f32.gmra.mxu0 %v44
    %v187 = vpop.f32.mrf.mxu0
    %v188 = vadd.f32 %v156, %v187
    %189 = vdwg.mxu0
    %v190 = vld [vmem:[#allocation2 + $0x48] sm:$0xff]
    %v191 = vld [vmem:[#allocation2 + $0x50] sm:$0xff]
    %v192 = vld [vmem:[#allocation2 + $0x58] sm:$0xff]
    %v193 = vld [vmem:[#allocation2 + $0x60] sm:$0xff]
    %v195 = vsel %vm116, %v190, 0
    %v198 = vsel %vm116, %v191, 0
    %v201 = vsel %vm116, %v192, 0
    %v204 = vsel %vm116, %v193, 0
    %206 = vmatpush.msra.mxu0 0.0
    %207 = vmatpush.msra.mxu0 0.0
    %208 = vmatpush.msra.mxu0 0.0
    %209 = vmatpush.msra.mxu0 0.0
    %210 = vmatpush.msra.mxu0 0.0
    %211 = vmatpush.msra.mxu0 0.0
    %212 = vmatpush.msra.mxu0 0.0
    %213 = vmatpush.msra.mxu0 0.0
    %214 = vmatpush.msra.mxu0 0.0
    %215 = vmatpush.msra.mxu0 0.0
    %216 = vmatpush.msra.mxu0 0.0
    %217 = vmatpush.msra.mxu0 0.0
    %218 = vmatpush.msra.mxu0 %v110
    %219 = vmatpush.msra.mxu0 %v107
    %220 = vmatpush.msra.mxu0 %v104
    %221 = vmatpush.msra.mxu0 %v101
    %222 = vmatmul.f32.gmra.mxu0 %v195
    %v223 = vpop.f32.mrf.mxu0
    %v224 = vadd.f32 0.0, %v223
    %225 = vmatmul.f32.gmra.mxu0 %v198
    %v226 = vpop.f32.mrf.mxu0
    %v227 = vadd.f32 0.0, %v226
    %228 = vmatmul.f32.gmra.mxu0 %v201
    %v229 = vpop.f32.mrf.mxu0
    %v230 = vadd.f32 0.0, %v229
    %231 = vmatmul.f32.gmra.mxu0 %v204
    %v232 = vpop.f32.mrf.mxu0
    %v233 = vadd.f32 0.0, %v232
    %234 = vdwg.mxu0
    %v235 = vadd.f32 %v179, %v224
    %v236 = vadd.f32 %v182, %v227
    %v237 = vadd.f32 %v185, %v230
    %v238 = vadd.f32 %v188, %v233
    %vm239 = vcmask 64512
    %v240 = vsel %vm239, %v235, 0.0
    %v241 = vsel %vm239, %v236, 0.0
    %v242 = vadd.f32 %v240, %v241
    %v243 = vsel %vm239, %v237, 0.0
    %v244 = vadd.f32 %v242, %v243
    %v245 = vsel %vm239, %v238, 0.0
    %v246 = vadd.f32 %v244, %v245
    %v247 = vrot.slane %v246, 4
    %v248 = vadd.f32 %v246, %v247
    %v249 = vrot.slane %v248, 2
    %v250 = vadd.f32 %v248, %v249
    %v251 = vrot.slane %v250, 1
    %v252 = vadd.f32 %v250, %v251
    %v253 = vmul.f32 %v252, 0.03125
    %v254 = vmul.f32 %v235, %v235
    %v255 = vmul.f32 %v236, %v236
    %v256 = vmul.f32 %v237, %v237
    %v257 = vmul.f32 %v238, %v238
    %v258 = vsel %vm239, %v254, 0.0
    %v259 = vsel %vm239, %v255, 0.0
    %v260 = vadd.f32 %v258, %v259
    %v261 = vsel %vm239, %v256, 0.0
    %v262 = vadd.f32 %v260, %v261
    %v263 = vsel %vm239, %v257, 0.0
    %v264 = vadd.f32 %v262, %v263
    %v265 = vrot.slane %v264, 4
    %v266 = vadd.f32 %v264, %v265
    %v267 = vrot.slane %v266, 2
    %v268 = vadd.f32 %v266, %v267
    %v269 = vrot.slane %v268, 1
    %v270 = vadd.f32 %v268, %v269
    %v271 = vmul.f32 %v270, 0.03125
    %v272 = vmul.f32 %v253, %v253
    %v273 = vsub.f32 %v271, %v272
    %v274 = vmax.f32 %v273, 0.0
    %v275 = vld [vmem:[#allocation2 + $0x18] sm:$0x1]
    %v276 = vadd.f32 %v274, 1e-05
    %v277 = vrsqrt.pop %v276
    %v278 = vmul.f32 %v277, %v276
    %v279 = vmul.f32 %v278, %v277
    %v280 = vmul.f32 0.5, %v279
    %v281 = vsub.f32 1.5, %v280
    %v282 = vmul.f32 %v277, %v281
    %vm283 = vweird.f32 %v276
    %vm284 = vweird.f32 %v277
    %vm285 = vmor %vm283, %vm284
    %v286 = vsel %vm285, %v277, %v282
    %v287 = vmul.f32 %v275, %v286
    %v288 = vld [vmem:[#allocation2 + $0x20] sm:$0x1]
    %v289 = vmul.f32 %v253, %v287
    %v290 = vsub.f32 %v288, %v289
    %v291 = vperm.slane %v287, 0
    %v292 = vmul.f32 %v235, %v291
    %v293 = vmul.f32 %v236, %v291
    %v294 = vmul.f32 %v237, %v291
    %v295 = vmul.f32 %v238, %v291
    %v296 = vperm.slane %v290, 0
    %v297 = vadd.f32 %v292, %v296
    %v298 = vadd.f32 %v293, %v296
    %v299 = vadd.f32 %v294, %v296
    %v300 = vadd.f32 %v295, %v296
    %v301 = vmax.f32 %v297, 0.0
    %v302 = vmax.f32 %v298, 0.0
    %v303 = vmax.f32 %v299, 0.0
    %v304 = vmax.f32 %v300, 0.0
    %v305 = vld [vmem:[#allocation2 + $0x68] sm:$0xff]
    %v306 = vld [vmem:[#allocation2 + $0x70] sm:$0xff]
    %v308 = vsel %vm239, %v301, 0
    %v311 = vsel %vm239, %v302, 0
    %v314 = vsel %vm239, %v303, 0
    %v317 = vsel %vm239, %v304, 0
    %319 = vmatpush.msra.mxu0 0.0
    %320 = vmatpush.msra.mxu0 0.0
    %321 = vmatpush.msra.mxu0 0.0
    %322 = vmatpush.msra.mxu0 0.0
    %323 = vmatpush.msra.mxu0 0.0
    %324 = vmatpush.msra.mxu0 0.0
    %325 = vmatpush.msra.mxu0 0.0
    %326 = vmatpush.msra.mxu0 0.0
    %327 = vmatpush.msra.mxu0 0.0
    %328 = vmatpush.msra.mxu0 0.0
    %329 = vmatpush.msra.mxu0 0.0
    %330 = vmatpush.msra.mxu0 0.0
    %331 = vmatpush.msra.mxu0 0.0
    %332 = vmatpush.msra.mxu0 0.0
    %333 = vmatpush.msra.mxu0 0.0
    %334 = vmatpush.msra.mxu0 %v306
    %335 = vmatmul.f32.gmra.mxu0 %v308
    %v336 = vpop.f32.mrf.mxu0
    %v337 = vadd.f32 0.0, %v336
    %338 = vmatmul.f32.gmra.mxu0 %v311
    %v339 = vpop.f32.mrf.mxu0
    %v340 = vadd.f32 0.0, %v339
    %341 = vmatmul.f32.gmra.mxu0 %v314
    %v342 = vpop.f32.mrf.mxu0
    %v343 = vadd.f32 0.0, %v342
    %344 = vmatmul.f32.gmra.mxu0 %v317
    %v345 = vpop.f32.mrf.mxu0
    %v346 = vadd.f32 0.0, %v345
    %347 = vdwg.mxu0
    %v348 = vld [vmem:[#allocation2 + $0x78] sm:$0xff]
    %349 = vmatpush.msra.mxu0 0.0
    %350 = vmatpush.msra.mxu0 0.0
    %351 = vmatpush.msra.mxu0 0.0
    %352 = vmatpush.msra.mxu0 0.0
    %353 = vmatpush.msra.mxu0 0.0
    %354 = vmatpush.msra.mxu0 0.0
    %355 = vmatpush.msra.mxu0 0.0
    %356 = vmatpush.msra.mxu0 0.0
    %357 = vmatpush.msra.mxu0 0.0
    %358 = vmatpush.msra.mxu0 0.0
    %359 = vmatpush.msra.mxu0 0.0
    %360 = vmatpush.msra.mxu0 0.0
    %361 = vmatpush.msra.mxu0 0.0
    %362 = vmatpush.msra.mxu0 0.0
    %363 = vmatpush.msra.mxu0 0.0
    %364 = vmatpush.msra.mxu0 %v348
    %365 = vmatmul.f32.gmra.mxu0 %v308
    %v366 = vpop.f32.mrf.mxu0
    %v367 = vadd.f32 0.0, %v366
    %368 = vmatmul.f32.gmra.mxu0 %v311
    %v369 = vpop.f32.mrf.mxu0
    %v370 = vadd.f32 0.0, %v369
    %371 = vmatmul.f32.gmra.mxu0 %v314
    %v372 = vpop.f32.mrf.mxu0
    %v373 = vadd.f32 0.0, %v372
    %374 = vmatmul.f32.gmra.mxu0 %v317
    %v375 = vpop.f32.mrf.mxu0
    %v376 = vadd.f32 0.0, %v375
    %377 = vdwg.mxu0
    %378 = vmatpush.msra.mxu0 0.0
    %379 = vmatpush.msra.mxu0 0.0
    %380 = vmatpush.msra.mxu0 0.0
    %381 = vmatpush.msra.mxu0 0.0
    %382 = vmatpush.msra.mxu0 0.0
    %383 = vmatpush.msra.mxu0 0.0
    %384 = vmatpush.msra.mxu0 0.0
    %385 = vmatpush.msra.mxu0 0.0
    %386 = vmatpush.msra.mxu0 0.0
    %387 = vmatpush.msra.mxu0 0.0
    %388 = vmatpush.msra.mxu0 0.0
    %389 = vmatpush.msra.mxu0 0.0
    %390 = vmatpush.msra.mxu0 %v346
    %391 = vmatpush.msra.mxu0 %v343
    %392 = vmatpush.msra.mxu0 %v340
    %393 = vmatpush.msra.mxu0 %v337
    %394 = vmatmul.f32.gmra.mxu0 %v118
    %v395 = vpop.f32.mrf.mxu0
    %v396 = vadd.f32 0.0, %v395
    %397 = vmatmul.f32.gmra.mxu0 %v121
    %v398 = vpop.f32.mrf.mxu0
    %v399 = vadd.f32 0.0, %v398
    %400 = vmatmul.f32.gmra.mxu0 %v124
    %v401 = vpop.f32.mrf.mxu0
    %v402 = vadd.f32 0.0, %v401
    %403 = vmatmul.f32.gmra.mxu0 %v127
    %v404 = vpop.f32.mrf.mxu0
    %v405 = vadd.f32 0.0, %v404
    %406 = vdwg.mxu0
    %407 = vmatpush.msra.mxu0 0.0
    %408 = vmatpush.msra.mxu0 0.0
    %409 = vmatpush.msra.mxu0 0.0
    %410 = vmatpush.msra.mxu0 0.0
    %411 = vmatpush.msra.mxu0 0.0
    %412 = vmatpush.msra.mxu0 0.0
    %413 = vmatpush.msra.mxu0 0.0
    %414 = vmatpush.msra.mxu0 0.0
    %415 = vmatpush.msra.mxu0 0.0
    %416 = vmatpush.msra.mxu0 0.0
    %417 = vmatpush.msra.mxu0 0.0
    %418 = vmatpush.msra.mxu0 0.0
    %419 = vmatpush.msra.mxu0 0.0
    %420 = vmatpush.msra.mxu0 0.0
    %421 = vmatpush.msra.mxu0 0.0
    %422 = vmatpush.msra.mxu0 %v305
    %423 = vmatmul.f32.gmra.mxu0 %v308
    %v424 = vpop.f32.mrf.mxu0
    %v425 = vadd.f32 %v396, %v424
    %426 = vmatmul.f32.gmra.mxu0 %v311
    %v427 = vpop.f32.mrf.mxu0
    %v428 = vadd.f32 %v399, %v427
    %429 = vmatmul.f32.gmra.mxu0 %v314
    %v430 = vpop.f32.mrf.mxu0
    %v431 = vadd.f32 %v402, %v430
    %432 = vmatmul.f32.gmra.mxu0 %v317
    %v433 = vpop.f32.mrf.mxu0
    %v434 = vadd.f32 %v405, %v433
    %435 = vdwg.mxu0
    %436 = vmatpush.msra.mxu0 0.0
    %437 = vmatpush.msra.mxu0 0.0
    %438 = vmatpush.msra.mxu0 0.0
    %439 = vmatpush.msra.mxu0 0.0
    %440 = vmatpush.msra.mxu0 0.0
    %441 = vmatpush.msra.mxu0 0.0
    %442 = vmatpush.msra.mxu0 0.0
    %443 = vmatpush.msra.mxu0 0.0
    %444 = vmatpush.msra.mxu0 0.0
    %445 = vmatpush.msra.mxu0 0.0
    %446 = vmatpush.msra.mxu0 0.0
    %447 = vmatpush.msra.mxu0 0.0
    %448 = vmatpush.msra.mxu0 %v376
    %449 = vmatpush.msra.mxu0 %v373
    %450 = vmatpush.msra.mxu0 %v370
    %451 = vmatpush.msra.mxu0 %v367
    %452 = vmatmul.f32.gmra.mxu0 %v195
    %v453 = vpop.f32.mrf.mxu0
    %v454 = vadd.f32 0.0, %v453
    %455 = vmatmul.f32.gmra.mxu0 %v198
    %v456 = vpop.f32.mrf.mxu0
    %v457 = vadd.f32 0.0, %v456
    %458 = vmatmul.f32.gmra.mxu0 %v201
    %v459 = vpop.f32.mrf.mxu0
    %v460 = vadd.f32 0.0, %v459
    %461 = vmatmul.f32.gmra.mxu0 %v204
    %v462 = vpop.f32.mrf.mxu0
    %v463 = vadd.f32 0.0, %v462
    %464 = vdwg.mxu0
    %v465 = vadd.f32 %v425, %v454
    %v466 = vadd.f32 %v428, %v457
    %v467 = vadd.f32 %v431, %v460
    %v468 = vadd.f32 %v434, %v463
    %v469 = vsel %vm239, %v465, 0.0
    %v470 = vsel %vm239, %v466, 0.0
    %v471 = vadd.f32 %v469, %v470
    %v472 = vsel %vm239, %v467, 0.0
    %v473 = vadd.f32 %v471, %v472
    %v474 = vsel %vm239, %v468, 0.0
    %v475 = vadd.f32 %v473, %v474
    %v476 = vrot.slane %v475, 4
    %v477 = vadd.f32 %v475, %v476
    %v478 = vrot.slane %v477, 2
    %v479 = vadd.f32 %v477, %v478
    %v480 = vrot.slane %v479, 1
    %v481 = vadd.f32 %v479, %v480
    %v482 = vmul.f32 %v481, 0.03125
    %v483 = vmul.f32 %v465, %v465
    %v484 = vmul.f32 %v466, %v466
    %v485 = vmul.f32 %v467, %v467
    %v486 = vmul.f32 %v468, %v468
    %v487 = vsel %vm239, %v483, 0.0
    %v488 = vsel %vm239, %v484, 0.0
    %v489 = vadd.f32 %v487, %v488
    %v490 = vsel %vm239, %v485, 0.0
    %v491 = vadd.f32 %v489, %v490
    %v492 = vsel %vm239, %v486, 0.0
    %v493 = vadd.f32 %v491, %v492
    %v494 = vrot.slane %v493, 4
    %v495 = vadd.f32 %v493, %v494
    %v496 = vrot.slane %v495, 2
    %v497 = vadd.f32 %v495, %v496
    %v498 = vrot.slane %v497, 1
    %v499 = vadd.f32 %v497, %v498
    %v500 = vmul.f32 %v499, 0.03125
    %v501 = vmul.f32 %v482, %v482
    %v502 = vsub.f32 %v500, %v501
    %v503 = vmax.f32 %v502, 0.0
    %v504 = vld [vmem:[#allocation2 + $0x80] sm:$0x1]
    %v505 = vadd.f32 %v503, 1e-05
    %v506 = vrsqrt.pop %v505
    %v507 = vmul.f32 %v506, %v505
    %v508 = vmul.f32 %v507, %v506
    %v509 = vmul.f32 0.5, %v508
    %v510 = vsub.f32 1.5, %v509
    %v511 = vmul.f32 %v506, %v510
    %vm512 = vweird.f32 %v505
    %vm513 = vweird.f32 %v506
    %vm514 = vmor %vm512, %vm513
    %v515 = vsel %vm514, %v506, %v511
    %v516 = vmul.f32 %v504, %v515
    %v517 = vld [vmem:[#allocation2 + $0x88] sm:$0x1]
    %v518 = vmul.f32 %v482, %v516
    %v519 = vsub.f32 %v517, %v518
    %v520 = vperm.slane %v516, 0
    %v521 = vmul.f32 %v465, %v520
    %v522 = vmul.f32 %v466, %v520
    %v523 = vmul.f32 %v467, %v520
    %v524 = vmul.f32 %v468, %v520
    %v525 = vperm.slane %v519, 0
    %v526 = vadd.f32 %v521, %v525
    %v527 = vadd.f32 %v522, %v525
    %v528 = vadd.f32 %v523, %v525
    %v529 = vadd.f32 %v524, %v525
    %v530 = vmax.f32 %v526, 0.0
    %v531 = vmax.f32 %v527, 0.0
    %v532 = vmax.f32 %v528, 0.0
    %v533 = vmax.f32 %v529, 0.0
    %v534 = vld [vmem:[#allocation2 + $0x90] sm:$0xff]
    %v535 = vld [vmem:[#allocation2 + $0x98] sm:$0xff]
    %v537 = vsel %vm116, %v534, 0
    %v540 = vsel %vm116, %v535, 0
    %542 = vmatpush.msra.mxu0 0.0
    %543 = vmatpush.msra.mxu0 0.0
    %544 = vmatpush.msra.mxu0 0.0
    %545 = vmatpush.msra.mxu0 0.0
    %546 = vmatpush.msra.mxu0 0.0
    %547 = vmatpush.msra.mxu0 0.0
    %548 = vmatpush.msra.mxu0 0.0
    %549 = vmatpush.msra.mxu0 0.0
    %550 = vmatpush.msra.mxu0 0.0
    %551 = vmatpush.msra.mxu0 0.0
    %552 = vmatpush.msra.mxu0 0.0
    %553 = vmatpush.msra.mxu0 0.0
    %554 = vmatpush.msra.mxu0 %v533
    %555 = vmatpush.msra.mxu0 %v532
    %556 = vmatpush.msra.mxu0 %v531
    %557 = vmatpush.msra.mxu0 %v530
    %558 = vmatmul.f32.gmra.mxu0 %v537
    %v559 = vpop.f32.mrf.mxu0
    %v560 = vadd.f32 0.0, %v559
    %561 = vmatmul.f32.gmra.mxu0 %v540
    %v562 = vpop.f32.mrf.mxu0
    %v563 = vadd.f32 0.0, %v562
    %564 = vdwg.mxu0
    %v565 = vld [vmem:[#allocation2 + $0xa0] sm:$0xff]
    %v566 = vld [vmem:[#allocation2 + $0xa8] sm:$0xff]
    %v568 = vsel %vm239, %v560, 0
    %v571 = vsel %vm239, %v563, 0
    %573 = vmatpush.msra.mxu0 0.0
    %574 = vmatpush.msra.mxu0 0.0
    %575 = vmatpush.msra.mxu0 0.0
    %576 = vmatpush.msra.mxu0 0.0
    %577 = vmatpush.msra.mxu0 0.0
    %578 = vmatpush.msra.mxu0 0.0
    %579 = vmatpush.msra.mxu0 0.0
    %580 = vmatpush.msra.mxu0 0.0
    %581 = vmatpush.msra.mxu0 0.0
    %582 = vmatpush.msra.mxu0 0.0
    %583 = vmatpush.msra.mxu0 0.0
    %584 = vmatpush.msra.mxu0 0.0
    %585 = vmatpush.msra.mxu0 0.0
    %586 = vmatpush.msra.mxu0 0.0
    %587 = vmatpush.msra.mxu0 0.0
    %588 = vmatpush.msra.mxu0 %v566
    %589 = vmatmul.f32.gmra.mxu0 %v568
    %v590 = vpop.f32.mrf.mxu0
    %v591 = vadd.f32 0.0, %v590
    %592 = vmatmul.f32.gmra.mxu0 %v571
    %v593 = vpop.f32.mrf.mxu0
    %v594 = vadd.f32 0.0, %v593
    %595 = vdwg.mxu0
    %v596 = vld [vmem:[#allocation2 + $0xb0] sm:$0xff]
    %597 = vmatpush.msra.mxu0 0.0
    %598 = vmatpush.msra.mxu0 0.0
    %599 = vmatpush.msra.mxu0 0.0
    %600 = vmatpush.msra.mxu0 0.0
    %601 = vmatpush.msra.mxu0 0.0
    %602 = vmatpush.msra.mxu0 0.0
    %603 = vmatpush.msra.mxu0 0.0
    %604 = vmatpush.msra.mxu0 0.0
    %605 = vmatpush.msra.mxu0 0.0
    %606 = vmatpush.msra.mxu0 0.0
    %607 = vmatpush.msra.mxu0 0.0
    %608 = vmatpush.msra.mxu0 0.0
    %609 = vmatpush.msra.mxu0 0.0
    %610 = vmatpush.msra.mxu0 0.0
    %611 = vmatpush.msra.mxu0 0.0
    %612 = vmatpush.msra.mxu0 %v596
    %613 = vmatmul.f32.gmra.mxu0 %v568
    %v614 = vpop.f32.mrf.mxu0
    %v615 = vadd.f32 0.0, %v614
    %616 = vmatmul.f32.gmra.mxu0 %v571
    %v617 = vpop.f32.mrf.mxu0
    %v618 = vadd.f32 0.0, %v617
    %619 = vdwg.mxu0
    %v620 = vld [vmem:[#allocation2 + $0xc8] sm:$0xff]
    %v621 = vld [vmem:[#allocation2 + $0xd0] sm:$0xff]
    %vm622 = vcmask 130048
    %v624 = vsel %vm622, %v620, 0
    %v627 = vsel %vm622, %v621, 0
    %629 = vmatpush.msra.mxu0 0.0
    %630 = vmatpush.msra.mxu0 0.0
    %631 = vmatpush.msra.mxu0 0.0
    %632 = vmatpush.msra.mxu0 0.0
    %633 = vmatpush.msra.mxu0 0.0
    %634 = vmatpush.msra.mxu0 0.0
    %635 = vmatpush.msra.mxu0 0.0
    %636 = vmatpush.msra.mxu0 0.0
    %637 = vmatpush.msra.mxu0 0.0
    %638 = vmatpush.msra.mxu0 0.0
    %639 = vmatpush.msra.mxu0 0.0
    %640 = vmatpush.msra.mxu0 0.0
    %641 = vmatpush.msra.mxu0 0.0
    %642 = vmatpush.msra.mxu0 0.0
    %643 = vmatpush.msra.mxu0 %v594
    %644 = vmatpush.msra.mxu0 %v591
    %645 = vmatmul.f32.gmra.mxu0 %v624
    %v646 = vpop.f32.mrf.mxu0
    %v647 = vadd.f32 0.0, %v646
    %648 = vmatmul.f32.gmra.mxu0 %v627
    %v649 = vpop.f32.mrf.mxu0
    %v650 = vadd.f32 0.0, %v649
    %651 = vdwg.mxu0
    %652 = vmatpush.msra.mxu0 0.0
    %653 = vmatpush.msra.mxu0 0.0
    %654 = vmatpush.msra.mxu0 0.0
    %655 = vmatpush.msra.mxu0 0.0
    %656 = vmatpush.msra.mxu0 0.0
    %657 = vmatpush.msra.mxu0 0.0
    %658 = vmatpush.msra.mxu0 0.0
    %659 = vmatpush.msra.mxu0 0.0
    %660 = vmatpush.msra.mxu0 0.0
    %661 = vmatpush.msra.mxu0 0.0
    %662 = vmatpush.msra.mxu0 0.0
    %663 = vmatpush.msra.mxu0 0.0
    %664 = vmatpush.msra.mxu0 0.0
    %665 = vmatpush.msra.mxu0 0.0
    %666 = vmatpush.msra.mxu0 0.0
    %667 = vmatpush.msra.mxu0 %v565
    %668 = vmatmul.f32.gmra.mxu0 %v568
    %v669 = vpop.f32.mrf.mxu0
    %v670 = vadd.f32 %v647, %v669
    %671 = vmatmul.f32.gmra.mxu0 %v571
    %v672 = vpop.f32.mrf.mxu0
    %v673 = vadd.f32 %v650, %v672
    %674 = vdwg.mxu0
    %v675 = vld [vmem:[#allocation2 + $0xd8] sm:$0xff]
    %v676 = vld [vmem:[#allocation2 + $0xe0] sm:$0xff]
    %v678 = vsel %vm622, %v675, 0
    %v681 = vsel %vm622, %v676, 0
    %683 = vmatpush.msra.mxu0 0.0
    %684 = vmatpush.msra.mxu0 0.0
    %685 = vmatpush.msra.mxu0 0.0
    %686 = vmatpush.msra.mxu0 0.0
    %687 = vmatpush.msra.mxu0 0.0
    %688 = vmatpush.msra.mxu0 0.0
    %689 = vmatpush.msra.mxu0 0.0
    %690 = vmatpush.msra.mxu0 0.0
    %691 = vmatpush.msra.mxu0 0.0
    %692 = vmatpush.msra.mxu0 0.0
    %693 = vmatpush.msra.mxu0 0.0
    %694 = vmatpush.msra.mxu0 0.0
    %695 = vmatpush.msra.mxu0 0.0
    %696 = vmatpush.msra.mxu0 0.0
    %697 = vmatpush.msra.mxu0 %v618
    %698 = vmatpush.msra.mxu0 %v615
    %699 = vmatmul.f32.gmra.mxu0 %v678
    %v700 = vpop.f32.mrf.mxu0
    %v701 = vadd.f32 0.0, %v700
    %702 = vmatmul.f32.gmra.mxu0 %v681
    %v703 = vpop.f32.mrf.mxu0
    %v704 = vadd.f32 0.0, %v703
    %705 = vdwg.mxu0
    %v706 = vadd.f32 %v670, %v701
    %v707 = vadd.f32 %v673, %v704
    %v708 = vsel %vm622, %v706, 0.0
    %v709 = vsel %vm622, %v707, 0.0
    %v710 = vadd.f32 %v708, %v709
    %v711 = vrot.slane %v710, 4
    %v712 = vadd.f32 %v710, %v711
    %v713 = vrot.slane %v712, 2
    %v714 = vadd.f32 %v712, %v713
    %v715 = vrot.slane %v714, 1
    %v716 = vadd.f32 %v714, %v715
    %v717 = vmul.f32 %v716, 0.0625
    %v718 = vmul.f32 %v706, %v706
    %v719 = vmul.f32 %v707, %v707
    %v720 = vsel %vm622, %v718, 0.0
    %v721 = vsel %vm622, %v719, 0.0
    %v722 = vadd.f32 %v720, %v721
    %v723 = vrot.slane %v722, 4
    %v724 = vadd.f32 %v722, %v723
    %v725 = vrot.slane %v724, 2
    %v726 = vadd.f32 %v724, %v725
    %v727 = vrot.slane %v726, 1
    %v728 = vadd.f32 %v726, %v727
    %v729 = vmul.f32 %v728, 0.0625
    %v730 = vmul.f32 %v717, %v717
    %v731 = vsub.f32 %v729, %v730
    %v732 = vmax.f32 %v731, 0.0
    %v733 = vld [vmem:[#allocation2 + $0xb8] sm:$0x1]
    %v734 = vadd.f32 %v732, 1e-05
    %v735 = vrsqrt.pop %v734
    %v736 = vmul.f32 %v735, %v734
    %v737 = vmul.f32 %v736, %v735
    %v738 = vmul.f32 0.5, %v737
    %v739 = vsub.f32 1.5, %v738
    %v740 = vmul.f32 %v735, %v739
    %vm741 = vweird.f32 %v734
    %vm742 = vweird.f32 %v735
    %vm743 = vmor %vm741, %vm742
    %v744 = vsel %vm743, %v735, %v740
    %v745 = vmul.f32 %v733, %v744
    %v746 = vld [vmem:[#allocation2 + $0xc0] sm:$0x1]
    %v747 = vmul.f32 %v717, %v745
    %v748 = vsub.f32 %v746, %v747
    %v749 = vperm.slane %v745, 0
    %v750 = vmul.f32 %v706, %v749
    %v751 = vmul.f32 %v707, %v749
    %v752 = vperm.slane %v748, 0
    %v753 = vadd.f32 %v750, %v752
    %v754 = vadd.f32 %v751, %v752
    %v755 = vmax.f32 %v753, 0.0
    %v756 = vmax.f32 %v754, 0.0
    %v757 = vld [vmem:[#allocation2 + $0xe8] sm:$0xff]
    %v758 = vld [vmem:[#allocation2 + $0xf0] sm:$0xff]
    %v759 = vld [vmem:[#allocation2 + $0xf8] sm:$0xff]
    %v760 = vld [vmem:[#allocation2 + $0x100] sm:$0xff]
    %v762 = vsel %vm622, %v755, 0
    %v765 = vsel %vm622, %v756, 0
    %767 = vmatpush.msra.mxu0 0.0
    %768 = vmatpush.msra.mxu0 0.0
    %769 = vmatpush.msra.mxu0 0.0
    %770 = vmatpush.msra.mxu0 0.0
    %771 = vmatpush.msra.mxu0 0.0
    %772 = vmatpush.msra.mxu0 0.0
    %773 = vmatpush.msra.mxu0 0.0
    %774 = vmatpush.msra.mxu0 0.0
    %775 = vmatpush.msra.mxu0 0.0
    %776 = vmatpush.msra.mxu0 0.0
    %777 = vmatpush.msra.mxu0 0.0
    %778 = vmatpush.msra.mxu0 0.0
    %779 = vmatpush.msra.mxu0 0.0
    %780 = vmatpush.msra.mxu0 0.0
    %781 = vmatpush.msra.mxu0 %v760
    %782 = vmatpush.msra.mxu0 %v759
    %783 = vmatmul.f32.gmra.mxu0 %v762
    %v784 = vpop.f32.mrf.mxu0
    %v785 = vadd.f32 0.0, %v784
    %786 = vmatmul.f32.gmra.mxu0 %v765
    %v787 = vpop.f32.mrf.mxu0
    %v788 = vadd.f32 0.0, %v787
    %789 = vdwg.mxu0
    %v790 = vld [vmem:[#allocation2 + $0x108] sm:$0xff]
    %v791 = vld [vmem:[#allocation2 + $0x110] sm:$0xff]
    %792 = vmatpush.msra.mxu0 0.0
    %793 = vmatpush.msra.mxu0 0.0
    %794 = vmatpush.msra.mxu0 0.0
    %795 = vmatpush.msra.mxu0 0.0
    %796 = vmatpush.msra.mxu0 0.0
    %797 = vmatpush.msra.mxu0 0.0
    %798 = vmatpush.msra.mxu0 0.0
    %799 = vmatpush.msra.mxu0 0.0
    %800 = vmatpush.msra.mxu0 0.0
    %801 = vmatpush.msra.mxu0 0.0
    %802 = vmatpush.msra.mxu0 0.0
    %803 = vmatpush.msra.mxu0 0.0
    %804 = vmatpush.msra.mxu0 0.0
    %805 = vmatpush.msra.mxu0 0.0
    %806 = vmatpush.msra.mxu0 %v791
    %807 = vmatpush.msra.mxu0 %v790
    %808 = vmatmul.f32.gmra.mxu0 %v762
    %v809 = vpop.f32.mrf.mxu0
    %v810 = vadd.f32 0.0, %v809
    %811 = vmatmul.f32.gmra.mxu0 %v765
    %v812 = vpop.f32.mrf.mxu0
    %v813 = vadd.f32 0.0, %v812
    %814 = vdwg.mxu0
    %815 = vmatpush.msra.mxu0 0.0
    %816 = vmatpush.msra.mxu0 0.0
    %817 = vmatpush.msra.mxu0 0.0
    %818 = vmatpush.msra.mxu0 0.0
    %819 = vmatpush.msra.mxu0 0.0
    %820 = vmatpush.msra.mxu0 0.0
    %821 = vmatpush.msra.mxu0 0.0
    %822 = vmatpush.msra.mxu0 0.0
    %823 = vmatpush.msra.mxu0 0.0
    %824 = vmatpush.msra.mxu0 0.0
    %825 = vmatpush.msra.mxu0 0.0
    %826 = vmatpush.msra.mxu0 0.0
    %827 = vmatpush.msra.mxu0 0.0
    %828 = vmatpush.msra.mxu0 0.0
    %829 = vmatpush.msra.mxu0 %v788
    %830 = vmatpush.msra.mxu0 %v785
    %831 = vmatmul.f32.gmra.mxu0 %v624
    %v832 = vpop.f32.mrf.mxu0
    %v833 = vadd.f32 0.0, %v832
    %834 = vmatmul.f32.gmra.mxu0 %v627
    %v835 = vpop.f32.mrf.mxu0
    %v836 = vadd.f32 0.0, %v835
    %837 = vdwg.mxu0
    %838 = vmatpush.msra.mxu0 0.0
    %839 = vmatpush.msra.mxu0 0.0
    %840 = vmatpush.msra.mxu0 0.0
    %841 = vmatpush.msra.mxu0 0.0
    %842 = vmatpush.msra.mxu0 0.0
    %843 = vmatpush.msra.mxu0 0.0
    %844 = vmatpush.msra.mxu0 0.0
    %845 = vmatpush.msra.mxu0 0.0
    %846 = vmatpush.msra.mxu0 0.0
    %847 = vmatpush.msra.mxu0 0.0
    %848 = vmatpush.msra.mxu0 0.0
    %849 = vmatpush.msra.mxu0 0.0
    %850 = vmatpush.msra.mxu0 0.0
    %851 = vmatpush.msra.mxu0 0.0
    %852 = vmatpush.msra.mxu0 %v758
    %853 = vmatpush.msra.mxu0 %v757
    %854 = vmatmul.f32.gmra.mxu0 %v762
    %v855 = vpop.f32.mrf.mxu0
    %v856 = vadd.f32 %v833, %v855
    %857 = vmatmul.f32.gmra.mxu0 %v765
    %v858 = vpop.f32.mrf.mxu0
    %v859 = vadd.f32 %v836, %v858
    %860 = vdwg.mxu0
    %861 = vmatpush.msra.mxu0 0.0
    %862 = vmatpush.msra.mxu0 0.0
    %863 = vmatpush.msra.mxu0 0.0
    %864 = vmatpush.msra.mxu0 0.0
    %865 = vmatpush.msra.mxu0 0.0
    %866 = vmatpush.msra.mxu0 0.0
    %867 = vmatpush.msra.mxu0 0.0
    %868 = vmatpush.msra.mxu0 0.0
    %869 = vmatpush.msra.mxu0 0.0
    %870 = vmatpush.msra.mxu0 0.0
    %871 = vmatpush.msra.mxu0 0.0
    %872 = vmatpush.msra.mxu0 0.0
    %873 = vmatpush.msra.mxu0 0.0
    %874 = vmatpush.msra.mxu0 0.0
    %875 = vmatpush.msra.mxu0 %v813
    %876 = vmatpush.msra.mxu0 %v810
    %877 = vmatmul.f32.gmra.mxu0 %v678
    %v878 = vpop.f32.mrf.mxu0
    %v879 = vadd.f32 0.0, %v878
    %880 = vmatmul.f32.gmra.mxu0 %v681
    %v881 = vpop.f32.mrf.mxu0
    %v882 = vadd.f32 0.0, %v881
    %883 = vdwg.mxu0
    %v884 = vadd.f32 %v856, %v879
    %v885 = vadd.f32 %v859, %v882
    %v886 = vsel %vm622, %v884, 0.0
    %v887 = vsel %vm622, %v885, 0.0
    %v888 = vadd.f32 %v886, %v887
    %v889 = vrot.slane %v888, 4
    %v890 = vadd.f32 %v888, %v889
    %v891 = vrot.slane %v890, 2
    %v892 = vadd.f32 %v890, %v891
    %v893 = vrot.slane %v892, 1
    %v894 = vadd.f32 %v892, %v893
    %v895 = vmul.f32 %v894, 0.0625
    %v896 = vmul.f32 %v884, %v884
    %v897 = vmul.f32 %v885, %v885
    %v898 = vsel %vm622, %v896, 0.0
    %v899 = vsel %vm622, %v897, 0.0
    %v900 = vadd.f32 %v898, %v899
    %v901 = vrot.slane %v900, 4
    %v902 = vadd.f32 %v900, %v901
    %v903 = vrot.slane %v902, 2
    %v904 = vadd.f32 %v902, %v903
    %v905 = vrot.slane %v904, 1
    %v906 = vadd.f32 %v904, %v905
    %v907 = vmul.f32 %v906, 0.0625
    %v908 = vmul.f32 %v895, %v895
    %v909 = vsub.f32 %v907, %v908
    %v910 = vmax.f32 %v909, 0.0
    %v911 = vld [vmem:[#allocation2 + $0x118] sm:$0x1]
    %v912 = vadd.f32 %v910, 1e-05
    %v913 = vrsqrt.pop %v912
    %v914 = vmul.f32 %v913, %v912
    %v915 = vmul.f32 %v914, %v913
    %v916 = vmul.f32 0.5, %v915
    %v917 = vsub.f32 1.5, %v916
    %v918 = vmul.f32 %v913, %v917
    %vm919 = vweird.f32 %v912
    %vm920 = vweird.f32 %v913
    %vm921 = vmor %vm919, %vm920
    %v922 = vsel %vm921, %v913, %v918
    %v923 = vmul.f32 %v911, %v922
    %v924 = vld [vmem:[#allocation2 + $0x120] sm:$0x1]
    %v925 = vmul.f32 %v895, %v923
    %v926 = vsub.f32 %v924, %v925
    %v927 = vperm.slane %v923, 0
    %v928 = vmul.f32 %v884, %v927
    %v929 = vmul.f32 %v885, %v927
    %v930 = vperm.slane %v926, 0
    %v931 = vadd.f32 %v928, %v930
    %v932 = vadd.f32 %v929, %v930
    %v933 = vmax.f32 %v931, 0.0
    %v934 = vmax.f32 %v932, 0.0
    %v935 = vld [vmem:[#allocation2 + $0x128] sm:$0xff]
    %v937 = vsel %vm622, %v935, 0
    %939 = vmatpush.msra.mxu0 0.0
    %940 = vmatpush.msra.mxu0 0.0
    %941 = vmatpush.msra.mxu0 0.0
    %942 = vmatpush.msra.mxu0 0.0
    %943 = vmatpush.msra.mxu0 0.0
    %944 = vmatpush.msra.mxu0 0.0
    %945 = vmatpush.msra.mxu0 0.0
    %946 = vmatpush.msra.mxu0 0.0
    %947 = vmatpush.msra.mxu0 0.0
    %948 = vmatpush.msra.mxu0 0.0
    %949 = vmatpush.msra.mxu0 0.0
    %950 = vmatpush.msra.mxu0 0.0
    %951 = vmatpush.msra.mxu0 0.0
    %952 = vmatpush.msra.mxu0 0.0
    %953 = vmatpush.msra.mxu0 %v934
    %954 = vmatpush.msra.mxu0 %v933
    %955 = vmatmul.f32.gmra.mxu0 %v937
    %v956 = vpop.f32.mrf.mxu0
    %v957 = vadd.f32 0.0, %v956
    %958 = vdwg.mxu0
    %v959 = vld [vmem:[#allocation2 + $0x130] sm:$0xff]
    %v960 = vld [vmem:[#allocation2 + $0x138] sm:$0xff]
    %v961 = vld [vmem:[#allocation2 + $0x140] sm:$0xff]
    %v962 = vld [vmem:[#allocation2 + $0x148] sm:$0xff]
    %v964 = vsel %vm622, %v957, 0
    %966 = vmatpush.msra.mxu0 0.0
    %967 = vmatpush.msra.mxu0 0.0
    %968 = vmatpush.msra.mxu0 0.0
    %969 = vmatpush.msra.mxu0 0.0
    %970 = vmatpush.msra.mxu0 0.0
    %971 = vmatpush.msra.mxu0 0.0
    %972 = vmatpush.msra.mxu0 0.0
    %973 = vmatpush.msra.mxu0 0.0
    %974 = vmatpush.msra.mxu0 0.0
    %975 = vmatpush.msra.mxu0 0.0
    %976 = vmatpush.msra.mxu0 0.0
    %977 = vmatpush.msra.mxu0 0.0
    %978 = vmatpush.msra.mxu0 0.0
    %979 = vmatpush.msra.mxu0 0.0
    %980 = vmatpush.msra.mxu0 %v962
    %981 = vmatpush.msra.mxu0 %v961
    %982 = vmatmul.f32.gmra.mxu0 %v964
    %v983 = vpop.f32.mrf.mxu0
    %v984 = vadd.f32 0.0, %v983
    %985 = vdwg.mxu0
    %v986 = vld [vmem:[#allocation2 + $0x150] sm:$0xff]
    %v987 = vld [vmem:[#allocation2 + $0x158] sm:$0xff]
    %988 = vmatpush.msra.mxu0 0.0
    %989 = vmatpush.msra.mxu0 0.0
    %990 = vmatpush.msra.mxu0 0.0
    %991 = vmatpush.msra.mxu0 0.0
    %992 = vmatpush.msra.mxu0 0.0
    %993 = vmatpush.msra.mxu0 0.0
    %994 = vmatpush.msra.mxu0 0.0
    %995 = vmatpush.msra.mxu0 0.0
    %996 = vmatpush.msra.mxu0 0.0
    %997 = vmatpush.msra.mxu0 0.0
    %998 = vmatpush.msra.mxu0 0.0
    %999 = vmatpush.msra.mxu0 0.0
    %1000 = vmatpush.msra.mxu0 0.0
    %1001 = vmatpush.msra.mxu0 0.0
    %1002 = vmatpush.msra.mxu0 %v987
    %1003 = vmatpush.msra.mxu0 %v986
    %1004 = vmatmul.f32.gmra.mxu0 %v964
    %v1005 = vpop.f32.mrf.mxu0
    %v1006 = vadd.f32 0.0, %v1005
    %1007 = vdwg.mxu0
    %v1008 = vld [vmem:[#allocation2 + $0x170] sm:$0xff]
    %v1010 = vsel %vm239, %v1008, 0
    %1012 = vmatpush.msra.mxu0 0.0
    %1013 = vmatpush.msra.mxu0 0.0
    %1014 = vmatpush.msra.mxu0 0.0
    %1015 = vmatpush.msra.mxu0 0.0
    %1016 = vmatpush.msra.mxu0 0.0
    %1017 = vmatpush.msra.mxu0 0.0
    %1018 = vmatpush.msra.mxu0 0.0
    %1019 = vmatpush.msra.mxu0 0.0
    %1020 = vmatpush.msra.mxu0 0.0
    %1021 = vmatpush.msra.mxu0 0.0
    %1022 = vmatpush.msra.mxu0 0.0
    %1023 = vmatpush.msra.mxu0 0.0
    %1024 = vmatpush.msra.mxu0 0.0
    %1025 = vmatpush.msra.mxu0 0.0
    %1026 = vmatpush.msra.mxu0 0.0
    %1027 = vmatpush.msra.mxu0 %v984
    %1028 = vmatmul.f32.gmra.mxu0 %v1010
    %v1029 = vpop.f32.mrf.mxu0
    %v1030 = vadd.f32 0.0, %v1029
    %1031 = vdwg.mxu0
    %1032 = vmatpush.msra.mxu0 0.0
    %1033 = vmatpush.msra.mxu0 0.0
    %1034 = vmatpush.msra.mxu0 0.0
    %1035 = vmatpush.msra.mxu0 0.0
    %1036 = vmatpush.msra.mxu0 0.0
    %1037 = vmatpush.msra.mxu0 0.0
    %1038 = vmatpush.msra.mxu0 0.0
    %1039 = vmatpush.msra.mxu0 0.0
    %1040 = vmatpush.msra.mxu0 0.0
    %1041 = vmatpush.msra.mxu0 0.0
    %1042 = vmatpush.msra.mxu0 0.0
    %1043 = vmatpush.msra.mxu0 0.0
    %1044 = vmatpush.msra.mxu0 0.0
    %1045 = vmatpush.msra.mxu0 0.0
    %1046 = vmatpush.msra.mxu0 %v960
    %1047 = vmatpush.msra.mxu0 %v959
    %1048 = vmatmul.f32.gmra.mxu0 %v964
    %v1049 = vpop.f32.mrf.mxu0
    %v1050 = vadd.f32 %v1030, %v1049
    %1051 = vdwg.mxu0
    %v1052 = vld [vmem:[#allocation2 + $0x178] sm:$0xff]
    %v1054 = vsel %vm239, %v1052, 0
    %1056 = vmatpush.msra.mxu0 0.0
    %1057 = vmatpush.msra.mxu0 0.0
    %1058 = vmatpush.msra.mxu0 0.0
    %1059 = vmatpush.msra.mxu0 0.0
    %1060 = vmatpush.msra.mxu0 0.0
    %1061 = vmatpush.msra.mxu0 0.0
    %1062 = vmatpush.msra.mxu0 0.0
    %1063 = vmatpush.msra.mxu0 0.0
    %1064 = vmatpush.msra.mxu0 0.0
    %1065 = vmatpush.msra.mxu0 0.0
    %1066 = vmatpush.msra.mxu0 0.0
    %1067 = vmatpush.msra.mxu0 0.0
    %1068 = vmatpush.msra.mxu0 0.0
    %1069 = vmatpush.msra.mxu0 0.0
    %1070 = vmatpush.msra.mxu0 0.0
    %1071 = vmatpush.msra.mxu0 %v1006
    %1072 = vmatmul.f32.gmra.mxu0 %v1054
    %v1073 = vpop.f32.mrf.mxu0
    %v1074 = vadd.f32 0.0, %v1073
    %1075 = vdwg.mxu0
    %v1076 = vadd.f32 %v1050, %v1074
    %v1077 = vsel %vm116, %v1076, 0.0
    %v1078 = vrot.slane %v1077, 4
    %v1079 = vadd.f32 %v1077, %v1078
    %v1080 = vrot.slane %v1079, 2
    %v1081 = vadd.f32 %v1079, %v1080
    %v1082 = vrot.slane %v1081, 1
    %v1083 = vadd.f32 %v1081, %v1082
    %v1084 = vmul.f32 %v1083, 0.125
    %v1085 = vmul.f32 %v1076, %v1076
    %v1086 = vsel %vm116, %v1085, 0.0
    %v1087 = vrot.slane %v1086, 4
    %v1088 = vadd.f32 %v1086, %v1087
    %v1089 = vrot.slane %v1088, 2
    %v1090 = vadd.f32 %v1088, %v1089
    %v1091 = vrot.slane %v1090, 1
    %v1092 = vadd.f32 %v1090, %v1091
    %v1093 = vmul.f32 %v1092, 0.125
    %v1094 = vmul.f32 %v1084, %v1084
    %v1095 = vsub.f32 %v1093, %v1094
    %v1096 = vmax.f32 %v1095, 0.0
    %v1097 = vld [vmem:[#allocation2 + $0x160] sm:$0x1]
    %v1098 = vadd.f32 %v1096, 1e-05
    %v1099 = vrsqrt.pop %v1098
    %v1100 = vmul.f32 %v1099, %v1098
    %v1101 = vmul.f32 %v1100, %v1099
    %v1102 = vmul.f32 0.5, %v1101
    %v1103 = vsub.f32 1.5, %v1102
    %v1104 = vmul.f32 %v1099, %v1103
    %vm1105 = vweird.f32 %v1098
    %vm1106 = vweird.f32 %v1099
    %vm1107 = vmor %vm1105, %vm1106
    %v1108 = vsel %vm1107, %v1099, %v1104
    %v1109 = vmul.f32 %v1097, %v1108
    %v1110 = vld [vmem:[#allocation2 + $0x168] sm:$0x1]
    %v1111 = vmul.f32 %v1084, %v1109
    %v1112 = vsub.f32 %v1110, %v1111
    %v1113 = vperm.slane %v1109, 0
    %v1114 = vmul.f32 %v1076, %v1113
    %v1115 = vperm.slane %v1112, 0
    %v1116 = vadd.f32 %v1114, %v1115
    %v1117 = vmax.f32 %v1116, 0.0
    %v1118 = vld [vmem:[#allocation2 + $0x180] sm:$0xff]
    %v1119 = vld [vmem:[#allocation2 + $0x188] sm:$0xff]
    %v1120 = vld [vmem:[#allocation2 + $0x190] sm:$0xff]
    %v1121 = vld [vmem:[#allocation2 + $0x198] sm:$0xff]
    %v1122 = vld [vmem:[#allocation2 + $0x1a0] sm:$0xff]
    %v1123 = vld [vmem:[#allocation2 + $0x1a8] sm:$0xff]
    %v1124 = vld [vmem:[#allocation2 + $0x1b0] sm:$0xff]
    %v1125 = vld [vmem:[#allocation2 + $0x1b8] sm:$0xff]
    %v1127 = vsel %vm116, %v1117, 0
    %1129 = vmatpush.msra.mxu0 0.0
    %1130 = vmatpush.msra.mxu0 0.0
    %1131 = vmatpush.msra.mxu0 0.0
    %1132 = vmatpush.msra.mxu0 0.0
    %1133 = vmatpush.msra.mxu0 0.0
    %1134 = vmatpush.msra.mxu0 0.0
    %1135 = vmatpush.msra.mxu0 0.0
    %1136 = vmatpush.msra.mxu0 0.0
    %1137 = vmatpush.msra.mxu0 0.0
    %1138 = vmatpush.msra.mxu0 0.0
    %1139 = vmatpush.msra.mxu0 0.0
    %1140 = vmatpush.msra.mxu0 0.0
    %1141 = vmatpush.msra.mxu0 %v1125
    %1142 = vmatpush.msra.mxu0 %v1124
    %1143 = vmatpush.msra.mxu0 %v1123
    %1144 = vmatpush.msra.mxu0 %v1122
    %1145 = vmatmul.f32.gmra.mxu0 %v1127
    %v1146 = vpop.f32.mrf.mxu0
    %v1147 = vadd.f32 0.0, %v1146
    %1148 = vdwg.mxu0
    %v1149 = vld [vmem:[#allocation2 + $0x1c0] sm:$0xff]
    %v1150 = vld [vmem:[#allocation2 + $0x1c8] sm:$0xff]
    %v1151 = vld [vmem:[#allocation2 + $0x1d0] sm:$0xff]
    %v1152 = vld [vmem:[#allocation2 + $0x1d8] sm:$0xff]
    %1153 = vmatpush.msra.mxu0 0.0
    %1154 = vmatpush.msra.mxu0 0.0
    %1155 = vmatpush.msra.mxu0 0.0
    %1156 = vmatpush.msra.mxu0 0.0
    %1157 = vmatpush.msra.mxu0 0.0
    %1158 = vmatpush.msra.mxu0 0.0
    %1159 = vmatpush.msra.mxu0 0.0
    %1160 = vmatpush.msra.mxu0 0.0
    %1161 = vmatpush.msra.mxu0 0.0
    %1162 = vmatpush.msra.mxu0 0.0
    %1163 = vmatpush.msra.mxu0 0.0
    %1164 = vmatpush.msra.mxu0 0.0
    %1165 = vmatpush.msra.mxu0 %v1152
    %1166 = vmatpush.msra.mxu0 %v1151
    %1167 = vmatpush.msra.mxu0 %v1150
    %1168 = vmatpush.msra.mxu0 %v1149
    %1169 = vmatmul.f32.gmra.mxu0 %v1127
    %v1170 = vpop.f32.mrf.mxu0
    %v1171 = vadd.f32 0.0, %v1170
    %1172 = vdwg.mxu0
    %1173 = vmatpush.msra.mxu0 0.0
    %1174 = vmatpush.msra.mxu0 0.0
    %1175 = vmatpush.msra.mxu0 0.0
    %1176 = vmatpush.msra.mxu0 0.0
    %1177 = vmatpush.msra.mxu0 0.0
    %1178 = vmatpush.msra.mxu0 0.0
    %1179 = vmatpush.msra.mxu0 0.0
    %1180 = vmatpush.msra.mxu0 0.0
    %1181 = vmatpush.msra.mxu0 0.0
    %1182 = vmatpush.msra.mxu0 0.0
    %1183 = vmatpush.msra.mxu0 0.0
    %1184 = vmatpush.msra.mxu0 0.0
    %1185 = vmatpush.msra.mxu0 0.0
    %1186 = vmatpush.msra.mxu0 0.0
    %1187 = vmatpush.msra.mxu0 0.0
    %1188 = vmatpush.msra.mxu0 %v1147
    %1189 = vmatmul.f32.gmra.mxu0 %v1010
    %v1190 = vpop.f32.mrf.mxu0
    %v1191 = vadd.f32 0.0, %v1190
    %1192 = vdwg.mxu0
    %1193 = vmatpush.msra.mxu0 0.0
    %1194 = vmatpush.msra.mxu0 0.0
    %1195 = vmatpush.msra.mxu0 0.0
    %1196 = vmatpush.msra.mxu0 0.0
    %1197 = vmatpush.msra.mxu0 0.0
    %1198 = vmatpush.msra.mxu0 0.0
    %1199 = vmatpush.msra.mxu0 0.0
    %1200 = vmatpush.msra.mxu0 0.0
    %1201 = vmatpush.msra.mxu0 0.0
    %1202 = vmatpush.msra.mxu0 0.0
    %1203 = vmatpush.msra.mxu0 0.0
    %1204 = vmatpush.msra.mxu0 0.0
    %1205 = vmatpush.msra.mxu0 %v1121
    %1206 = vmatpush.msra.mxu0 %v1120
    %1207 = vmatpush.msra.mxu0 %v1119
    %1208 = vmatpush.msra.mxu0 %v1118
    %1209 = vmatmul.f32.gmra.mxu0 %v1127
    %v1210 = vpop.f32.mrf.mxu0
    %v1211 = vadd.f32 %v1191, %v1210
    %1212 = vdwg.mxu0
    %1213 = vmatpush.msra.mxu0 0.0
    %1214 = vmatpush.msra.mxu0 0.0
    %1215 = vmatpush.msra.mxu0 0.0
    %1216 = vmatpush.msra.mxu0 0.0
    %1217 = vmatpush.msra.mxu0 0.0
    %1218 = vmatpush.msra.mxu0 0.0
    %1219 = vmatpush.msra.mxu0 0.0
    %1220 = vmatpush.msra.mxu0 0.0
    %1221 = vmatpush.msra.mxu0 0.0
    %1222 = vmatpush.msra.mxu0 0.0
    %1223 = vmatpush.msra.mxu0 0.0
    %1224 = vmatpush.msra.mxu0 0.0
    %1225 = vmatpush.msra.mxu0 0.0
    %1226 = vmatpush.msra.mxu0 0.0
    %1227 = vmatpush.msra.mxu0 0.0
    %1228 = vmatpush.msra.mxu0 %v1171
    %1229 = vmatmul.f32.gmra.mxu0 %v1054
    %v1230 = vpop.f32.mrf.mxu0
    %v1231 = vadd.f32 0.0, %v1230
    %1232 = vdwg.mxu0
    %v1233 = vadd.f32 %v1211, %v1231
    %v1234 = vsel %vm116, %v1233, 0.0
    %v1235 = vrot.slane %v1234, 4
    %v1236 = vadd.f32 %v1234, %v1235
    %v1237 = vrot.slane %v1236, 2
    %v1238 = vadd.f32 %v1236, %v1237
    %v1239 = vrot.slane %v1238, 1
    %v1240 = vadd.f32 %v1238, %v1239
    %v1241 = vmul.f32 %v1240, 0.125
    %v1242 = vmul.f32 %v1233, %v1233
    %v1243 = vsel %vm116, %v1242, 0.0
    %v1244 = vrot.slane %v1243, 4
    %v1245 = vadd.f32 %v1243, %v1244
    %v1246 = vrot.slane %v1245, 2
    %v1247 = vadd.f32 %v1245, %v1246
    %v1248 = vrot.slane %v1247, 1
    %v1249 = vadd.f32 %v1247, %v1248
    %v1250 = vmul.f32 %v1249, 0.125
    %v1251 = vmul.f32 %v1241, %v1241
    %v1252 = vsub.f32 %v1250, %v1251
    %v1253 = vmax.f32 %v1252, 0.0
    %v1254 = vld [vmem:[#allocation2 + $0x1e0] sm:$0x1]
    %v1255 = vadd.f32 %v1253, 1e-05
    %v1256 = vrsqrt.pop %v1255
    %v1257 = vmul.f32 %v1256, %v1255
    %v1258 = vmul.f32 %v1257, %v1256
    %v1259 = vmul.f32 0.5, %v1258
    %v1260 = vsub.f32 1.5, %v1259
    %v1261 = vmul.f32 %v1256, %v1260
    %vm1262 = vweird.f32 %v1255
    %vm1263 = vweird.f32 %v1256
    %vm1264 = vmor %vm1262, %vm1263
    %v1265 = vsel %vm1264, %v1256, %v1261
    %v1266 = vmul.f32 %v1254, %v1265
    %v1267 = vld [vmem:[#allocation2 + $0x1e8] sm:$0x1]
    %v1268 = vmul.f32 %v1241, %v1266
    %v1269 = vsub.f32 %v1267, %v1268
    %v1270 = vperm.slane %v1266, 0
    %v1271 = vmul.f32 %v1233, %v1270
    %v1272 = vperm.slane %v1269, 0
    %v1273 = vadd.f32 %v1271, %v1272
    %v1274 = vmax.f32 %v1273, 0.0
    %v1275 = vld [vmem:[#allocation2 + $0x1f0] sm:$0xf]
    %v1277 = vsel %vm239, %v1275, 0
    %1279 = vmatpush.msra.mxu0 0.0
    %1280 = vmatpush.msra.mxu0 0.0
    %1281 = vmatpush.msra.mxu0 0.0
    %1282 = vmatpush.msra.mxu0 0.0
    %1283 = vmatpush.msra.mxu0 0.0
    %1284 = vmatpush.msra.mxu0 0.0
    %1285 = vmatpush.msra.mxu0 0.0
    %1286 = vmatpush.msra.mxu0 0.0
    %1287 = vmatpush.msra.mxu0 0.0
    %1288 = vmatpush.msra.mxu0 0.0
    %1289 = vmatpush.msra.mxu0 0.0
    %1290 = vmatpush.msra.mxu0 0.0
    %1291 = vmatpush.msra.mxu0 0.0
    %1292 = vmatpush.msra.mxu0 0.0
    %1293 = vmatpush.msra.mxu0 0.0
    %1294 = vmatpush.msra.mxu0 %v1274
    %1295 = vmatmul.f32.gmra.mxu0 %v1277
    %v1296 = vpop.f32.mrf.mxu0
    %v1297 = vadd.f32 0.0, %v1296
    %1298 = vdwg.mxu0
    %v1299 = vld [vmem:[#allocation2 + $0x1f8] sm:$0xff]
    %v1300 = vld [vmem:[#allocation2 + $0x200] sm:$0xff]
    %v1301 = vld [vmem:[#allocation2 + $0x208] sm:$0xff]
    %v1302 = vld [vmem:[#allocation2 + $0x210] sm:$0xff]
    %v1303 = vld [vmem:[#allocation2 + $0x218] sm:$0xff]
    %v1304 = vld [vmem:[#allocation2 + $0x220] sm:$0xff]
    %v1305 = vld [vmem:[#allocation2 + $0x228] sm:$0xff]
    %v1306 = vld [vmem:[#allocation2 + $0x230] sm:$0xff]
    %v1308 = vsel %vm116, %v1297, 0
    %1310 = vmatpush.msra.mxu0 0.0
    %1311 = vmatpush.msra.mxu0 0.0
    %1312 = vmatpush.msra.mxu0 0.0
    %1313 = vmatpush.msra.mxu0 0.0
    %1314 = vmatpush.msra.mxu0 0.0
    %1315 = vmatpush.msra.mxu0 0.0
    %1316 = vmatpush.msra.mxu0 0.0
    %1317 = vmatpush.msra.mxu0 0.0
    %1318 = vmatpush.msra.mxu0 0.0
    %1319 = vmatpush.msra.mxu0 0.0
    %1320 = vmatpush.msra.mxu0 0.0
    %1321 = vmatpush.msra.mxu0 0.0
    %1322 = vmatpush.msra.mxu0 %v1306
    %1323 = vmatpush.msra.mxu0 %v1305
    %1324 = vmatpush.msra.mxu0 %v1304
    %1325 = vmatpush.msra.mxu0 %v1303
    %1326 = vmatmul.f32.gmra.mxu0 %v1308
    %v1327 = vpop.f32.mrf.mxu0
    %v1328 = vadd.f32 0.0, %v1327
    %1329 = vdwg.mxu0
    %v1330 = vld [vmem:[#allocation2 + $0x238] sm:$0xff]
    %v1331 = vld [vmem:[#allocation2 + $0x240] sm:$0xff]
    %v1332 = vld [vmem:[#allocation2 + $0x248] sm:$0xff]
    %v1333 = vld [vmem:[#allocation2 + $0x250] sm:$0xff]
    %1334 = vmatpush.msra.mxu0 0.0
    %1335 = vmatpush.msra.mxu0 0.0
    %1336 = vmatpush.msra.mxu0 0.0
    %1337 = vmatpush.msra.mxu0 0.0
    %1338 = vmatpush.msra.mxu0 0.0
    %1339 = vmatpush.msra.mxu0 0.0
    %1340 = vmatpush.msra.mxu0 0.0
    %1341 = vmatpush.msra.mxu0 0.0
    %1342 = vmatpush.msra.mxu0 0.0
    %1343 = vmatpush.msra.mxu0 0.0
    %1344 = vmatpush.msra.mxu0 0.0
    %1345 = vmatpush.msra.mxu0 0.0
    %1346 = vmatpush.msra.mxu0 %v1333
    %1347 = vmatpush.msra.mxu0 %v1332
    %1348 = vmatpush.msra.mxu0 %v1331
    %1349 = vmatpush.msra.mxu0 %v1330
    %1350 = vmatmul.f32.gmra.mxu0 %v1308
    %v1351 = vpop.f32.mrf.mxu0
    %v1352 = vadd.f32 0.0, %v1351
    %1353 = vdwg.mxu0
    %v1354 = vld [vmem:[#allocation2 + $0x268] sm:$0xf]
    %vm1355 = vcmask 31744
    %v1357 = vsel %vm1355, %v1354, 0
    %vm1359 = vcmask 1043456
    %v1361 = vsel %vm1359, %v1328, 0
    %1363 = vmatpush.msra.mxu0 0.0
    %1364 = vmatpush.msra.mxu0 0.0
    %1365 = vmatpush.msra.mxu0 0.0
    %1366 = vmatpush.msra.mxu0 0.0
    %1367 = vmatpush.msra.mxu0 0.0
    %1368 = vmatpush.msra.mxu0 0.0
    %1369 = vmatpush.msra.mxu0 0.0
    %1370 = vmatpush.msra.mxu0 0.0
    %1371 = vmatpush.msra.mxu0 0.0
    %1372 = vmatpush.msra.mxu0 0.0
    %1373 = vmatpush.msra.mxu0 0.0
    %1374 = vmatpush.msra.mxu0 0.0
    %1375 = vmatpush.msra.mxu0 0.0
    %1376 = vmatpush.msra.mxu0 0.0
    %1377 = vmatpush.msra.mxu0 0.0
    %1378 = vmatpush.msra.mxu0 %v1361
    %1379 = vmatmul.f32.gmra.mxu0 %v1357
    %v1380 = vpop.f32.mrf.mxu0
    %v1381 = vadd.f32 0.0, %v1380
    %1382 = vdwg.mxu0
    %1383 = vmatpush.msra.mxu0 0.0
    %1384 = vmatpush.msra.mxu0 0.0
    %1385 = vmatpush.msra.mxu0 0.0
    %1386 = vmatpush.msra.mxu0 0.0
    %1387 = vmatpush.msra.mxu0 0.0
    %1388 = vmatpush.msra.mxu0 0.0
    %1389 = vmatpush.msra.mxu0 0.0
    %1390 = vmatpush.msra.mxu0 0.0
    %1391 = vmatpush.msra.mxu0 0.0
    %1392 = vmatpush.msra.mxu0 0.0
    %1393 = vmatpush.msra.mxu0 0.0
    %1394 = vmatpush.msra.mxu0 0.0
    %1395 = vmatpush.msra.mxu0 %v1302
    %1396 = vmatpush.msra.mxu0 %v1301
    %1397 = vmatpush.msra.mxu0 %v1300
    %1398 = vmatpush.msra.mxu0 %v1299
    %1399 = vmatmul.f32.gmra.mxu0 %v1308
    %v1400 = vpop.f32.mrf.mxu0
    %v1401 = vadd.f32 %v1381, %v1400
    %1402 = vdwg.mxu0
    %v1403 = vld [vmem:[#allocation2 + $0x270] sm:$0xf]
    %v1405 = vsel %vm1355, %v1403, 0
    %v1408 = vsel %vm1359, %v1352, 0
    %1410 = vmatpush.msra.mxu0 0.0
    %1411 = vmatpush.msra.mxu0 0.0
    %1412 = vmatpush.msra.mxu0 0.0
    %1413 = vmatpush.msra.mxu0 0.0
    %1414 = vmatpush.msra.mxu0 0.0
    %1415 = vmatpush.msra.mxu0 0.0
    %1416 = vmatpush.msra.mxu0 0.0
    %1417 = vmatpush.msra.mxu0 0.0
    %1418 = vmatpush.msra.mxu0 0.0
    %1419 = vmatpush.msra.mxu0 0.0
    %1420 = vmatpush.msra.mxu0 0.0
    %1421 = vmatpush.msra.mxu0 0.0
    %1422 = vmatpush.msra.mxu0 0.0
    %1423 = vmatpush.msra.mxu0 0.0
    %1424 = vmatpush.msra.mxu0 0.0
    %1425 = vmatpush.msra.mxu0 %v1408
    %1426 = vmatmul.f32.gmra.mxu0 %v1405
    %v1427 = vpop.f32.mrf.mxu0
    %v1428 = vadd.f32 0.0, %v1427
    %1429 = vdwg.mxu0
    %v1430 = vadd.f32 %v1401, %v1428
    %vm1431 = vcmask 519168
    %v1432 = vsel %vm1431, %v1430, 0.0
    %v1433 = vrot.slane %v1432, 4
    %v1434 = vadd.f32 %v1432, %v1433
    %v1435 = vrot.slane %v1434, 2
    %v1436 = vadd.f32 %v1434, %v1435
    %v1437 = vrot.slane %v1436, 1
    %v1438 = vadd.f32 %v1436, %v1437
    %v1439 = vmul.f32 %v1438, 0.25
    %v1440 = vmul.f32 %v1430, %v1430
    %v1441 = vsel %vm1431, %v1440, 0.0
    %v1442 = vrot.slane %v1441, 4
    %v1443 = vadd.f32 %v1441, %v1442
    %v1444 = vrot.slane %v1443, 2
    %v1445 = vadd.f32 %v1443, %v1444
    %v1446 = vrot.slane %v1445, 1
    %v1447 = vadd.f32 %v1445, %v1446
    %v1448 = vmul.f32 %v1447, 0.25
    %v1449 = vmul.f32 %v1439, %v1439
    %v1450 = vsub.f32 %v1448, %v1449
    %v1451 = vmax.f32 %v1450, 0.0
    %v1452 = vld [vmem:[#allocation2 + $0x258] sm:$0x1]
    %v1453 = vadd.f32 %v1451, 1e-05
    %v1454 = vrsqrt.pop %v1453
    %v1455 = vmul.f32 %v1454, %v1453
    %v1456 = vmul.f32 %v1455, %v1454
    %v1457 = vmul.f32 0.5, %v1456
    %v1458 = vsub.f32 1.5, %v1457
    %v1459 = vmul.f32 %v1454, %v1458
    %vm1460 = vweird.f32 %v1453
    %vm1461 = vweird.f32 %v1454
    %vm1462 = vmor %vm1460, %vm1461
    %v1463 = vsel %vm1462, %v1454, %v1459
    %v1464 = vmul.f32 %v1452, %v1463
    %v1465 = vld [vmem:[#allocation2 + $0x260] sm:$0x1]
    %v1466 = vmul.f32 %v1439, %v1464
    %v1467 = vsub.f32 %v1465, %v1466
    %v1468 = vperm.slane %v1464, 0
    %v1469 = vmul.f32 %v1430, %v1468
    %v1470 = vperm.slane %v1467, 0
    %v1471 = vadd.f32 %v1469, %v1470
    %v1472 = vmax.f32 %v1471, 0.0
    %v1473 = vld [vmem:[#allocation2 + $0x278] sm:$0xff]
    %v1474 = vld [vmem:[#allocation2 + $0x280] sm:$0xff]
    %v1475 = vld [vmem:[#allocation2 + $0x288] sm:$0xff]
    %v1476 = vld [vmem:[#allocation2 + $0x290] sm:$0xff]
    %v1477 = vld [vmem:[#allocation2 + $0x298] sm:$0xff]
    %v1478 = vld [vmem:[#allocation2 + $0x2a0] sm:$0xff]
    %v1479 = vld [vmem:[#allocation2 + $0x2a8] sm:$0xff]
    %v1480 = vld [vmem:[#allocation2 + $0x2b0] sm:$0xff]
    %v1481 = vld [vmem:[#allocation2 + $0x2b8] sm:$0xff]
    %v1482 = vld [vmem:[#allocation2 + $0x2c0] sm:$0xff]
    %v1483 = vld [vmem:[#allocation2 + $0x2c8] sm:$0xff]
    %v1484 = vld [vmem:[#allocation2 + $0x2d0] sm:$0xff]
    %v1485 = vld [vmem:[#allocation2 + $0x2d8] sm:$0xff]
    %v1486 = vld [vmem:[#allocation2 + $0x2e0] sm:$0xff]
    %v1487 = vld [vmem:[#allocation2 + $0x2e8] sm:$0xff]
    %v1488 = vld [vmem:[#allocation2 + $0x2f0] sm:$0xff]
    %vm1489 = vcmask 523264
    %v1491 = vsel %vm1489, %v1472, 0
    %1493 = vmatpush.msra.mxu0 0.0
    %1494 = vmatpush.msra.mxu0 0.0
    %1495 = vmatpush.msra.mxu0 0.0
    %1496 = vmatpush.msra.mxu0 0.0
    %1497 = vmatpush.msra.mxu0 0.0
    %1498 = vmatpush.msra.mxu0 0.0
    %1499 = vmatpush.msra.mxu0 0.0
    %1500 = vmatpush.msra.mxu0 0.0
    %1501 = vmatpush.msra.mxu0 %v1488
    %1502 = vmatpush.msra.mxu0 %v1487
    %1503 = vmatpush.msra.mxu0 %v1486
    %1504 = vmatpush.msra.mxu0 %v1485
    %1505 = vmatpush.msra.mxu0 %v1484
    %1506 = vmatpush.msra.mxu0 %v1483
    %1507 = vmatpush.msra.mxu0 %v1482
    %1508 = vmatpush.msra.mxu0 %v1481
    %1509 = vmatmul.f32.gmra.mxu0 %v1491
    %v1510 = vpop.f32.mrf.mxu0
    %v1511 = vadd.f32 0.0, %v1510
    %1512 = vdwg.mxu0
    %v1513 = vld [vmem:[#allocation2 + $0x2f8] sm:$0xff]
    %v1514 = vld [vmem:[#allocation2 + $0x300] sm:$0xff]
    %v1515 = vld [vmem:[#allocation2 + $0x308] sm:$0xff]
    %v1516 = vld [vmem:[#allocation2 + $0x310] sm:$0xff]
    %v1517 = vld [vmem:[#allocation2 + $0x318] sm:$0xff]
    %v1518 = vld [vmem:[#allocation2 + $0x320] sm:$0xff]
    %v1519 = vld [vmem:[#allocation2 + $0x328] sm:$0xff]
    %v1520 = vld [vmem:[#allocation2 + $0x330] sm:$0xff]
    %1521 = vmatpush.msra.mxu0 0.0
    %1522 = vmatpush.msra.mxu0 0.0
    %1523 = vmatpush.msra.mxu0 0.0
    %1524 = vmatpush.msra.mxu0 0.0
    %1525 = vmatpush.msra.mxu0 0.0
    %1526 = vmatpush.msra.mxu0 0.0
    %1527 = vmatpush.msra.mxu0 0.0
    %1528 = vmatpush.msra.mxu0 0.0
    %1529 = vmatpush.msra.mxu0 %v1520
    %1530 = vmatpush.msra.mxu0 %v1519
    %1531 = vmatpush.msra.mxu0 %v1518
    %1532 = vmatpush.msra.mxu0 %v1517
    %1533 = vmatpush.msra.mxu0 %v1516
    %1534 = vmatpush.msra.mxu0 %v1515
    %1535 = vmatpush.msra.mxu0 %v1514
    %1536 = vmatpush.msra.mxu0 %v1513
    %1537 = vmatmul.f32.gmra.mxu0 %v1491
    %v1538 = vpop.f32.mrf.mxu0
    %v1539 = vadd.f32 0.0, %v1538
    %1540 = vdwg.mxu0
    %v1542 = vsel %vm1359, %v1511, 0
    %1544 = vmatpush.msra.mxu0 0.0
    %1545 = vmatpush.msra.mxu0 0.0
    %1546 = vmatpush.msra.mxu0 0.0
    %1547 = vmatpush.msra.mxu0 0.0
    %1548 = vmatpush.msra.mxu0 0.0
    %1549 = vmatpush.msra.mxu0 0.0
    %1550 = vmatpush.msra.mxu0 0.0
    %1551 = vmatpush.msra.mxu0 0.0
    %1552 = vmatpush.msra.mxu0 0.0
    %1553 = vmatpush.msra.mxu0 0.0
    %1554 = vmatpush.msra.mxu0 0.0
    %1555 = vmatpush.msra.mxu0 0.0
    %1556 = vmatpush.msra.mxu0 0.0
    %1557 = vmatpush.msra.mxu0 0.0
    %1558 = vmatpush.msra.mxu0 0.0
    %1559 = vmatpush.msra.mxu0 %v1542
    %1560 = vmatmul.f32.gmra.mxu0 %v1357
    %v1561 = vpop.f32.mrf.mxu0
    %v1562 = vadd.f32 0.0, %v1561
    %1563 = vdwg.mxu0
    %1564 = vmatpush.msra.mxu0 0.0
    %1565 = vmatpush.msra.mxu0 0.0
    %1566 = vmatpush.msra.mxu0 0.0
    %1567 = vmatpush.msra.mxu0 0.0
    %1568 = vmatpush.msra.mxu0 0.0
    %1569 = vmatpush.msra.mxu0 0.0
    %1570 = vmatpush.msra.mxu0 0.0
    %1571 = vmatpush.msra.mxu0 0.0
    %1572 = vmatpush.msra.mxu0 %v1480
    %1573 = vmatpush.msra.mxu0 %v1479
    %1574 = vmatpush.msra.mxu0 %v1478
    %1575 = vmatpush.msra.mxu0 %v1477
    %1576 = vmatpush.msra.mxu0 %v1476
    %1577 = vmatpush.msra.mxu0 %v1475
    %1578 = vmatpush.msra.mxu0 %v1474
    %1579 = vmatpush.msra.mxu0 %v1473
    %1580 = vmatmul.f32.gmra.mxu0 %v1491
    %v1581 = vpop.f32.mrf.mxu0
    %v1582 = vadd.f32 %v1562, %v1581
    %1583 = vdwg.mxu0
    %v1585 = vsel %vm1359, %v1539, 0
    %1587 = vmatpush.msra.mxu0 0.0
    %1588 = vmatpush.msra.mxu0 0.0
    %1589 = vmatpush.msra.mxu0 0.0
    %1590 = vmatpush.msra.mxu0 0.0
    %1591 = vmatpush.msra.mxu0 0.0
    %1592 = vmatpush.msra.mxu0 0.0
    %1593 = vmatpush.msra.mxu0 0.0
    %1594 = vmatpush.msra.mxu0 0.0
    %1595 = vmatpush.msra.mxu0 0.0
    %1596 = vmatpush.msra.mxu0 0.0
    %1597 = vmatpush.msra.mxu0 0.0
    %1598 = vmatpush.msra.mxu0 0.0
    %1599 = vmatpush.msra.mxu0 0.0
    %1600 = vmatpush.msra.mxu0 0.0
    %1601 = vmatpush.msra.mxu0 0.0
    %1602 = vmatpush.msra.mxu0 %v1585
    %1603 = vmatmul.f32.gmra.mxu0 %v1405
    %v1604 = vpop.f32.mrf.mxu0
    %v1605 = vadd.f32 0.0, %v1604
    %1606 = vdwg.mxu0
    %v1607 = vadd.f32 %v1582, %v1605
    %v1608 = vsel %vm1431, %v1607, 0.0
    %v1609 = vrot.slane %v1608, 4
    %v1610 = vadd.f32 %v1608, %v1609
    %v1611 = vrot.slane %v1610, 2
    %v1612 = vadd.f32 %v1610, %v1611
    %v1613 = vrot.slane %v1612, 1
    %v1614 = vadd.f32 %v1612, %v1613
    %v1615 = vmul.f32 %v1614, 0.25
    %v1616 = vmul.f32 %v1607, %v1607
    %v1617 = vsel %vm1431, %v1616, 0.0
    %v1618 = vrot.slane %v1617, 4
    %v1619 = vadd.f32 %v1617, %v1618
    %v1620 = vrot.slane %v1619, 2
    %v1621 = vadd.f32 %v1619, %v1620
    %v1622 = vrot.slane %v1621, 1
    %v1623 = vadd.f32 %v1621, %v1622
    %v1624 = vmul.f32 %v1623, 0.25
    %v1625 = vmul.f32 %v1615, %v1615
    %v1626 = vsub.f32 %v1624, %v1625
    %v1627 = vmax.f32 %v1626, 0.0
    %v1628 = vld [vmem:[#allocation2 + $0x338] sm:$0x1]
    %v1629 = vadd.f32 %v1627, 1e-05
    %v1630 = vrsqrt.pop %v1629
    %v1631 = vmul.f32 %v1630, %v1629
    %v1632 = vmul.f32 %v1631, %v1630
    %v1633 = vmul.f32 0.5, %v1632
    %v1634 = vsub.f32 1.5, %v1633
    %v1635 = vmul.f32 %v1630, %v1634
    %vm1636 = vweird.f32 %v1629
    %vm1637 = vweird.f32 %v1630
    %vm1638 = vmor %vm1636, %vm1637
    %v1639 = vsel %vm1638, %v1630, %v1635
    %v1640 = vmul.f32 %v1628, %v1639
    %v1641 = vld [vmem:[#allocation2 + $0x340] sm:$0x1]
    %v1642 = vmul.f32 %v1615, %v1640
    %v1643 = vsub.f32 %v1641, %v1642
    %v1644 = vperm.slane %v1640, 0
    %v1645 = vmul.f32 %v1607, %v1644
    %v1646 = vperm.slane %v1643, 0
    %v1647 = vadd.f32 %v1645, %v1646
    %v1648 = vmax.f32 %v1647, 0.0
    %v1649 = vld [vmem:[#allocation2 + $0x348] sm:$0x3]
    %v1651 = vsel %vm1355, %v1649, 0
    %v1654 = vsel %vm1359, %v1648, 0
    %1656 = vmatpush.msra.mxu0 0.0
    %1657 = vmatpush.msra.mxu0 0.0
    %1658 = vmatpush.msra.mxu0 0.0
    %1659 = vmatpush.msra.mxu0 0.0
    %1660 = vmatpush.msra.mxu0 0.0
    %1661 = vmatpush.msra.mxu0 0.0
    %1662 = vmatpush.msra.mxu0 0.0
    %1663 = vmatpush.msra.mxu0 0.0
    %1664 = vmatpush.msra.mxu0 0.0
    %1665 = vmatpush.msra.mxu0 0.0
    %1666 = vmatpush.msra.mxu0 0.0
    %1667 = vmatpush.msra.mxu0 0.0
    %1668 = vmatpush.msra.mxu0 0.0
    %1669 = vmatpush.msra.mxu0 0.0
    %1670 = vmatpush.msra.mxu0 0.0
    %1671 = vmatpush.msra.mxu0 %v1654
    %1672 = vmatmul.f32.gmra.mxu0 %v1651
    %v1673 = vpop.f32.mrf.mxu0
    %v1674 = vadd.f32 0.0, %v1673
    %1675 = vdwg.mxu0
    %v1676 = vld [vmem:[#allocation2 + $0x350] sm:$0xff]
    %v1677 = vld [vmem:[#allocation2 + $0x358] sm:$0xff]
    %v1678 = vld [vmem:[#allocation2 + $0x360] sm:$0xff]
    %v1679 = vld [vmem:[#allocation2 + $0x368] sm:$0xff]
    %v1680 = vld [vmem:[#allocation2 + $0x370] sm:$0xff]
    %v1681 = vld [vmem:[#allocation2 + $0x378] sm:$0xff]
    %v1682 = vld [vmem:[#allocation2 + $0x380] sm:$0xff]
    %v1683 = vld [vmem:[#allocation2 + $0x388] sm:$0xff]
    %v1685 = vsel %vm1489, %v1674, 0
    %1687 = vmatpush.msra.mxu0 0.0
    %1688 = vmatpush.msra.mxu0 0.0
    %1689 = vmatpush.msra.mxu0 0.0
    %1690 = vmatpush.msra.mxu0 0.0
    %1691 = vmatpush.msra.mxu0 0.0
    %1692 = vmatpush.msra.mxu0 0.0
    %1693 = vmatpush.msra.mxu0 0.0
    %1694 = vmatpush.msra.mxu0 0.0
    %1695 = vmatpush.msra.mxu0 %v1683
    %1696 = vmatpush.msra.mxu0 %v1682
    %1697 = vmatpush.msra.mxu0 %v1681
    %1698 = vmatpush.msra.mxu0 %v1680
    %1699 = vmatpush.msra.mxu0 %v1679
    %1700 = vmatpush.msra.mxu0 %v1678
    %1701 = vmatpush.msra.mxu0 %v1677
    %1702 = vmatpush.msra.mxu0 %v1676
    %1703 = vmatmul.f32.gmra.mxu0 %v1685
    %v1704 = vpop.f32.mrf.mxu0
    %v1705 = vadd.f32 0.0, %v1704
    %1706 = vdwg.mxu0
    %vm1707 = vcmask 1041408
    %v1708 = vsel %vm1707, %v1705, 0.0
    %v1709 = vrot.slane %v1708, 4
    %v1710 = vadd.f32 %v1708, %v1709
    %v1711 = vrot.slane %v1710, 2
    %v1712 = vadd.f32 %v1710, %v1711
    %v1713 = vrot.slane %v1712, 1
    %v1714 = vadd.f32 %v1712, %v1713
    %v1715 = vmul.f32 %v1714, 0.5
    %v1716 = vmul.f32 %v1705, %v1705
    %v1717 = vsel %vm1707, %v1716, 0.0
    %v1718 = vrot.slane %v1717, 4
    %v1719 = vadd.f32 %v1717, %v1718
    %v1720 = vrot.slane %v1719, 2
    %v1721 = vadd.f32 %v1719, %v1720
    %v1722 = vrot.slane %v1721, 1
    %v1723 = vadd.f32 %v1721, %v1722
    %v1724 = vmul.f32 %v1723, 0.5
    %v1725 = vmul.f32 %v1715, %v1715
    %v1726 = vsub.f32 %v1724, %v1725
    %v1727 = vmax.f32 %v1726, 0.0
    %v1728 = vld [vmem:[#allocation2 + $0x390] sm:$0x1]
    %v1729 = vadd.f32 %v1727, 1e-05
    %v1730 = vrsqrt.pop %v1729
    %v1731 = vmul.f32 %v1730, %v1729
    %v1732 = vmul.f32 %v1731, %v1730
    %v1733 = vmul.f32 0.5, %v1732
    %v1734 = vsub.f32 1.5, %v1733
    %v1735 = vmul.f32 %v1730, %v1734
    %vm1736 = vweird.f32 %v1729
    %vm1737 = vweird.f32 %v1730
    %vm1738 = vmor %vm1736, %vm1737
    %v1739 = vsel %vm1738, %v1730, %v1735
    %v1740 = vmul.f32 %v1728, %v1739
    %v1741 = vld [vmem:[#allocation2 + $0x398] sm:$0x1]
    %v1742 = vmul.f32 %v1715, %v1740
    %v1743 = vsub.f32 %v1741, %v1742
    %v1744 = vperm.slane %v1740, 0
    %v1745 = vmul.f32 %v1705, %v1744
    %v1746 = vperm.slane %v1743, 0
    %v1747 = vadd.f32 %v1745, %v1746
    %v1748 = vmax.f32 %v1747, 0.0
    %v1749 = vld [vmem:[#allocation2 + $0x3a0] sm:$0xff]
    %v1750 = vld [vmem:[#allocation2 + $0x3a8] sm:$0xff]
    %v1751 = vld [vmem:[#allocation2 + $0x3b0] sm:$0xff]
    %v1752 = vld [vmem:[#allocation2 + $0x3b8] sm:$0xff]
    %v1753 = vld [vmem:[#allocation2 + $0x3c0] sm:$0xff]
    %v1754 = vld [vmem:[#allocation2 + $0x3c8] sm:$0xff]
    %v1755 = vld [vmem:[#allocation2 + $0x3d0] sm:$0xff]
    %v1756 = vld [vmem:[#allocation2 + $0x3d8] sm:$0xff]
    %v1757 = vld [vmem:[#allocation2 + $0x3e0] sm:$0xff]
    %v1758 = vld [vmem:[#allocation2 + $0x3e8] sm:$0xff]
    %v1759 = vld [vmem:[#allocation2 + $0x3f0] sm:$0xff]
    %v1760 = vld [vmem:[#allocation2 + $0x3f8] sm:$0xff]
    %v1761 = vld [vmem:[#allocation2 + $0x400] sm:$0xff]
    %v1762 = vld [vmem:[#allocation2 + $0x408] sm:$0xff]
    %v1763 = vld [vmem:[#allocation2 + $0x410] sm:$0xff]
    %v1764 = vld [vmem:[#allocation2 + $0x418] sm:$0xff]
    %1765 = vmatpush.msra.mxu0 %v1764
    %1766 = vmatpush.msra.mxu0 %v1763
    %1767 = vmatpush.msra.mxu0 %v1762
    %1768 = vmatpush.msra.mxu0 %v1761
    %1769 = vmatpush.msra.mxu0 %v1760
    %1770 = vmatpush.msra.mxu0 %v1759
    %1771 = vmatpush.msra.mxu0 %v1758
    %1772 = vmatpush.msra.mxu0 %v1757
    %1773 = vmatpush.msra.mxu0 %v1756
    %1774 = vmatpush.msra.mxu0 %v1755
    %1775 = vmatpush.msra.mxu0 %v1754
    %1776 = vmatpush.msra.mxu0 %v1753
    %1777 = vmatpush.msra.mxu0 %v1752
    %1778 = vmatpush.msra.mxu0 %v1751
    %1779 = vmatpush.msra.mxu0 %v1750
    %1780 = vmatpush.msra.mxu0 %v1749
    %1781 = vmatmul.f32.gmra.mxu0 %v1748
    %v1782 = vpop.f32.mrf.mxu0
    %v1783 = vadd.f32 0.0, %v1782
    %1784 = vdwg.mxu0
    %v1785 = vsel %vm1707, %v1783, 0.0
    %v1786 = vrot.slane %v1785, 4
    %v1787 = vadd.f32 %v1785, %v1786
    %v1788 = vrot.slane %v1787, 2
    %v1789 = vadd.f32 %v1787, %v1788
    %v1790 = vrot.slane %v1789, 1
    %v1791 = vadd.f32 %v1789, %v1790
    %v1792 = vmul.f32 %v1791, 0.5
    %v1793 = vmul.f32 %v1783, %v1783
    %v1794 = vsel %vm1707, %v1793, 0.0
    %v1795 = vrot.slane %v1794, 4
    %v1796 = vadd.f32 %v1794, %v1795
    %v1797 = vrot.slane %v1796, 2
    %v1798 = vadd.f32 %v1796, %v1797
    %v1799 = vrot.slane %v1798, 1
    %v1800 = vadd.f32 %v1798, %v1799
    %v1801 = vmul.f32 %v1800, 0.5
    %v1802 = vmul.f32 %v1792, %v1792
    %v1803 = vsub.f32 %v1801, %v1802
    %v1804 = vmax.f32 %v1803, 0.0
    %v1805 = vld [vmem:[#allocation2 + $0x420] sm:$0x1]
    %v1806 = vadd.f32 %v1804, 1e-05
    %v1807 = vrsqrt.pop %v1806
    %v1808 = vmul.f32 %v1807, %v1806
    %v1809 = vmul.f32 %v1808, %v1807
    %v1810 = vmul.f32 0.5, %v1809
    %v1811 = vsub.f32 1.5, %v1810
    %v1812 = vmul.f32 %v1807, %v1811
    %vm1813 = vweird.f32 %v1806
    %vm1814 = vweird.f32 %v1807
    %vm1815 = vmor %vm1813, %vm1814
    %v1816 = vsel %vm1815, %v1807, %v1812
    %v1817 = vmul.f32 %v1805, %v1816
    %v1818 = vld [vmem:[#allocation2 + $0x428] sm:$0x1]
    %v1819 = vmul.f32 %v1792, %v1817
    %v1820 = vsub.f32 %v1818, %v1819
    %v1821 = vperm.slane %v1817, 0
    %v1822 = vmul.f32 %v1783, %v1821
    %v1823 = vperm.slane %v1820, 0
    %v1824 = vadd.f32 %v1822, %v1823
    %v1825 = vmax.f32 %v1824, 0.0
    %v1826 = vld [vmem:[#allocation2 + $0x440] sm:$0xff]
    %v1827 = vld [vmem:[#allocation2 + $0x448] sm:$0xff]
    %v1828 = vld [vmem:[#allocation2 + $0x450] sm:$0xff]
    %v1829 = vld [vmem:[#allocation2 + $0x458] sm:$0xff]
    %v1830 = vld [vmem:[#allocation2 + $0x460] sm:$0xff]
    %v1831 = vld [vmem:[#allocation2 + $0x468] sm:$0xff]
    %v1832 = vld [vmem:[#allocation2 + $0x470] sm:$0xff]
    %v1833 = vld [vmem:[#allocation2 + $0x478] sm:$0xff]
    %v1834 = vld [vmem:[#allocation2 + $0x480] sm:$0xff]
    %v1835 = vld [vmem:[#allocation2 + $0x488] sm:$0xff]
    %v1836 = vld [vmem:[#allocation2 + $0x490] sm:$0xff]
    %v1837 = vld [vmem:[#allocation2 + $0x498] sm:$0xff]
    %v1838 = vld [vmem:[#allocation2 + $0x4a0] sm:$0xff]
    %v1839 = vld [vmem:[#allocation2 + $0x4a8] sm:$0xff]
    %v1840 = vld [vmem:[#allocation2 + $0x4b0] sm:$0xff]
    %v1841 = vld [vmem:[#allocation2 + $0x4b8] sm:$0xff]
    %1842 = vmatpush.msra.mxu0 %v1841
    %1843 = vmatpush.msra.mxu0 %v1840
    %1844 = vmatpush.msra.mxu0 %v1839
    %1845 = vmatpush.msra.mxu0 %v1838
    %1846 = vmatpush.msra.mxu0 %v1837
    %1847 = vmatpush.msra.mxu0 %v1836
    %1848 = vmatpush.msra.mxu0 %v1835
    %1849 = vmatpush.msra.mxu0 %v1834
    %1850 = vmatpush.msra.mxu0 %v1833
    %1851 = vmatpush.msra.mxu0 %v1832
    %1852 = vmatpush.msra.mxu0 %v1831
    %1853 = vmatpush.msra.mxu0 %v1830
    %1854 = vmatpush.msra.mxu0 %v1829
    %1855 = vmatpush.msra.mxu0 %v1828
    %1856 = vmatpush.msra.mxu0 %v1827
    %1857 = vmatpush.msra.mxu0 %v1826
    %1858 = vmatmul.f32.gmra.mxu0 %v1825
    %v1859 = vpop.f32.mrf.mxu0
    %v1860 = vadd.f32 0.0, %v1859
    %1861 = vdwg.mxu0
    %v1862 = vld [vmem:[#allocation2 + $0x430] sm:$0xf]
    %v1863 = vld [vmem:[#allocation2 + $0x438] sm:$0xf]
    %1865 = vrot.lane.b32.xlu0 %v1860, 64
    %v1866 = vpop.permute.xlu0 %1865
    %vm1867 = vcmask 15360
    %v1869 = vsel %vm1867, %v1863, 0
    %v1871 = vsel %vm1707, %v1866, 0
    %1873 = vmatpush.msra.mxu0 0.0
    %1874 = vmatpush.msra.mxu0 0.0
    %1875 = vmatpush.msra.mxu0 0.0
    %1876 = vmatpush.msra.mxu0 0.0
    %1877 = vmatpush.msra.mxu0 0.0
    %1878 = vmatpush.msra.mxu0 0.0
    %1879 = vmatpush.msra.mxu0 0.0
    %1880 = vmatpush.msra.mxu0 0.0
    %1881 = vmatpush.msra.mxu0 0.0
    %1882 = vmatpush.msra.mxu0 0.0
    %1883 = vmatpush.msra.mxu0 0.0
    %1884 = vmatpush.msra.mxu0 0.0
    %1885 = vmatpush.msra.mxu0 0.0
    %1886 = vmatpush.msra.mxu0 0.0
    %1887 = vmatpush.msra.mxu0 0.0
    %1888 = vmatpush.msra.mxu0 %v1871
    %1889 = vmatmul.f32.gmra.mxu0 %v1869
    %v1890 = vpop.f32.mrf.mxu0
    %v1891 = vadd.f32 0.0, %v1890
    %1892 = vdwg.mxu0
    %v1894 = vsel %vm1867, %v1862, 0
    %v1896 = vsel %vm1707, %v1860, 0
    %1898 = vmatpush.msra.mxu0 0.0
    %1899 = vmatpush.msra.mxu0 0.0
    %1900 = vmatpush.msra.mxu0 0.0
    %1901 = vmatpush.msra.mxu0 0.0
    %1902 = vmatpush.msra.mxu0 0.0
    %1903 = vmatpush.msra.mxu0 0.0
    %1904 = vmatpush.msra.mxu0 0.0
    %1905 = vmatpush.msra.mxu0 0.0
    %1906 = vmatpush.msra.mxu0 0.0
    %1907 = vmatpush.msra.mxu0 0.0
    %1908 = vmatpush.msra.mxu0 0.0
    %1909 = vmatpush.msra.mxu0 0.0
    %1910 = vmatpush.msra.mxu0 0.0
    %1911 = vmatpush.msra.mxu0 0.0
    %1912 = vmatpush.msra.mxu0 0.0
    %1913 = vmatpush.msra.mxu0 %v1896
    %1914 = vmatmul.f32.gmra.mxu0 %v1894
    %v1915 = vpop.f32.mrf.mxu0
    %v1916 = vadd.f32 %v1891, %v1915
    %1917 = vdwg.mxu0
    %v1918 = vld [vmem:[#allocation2 + $0x4c0] sm:$0x1]
    %v1919 = vperm.slane %v1918, 0
    %v1920 = vadd.f32 %v1916, %v1919
    %v1921 = vld [vmem:[#allocation2 + $0x4c8] sm:$0xff]
    %v1922 = vld [vmem:[#allocation2 + $0x4d0] sm:$0xff]
    %v1923 = vld [vmem:[#allocation2 + $0x4d8] sm:$0xff]
    %v1924 = vld [vmem:[#allocation2 + $0x4e0] sm:$0xff]
    %v1925 = vld [vmem:[#allocation2 + $0x4e8] sm:$0xff]
    %v1926 = vld [vmem:[#allocation2 + $0x4f0] sm:$0xff]
    %v1927 = vld [vmem:[#allocation2 + $0x4f8] sm:$0xff]
    %v1928 = vld [vmem:[#allocation2 + $0x500] sm:$0xff]
    %v1929 = vld [vmem:[#allocation2 + $0x508] sm:$0xff]
    %v1930 = vld [vmem:[#allocation2 + $0x510] sm:$0xff]
    %v1931 = vld [vmem:[#allocation2 + $0x518] sm:$0xff]
    %v1932 = vld [vmem:[#allocation2 + $0x520] sm:$0xff]
    %v1933 = vld [vmem:[#allocation2 + $0x528] sm:$0xff]
    %v1934 = vld [vmem:[#allocation2 + $0x530] sm:$0xff]
    %v1935 = vld [vmem:[#allocation2 + $0x538] sm:$0xff]
    %v1936 = vld [vmem:[#allocation2 + $0x540] sm:$0xff]
    %v1937 = vsel %vm1489, %v1648, 0
    %1939 = vmatpush.msra.mxu0 0.0
    %1940 = vmatpush.msra.mxu0 0.0
    %1941 = vmatpush.msra.mxu0 0.0
    %1942 = vmatpush.msra.mxu0 0.0
    %1943 = vmatpush.msra.mxu0 0.0
    %1944 = vmatpush.msra.mxu0 0.0
    %1945 = vmatpush.msra.mxu0 0.0
    %1946 = vmatpush.msra.mxu0 0.0
    %1947 = vmatpush.msra.mxu0 %v1936
    %1948 = vmatpush.msra.mxu0 %v1935
    %1949 = vmatpush.msra.mxu0 %v1934
    %1950 = vmatpush.msra.mxu0 %v1933
    %1951 = vmatpush.msra.mxu0 %v1932
    %1952 = vmatpush.msra.mxu0 %v1931
    %1953 = vmatpush.msra.mxu0 %v1930
    %1954 = vmatpush.msra.mxu0 %v1929
    %1955 = vmatmul.f32.gmra.mxu0 %v1937
    %v1956 = vpop.f32.mrf.mxu0
    %v1957 = vadd.f32 0.0, %v1956
    %1958 = vdwg.mxu0
    %v1960 = vsel %vm1489, %v1920, 0
    %1962 = vmatpush.msra.mxu0 0.0
    %1963 = vmatpush.msra.mxu0 0.0
    %1964 = vmatpush.msra.mxu0 0.0
    %1965 = vmatpush.msra.mxu0 0.0
    %1966 = vmatpush.msra.mxu0 0.0
    %1967 = vmatpush.msra.mxu0 0.0
    %1968 = vmatpush.msra.mxu0 0.0
    %1969 = vmatpush.msra.mxu0 0.0
    %1970 = vmatpush.msra.mxu0 %v1928
    %1971 = vmatpush.msra.mxu0 %v1927
    %1972 = vmatpush.msra.mxu0 %v1926
    %1973 = vmatpush.msra.mxu0 %v1925
    %1974 = vmatpush.msra.mxu0 %v1924
    %1975 = vmatpush.msra.mxu0 %v1923
    %1976 = vmatpush.msra.mxu0 %v1922
    %1977 = vmatpush.msra.mxu0 %v1921
    %1978 = vmatmul.f32.gmra.mxu0 %v1960
    %v1979 = vpop.f32.mrf.mxu0
    %v1980 = vadd.f32 %v1957, %v1979
    %1981 = vdwg.mxu0
    %v1982 = vld [vmem:[#allocation2 + $0x548] sm:$0x1]
    %v1983 = vperm.slane %v1982, 0
    %v1984 = vadd.f32 %v1980, %v1983
    %v1985 = vmax.f32 %v1984, 0.0
    %v1986 = vld [vmem:[#allocation2 + $0x550] sm:$0xff]
    %v1987 = vld [vmem:[#allocation2 + $0x558] sm:$0xff]
    %v1988 = vld [vmem:[#allocation2 + $0x560] sm:$0xff]
    %v1989 = vld [vmem:[#allocation2 + $0x568] sm:$0xff]
    %v1990 = vld [vmem:[#allocation2 + $0x570] sm:$0xff]
    %v1991 = vld [vmem:[#allocation2 + $0x578] sm:$0xff]
    %v1992 = vld [vmem:[#allocation2 + $0x580] sm:$0xff]
    %v1993 = vld [vmem:[#allocation2 + $0x588] sm:$0xff]
    %v1994 = vld [vmem:[#allocation2 + $0x590] sm:$0xff]
    %v1995 = vld [vmem:[#allocation2 + $0x598] sm:$0xff]
    %v1996 = vld [vmem:[#allocation2 + $0x5a0] sm:$0xff]
    %v1997 = vld [vmem:[#allocation2 + $0x5a8] sm:$0xff]
    %v1998 = vld [vmem:[#allocation2 + $0x5b0] sm:$0xff]
    %v1999 = vld [vmem:[#allocation2 + $0x5b8] sm:$0xff]
    %v2000 = vld [vmem:[#allocation2 + $0x5c0] sm:$0xff]
    %v2001 = vld [vmem:[#allocation2 + $0x5c8] sm:$0xff]
    %v2003 = vsel %vm1489, %v1985, 0
    %2005 = vmatpush.msra.mxu0 0.0
    %2006 = vmatpush.msra.mxu0 0.0
    %2007 = vmatpush.msra.mxu0 0.0
    %2008 = vmatpush.msra.mxu0 0.0
    %2009 = vmatpush.msra.mxu0 0.0
    %2010 = vmatpush.msra.mxu0 0.0
    %2011 = vmatpush.msra.mxu0 0.0
    %2012 = vmatpush.msra.mxu0 0.0
    %2013 = vmatpush.msra.mxu0 %v2001
    %2014 = vmatpush.msra.mxu0 %v2000
    %2015 = vmatpush.msra.mxu0 %v1999
    %2016 = vmatpush.msra.mxu0 %v1998
    %2017 = vmatpush.msra.mxu0 %v1997
    %2018 = vmatpush.msra.mxu0 %v1996
    %2019 = vmatpush.msra.mxu0 %v1995
    %2020 = vmatpush.msra.mxu0 %v1994
    %2021 = vmatmul.f32.gmra.mxu0 %v2003
    %v2022 = vpop.f32.mrf.mxu0
    %v2023 = vadd.f32 0.0, %v2022
    %2024 = vdwg.mxu0
    %v2025 = vld [vmem:[#allocation2 + $0x5d0] sm:$0xff]
    %v2026 = vld [vmem:[#allocation2 + $0x5d8] sm:$0xff]
    %v2027 = vld [vmem:[#allocation2 + $0x5e0] sm:$0xff]
    %v2028 = vld [vmem:[#allocation2 + $0x5e8] sm:$0xff]
    %v2029 = vld [vmem:[#allocation2 + $0x5f0] sm:$0xff]
    %v2030 = vld [vmem:[#allocation2 + $0x5f8] sm:$0xff]
    %v2031 = vld [vmem:[#allocation2 + $0x600] sm:$0xff]
    %v2032 = vld [vmem:[#allocation2 + $0x608] sm:$0xff]
    %2033 = vmatpush.msra.mxu0 0.0
    %2034 = vmatpush.msra.mxu0 0.0
    %2035 = vmatpush.msra.mxu0 0.0
    %2036 = vmatpush.msra.mxu0 0.0
    %2037 = vmatpush.msra.mxu0 0.0
    %2038 = vmatpush.msra.mxu0 0.0
    %2039 = vmatpush.msra.mxu0 0.0
    %2040 = vmatpush.msra.mxu0 0.0
    %2041 = vmatpush.msra.mxu0 %v2032
    %2042 = vmatpush.msra.mxu0 %v2031
    %2043 = vmatpush.msra.mxu0 %v2030
    %2044 = vmatpush.msra.mxu0 %v2029
    %2045 = vmatpush.msra.mxu0 %v2028
    %2046 = vmatpush.msra.mxu0 %v2027
    %2047 = vmatpush.msra.mxu0 %v2026
    %2048 = vmatpush.msra.mxu0 %v2025
    %2049 = vmatmul.f32.gmra.mxu0 %v2003
    %v2050 = vpop.f32.mrf.mxu0
    %v2051 = vadd.f32 0.0, %v2050
    %2052 = vdwg.mxu0
    %v2054 = vsel %vm1359, %v2023, 0
    %2056 = vmatpush.msra.mxu0 0.0
    %2057 = vmatpush.msra.mxu0 0.0
    %2058 = vmatpush.msra.mxu0 0.0
    %2059 = vmatpush.msra.mxu0 0.0
    %2060 = vmatpush.msra.mxu0 0.0
    %2061 = vmatpush.msra.mxu0 0.0
    %2062 = vmatpush.msra.mxu0 0.0
    %2063 = vmatpush.msra.mxu0 0.0
    %2064 = vmatpush.msra.mxu0 0.0
    %2065 = vmatpush.msra.mxu0 0.0
    %2066 = vmatpush.msra.mxu0 0.0
    %2067 = vmatpush.msra.mxu0 0.0
    %2068 = vmatpush.msra.mxu0 0.0
    %2069 = vmatpush.msra.mxu0 0.0
    %2070 = vmatpush.msra.mxu0 0.0
    %2071 = vmatpush.msra.mxu0 %v2054
    %2072 = vmatmul.f32.gmra.mxu0 %v1357
    %v2073 = vpop.f32.mrf.mxu0
    %v2074 = vadd.f32 0.0, %v2073
    %2075 = vdwg.mxu0
    %2076 = vmatpush.msra.mxu0 0.0
    %2077 = vmatpush.msra.mxu0 0.0
    %2078 = vmatpush.msra.mxu0 0.0
    %2079 = vmatpush.msra.mxu0 0.0
    %2080 = vmatpush.msra.mxu0 0.0
    %2081 = vmatpush.msra.mxu0 0.0
    %2082 = vmatpush.msra.mxu0 0.0
    %2083 = vmatpush.msra.mxu0 0.0
    %2084 = vmatpush.msra.mxu0 %v1993
    %2085 = vmatpush.msra.mxu0 %v1992
    %2086 = vmatpush.msra.mxu0 %v1991
    %2087 = vmatpush.msra.mxu0 %v1990
    %2088 = vmatpush.msra.mxu0 %v1989
    %2089 = vmatpush.msra.mxu0 %v1988
    %2090 = vmatpush.msra.mxu0 %v1987
    %2091 = vmatpush.msra.mxu0 %v1986
    %2092 = vmatmul.f32.gmra.mxu0 %v2003
    %v2093 = vpop.f32.mrf.mxu0
    %v2094 = vadd.f32 %v2074, %v2093
    %2095 = vdwg.mxu0
    %v2097 = vsel %vm1359, %v2051, 0
    %2099 = vmatpush.msra.mxu0 0.0
    %2100 = vmatpush.msra.mxu0 0.0
    %2101 = vmatpush.msra.mxu0 0.0
    %2102 = vmatpush.msra.mxu0 0.0
    %2103 = vmatpush.msra.mxu0 0.0
    %2104 = vmatpush.msra.mxu0 0.0
    %2105 = vmatpush.msra.mxu0 0.0
    %2106 = vmatpush.msra.mxu0 0.0
    %2107 = vmatpush.msra.mxu0 0.0
    %2108 = vmatpush.msra.mxu0 0.0
    %2109 = vmatpush.msra.mxu0 0.0
    %2110 = vmatpush.msra.mxu0 0.0
    %2111 = vmatpush.msra.mxu0 0.0
    %2112 = vmatpush.msra.mxu0 0.0
    %2113 = vmatpush.msra.mxu0 0.0
    %2114 = vmatpush.msra.mxu0 %v2097
    %2115 = vmatmul.f32.gmra.mxu0 %v1405
    %v2116 = vpop.f32.mrf.mxu0
    %v2117 = vadd.f32 0.0, %v2116
    %2118 = vdwg.mxu0
    %v2119 = vadd.f32 %v2094, %v2117
    %vm2120 = vcmask 257024
    %v2121 = vsel %vm2120, %v2119, 0.0
    %v2122 = vrot.slane %v2121, 4
    %v2123 = vadd.f32 %v2121, %v2122
    %v2124 = vrot.slane %v2123, 2
    %v2125 = vadd.f32 %v2123, %v2124
    %v2126 = vrot.slane %v2125, 1
    %v2127 = vadd.f32 %v2125, %v2126
    %v2128 = vmul.f32 %v2127, 0.25
    %v2129 = vmul.f32 %v2119, %v2119
    %v2130 = vsel %vm2120, %v2129, 0.0
    %v2131 = vrot.slane %v2130, 4
    %v2132 = vadd.f32 %v2130, %v2131
    %v2133 = vrot.slane %v2132, 2
    %v2134 = vadd.f32 %v2132, %v2133
    %v2135 = vrot.slane %v2134, 1
    %v2136 = vadd.f32 %v2134, %v2135
    %v2137 = vmul.f32 %v2136, 0.25
    %v2138 = vmul.f32 %v2128, %v2128
    %v2139 = vsub.f32 %v2137, %v2138
    %v2140 = vmax.f32 %v2139, 0.0
    %v2141 = vld [vmem:[#allocation2 + $0x610] sm:$0x1]
    %v2142 = vadd.f32 %v2140, 1e-05
    %v2143 = vrsqrt.pop %v2142
    %v2144 = vmul.f32 %v2143, %v2142
    %v2145 = vmul.f32 %v2144, %v2143
    %v2146 = vmul.f32 0.5, %v2145
    %v2147 = vsub.f32 1.5, %v2146
    %v2148 = vmul.f32 %v2143, %v2147
    %vm2149 = vweird.f32 %v2142
    %vm2150 = vweird.f32 %v2143
    %vm2151 = vmor %vm2149, %vm2150
    %v2152 = vsel %vm2151, %v2143, %v2148
    %v2153 = vmul.f32 %v2141, %v2152
    %v2154 = vld [vmem:[#allocation2 + $0x618] sm:$0x1]
    %v2155 = vmul.f32 %v2128, %v2153
    %v2156 = vsub.f32 %v2154, %v2155
    %v2157 = vperm.slane %v2153, 0
    %v2158 = vmul.f32 %v2119, %v2157
    %v2159 = vperm.slane %v2156, 0
    %v2160 = vadd.f32 %v2158, %v2159
    %v2161 = vmax.f32 %v2160, 0.0
    %v2162 = vld [vmem:[#allocation2 + $0x630] sm:$0xff]
    %v2163 = vld [vmem:[#allocation2 + $0x638] sm:$0xff]
    %v2164 = vld [vmem:[#allocation2 + $0x640] sm:$0xff]
    %v2165 = vld [vmem:[#allocation2 + $0x648] sm:$0xff]
    %v2167 = vsel %vm116, %v2161, 0
    %2169 = vmatpush.msra.mxu0 0.0
    %2170 = vmatpush.msra.mxu0 0.0
    %2171 = vmatpush.msra.mxu0 0.0
    %2172 = vmatpush.msra.mxu0 0.0
    %2173 = vmatpush.msra.mxu0 0.0
    %2174 = vmatpush.msra.mxu0 0.0
    %2175 = vmatpush.msra.mxu0 0.0
    %2176 = vmatpush.msra.mxu0 0.0
    %2177 = vmatpush.msra.mxu0 0.0
    %2178 = vmatpush.msra.mxu0 0.0
    %2179 = vmatpush.msra.mxu0 0.0
    %2180 = vmatpush.msra.mxu0 0.0
    %2181 = vmatpush.msra.mxu0 %v2165
    %2182 = vmatpush.msra.mxu0 %v2164
    %2183 = vmatpush.msra.mxu0 %v2163
    %2184 = vmatpush.msra.mxu0 %v2162
    %2185 = vmatmul.f32.gmra.mxu0 %v2167
    %v2186 = vpop.f32.mrf.mxu0
    %v2187 = vadd.f32 0.0, %v2186
    %2188 = vdwg.mxu0
    %v2189 = vld [vmem:[#allocation2 + $0x620] sm:$0xff]
    %v2190 = vld [vmem:[#allocation2 + $0x628] sm:$0xff]
    %2192 = vrot.lane.b32.xlu0 %v2187, 96
    %v2193 = vpop.permute.xlu0 %2192
    %v2195 = vsel %vm1355, %v2190, 0
    %v2197 = vsel %vm1359, %v2193, 0
    %2199 = vmatpush.msra.mxu0 0.0
    %2200 = vmatpush.msra.mxu0 0.0
    %2201 = vmatpush.msra.mxu0 0.0
    %2202 = vmatpush.msra.mxu0 0.0
    %2203 = vmatpush.msra.mxu0 0.0
    %2204 = vmatpush.msra.mxu0 0.0
    %2205 = vmatpush.msra.mxu0 0.0
    %2206 = vmatpush.msra.mxu0 0.0
    %2207 = vmatpush.msra.mxu0 0.0
    %2208 = vmatpush.msra.mxu0 0.0
    %2209 = vmatpush.msra.mxu0 0.0
    %2210 = vmatpush.msra.mxu0 0.0
    %2211 = vmatpush.msra.mxu0 0.0
    %2212 = vmatpush.msra.mxu0 0.0
    %2213 = vmatpush.msra.mxu0 0.0
    %2214 = vmatpush.msra.mxu0 %v2197
    %2215 = vmatmul.f32.gmra.mxu0 %v2195
    %v2216 = vpop.f32.mrf.mxu0
    %v2217 = vadd.f32 0.0, %v2216
    %2218 = vdwg.mxu0
    %v2220 = vsel %vm1355, %v2189, 0
    %v2222 = vsel %vm1359, %v2187, 0
    %2224 = vmatpush.msra.mxu0 0.0
    %2225 = vmatpush.msra.mxu0 0.0
    %2226 = vmatpush.msra.mxu0 0.0
    %2227 = vmatpush.msra.mxu0 0.0
    %2228 = vmatpush.msra.mxu0 0.0
    %2229 = vmatpush.msra.mxu0 0.0
    %2230 = vmatpush.msra.mxu0 0.0
    %2231 = vmatpush.msra.mxu0 0.0
    %2232 = vmatpush.msra.mxu0 0.0
    %2233 = vmatpush.msra.mxu0 0.0
    %2234 = vmatpush.msra.mxu0 0.0
    %2235 = vmatpush.msra.mxu0 0.0
    %2236 = vmatpush.msra.mxu0 0.0
    %2237 = vmatpush.msra.mxu0 0.0
    %2238 = vmatpush.msra.mxu0 0.0
    %2239 = vmatpush.msra.mxu0 %v2222
    %2240 = vmatmul.f32.gmra.mxu0 %v2220
    %v2241 = vpop.f32.mrf.mxu0
    %v2242 = vadd.f32 %v2217, %v2241
    %2243 = vdwg.mxu0
    %v2244 = vld [vmem:[#allocation2 + $0x650] sm:$0x1]
    %v2245 = vperm.slane %v2244, 0
    %v2246 = vadd.f32 %v2242, %v2245
    %v2247 = vld [vmem:[#allocation2 + $0x658] sm:$0xff]
    %v2248 = vld [vmem:[#allocation2 + $0x660] sm:$0xff]
    %v2249 = vld [vmem:[#allocation2 + $0x668] sm:$0xff]
    %v2250 = vld [vmem:[#allocation2 + $0x670] sm:$0xff]
    %v2251 = vld [vmem:[#allocation2 + $0x678] sm:$0xff]
    %v2252 = vld [vmem:[#allocation2 + $0x680] sm:$0xff]
    %v2253 = vld [vmem:[#allocation2 + $0x688] sm:$0xff]
    %v2254 = vld [vmem:[#allocation2 + $0x690] sm:$0xff]
    %v2256 = vsel %vm116, %v1274, 0
    %2258 = vmatpush.msra.mxu0 0.0
    %2259 = vmatpush.msra.mxu0 0.0
    %2260 = vmatpush.msra.mxu0 0.0
    %2261 = vmatpush.msra.mxu0 0.0
    %2262 = vmatpush.msra.mxu0 0.0
    %2263 = vmatpush.msra.mxu0 0.0
    %2264 = vmatpush.msra.mxu0 0.0
    %2265 = vmatpush.msra.mxu0 0.0
    %2266 = vmatpush.msra.mxu0 0.0
    %2267 = vmatpush.msra.mxu0 0.0
    %2268 = vmatpush.msra.mxu0 0.0
    %2269 = vmatpush.msra.mxu0 0.0
    %2270 = vmatpush.msra.mxu0 %v2254
    %2271 = vmatpush.msra.mxu0 %v2253
    %2272 = vmatpush.msra.mxu0 %v2252
    %2273 = vmatpush.msra.mxu0 %v2251
    %2274 = vmatmul.f32.gmra.mxu0 %v2256
    %v2275 = vpop.f32.mrf.mxu0
    %v2276 = vadd.f32 0.0, %v2275
    %2277 = vdwg.mxu0
    %v2279 = vsel %vm116, %v2246, 0
    %2281 = vmatpush.msra.mxu0 0.0
    %2282 = vmatpush.msra.mxu0 0.0
    %2283 = vmatpush.msra.mxu0 0.0
    %2284 = vmatpush.msra.mxu0 0.0
    %2285 = vmatpush.msra.mxu0 0.0
    %2286 = vmatpush.msra.mxu0 0.0
    %2287 = vmatpush.msra.mxu0 0.0
    %2288 = vmatpush.msra.mxu0 0.0
    %2289 = vmatpush.msra.mxu0 0.0
    %2290 = vmatpush.msra.mxu0 0.0
    %2291 = vmatpush.msra.mxu0 0.0
    %2292 = vmatpush.msra.mxu0 0.0
    %2293 = vmatpush.msra.mxu0 %v2250
    %2294 = vmatpush.msra.mxu0 %v2249
    %2295 = vmatpush.msra.mxu0 %v2248
    %2296 = vmatpush.msra.mxu0 %v2247
    %2297 = vmatmul.f32.gmra.mxu0 %v2279
    %v2298 = vpop.f32.mrf.mxu0
    %v2299 = vadd.f32 %v2276, %v2298
    %2300 = vdwg.mxu0
    %v2301 = vld [vmem:[#allocation2 + $0x698] sm:$0x1]
    %v2302 = vperm.slane %v2301, 0
    %v2303 = vadd.f32 %v2299, %v2302
    %v2304 = vmax.f32 %v2303, 0.0
    %v2305 = vld [vmem:[#allocation2 + $0x6a0] sm:$0xff]
    %v2306 = vld [vmem:[#allocation2 + $0x6a8] sm:$0xff]
    %v2307 = vld [vmem:[#allocation2 + $0x6b0] sm:$0xff]
    %v2308 = vld [vmem:[#allocation2 + $0x6b8] sm:$0xff]
    %v2309 = vld [vmem:[#allocation2 + $0x6c0] sm:$0xff]
    %v2310 = vld [vmem:[#allocation2 + $0x6c8] sm:$0xff]
    %v2311 = vld [vmem:[#allocation2 + $0x6d0] sm:$0xff]
    %v2312 = vld [vmem:[#allocation2 + $0x6d8] sm:$0xff]
    %v2314 = vsel %vm116, %v2304, 0
    %2316 = vmatpush.msra.mxu0 0.0
    %2317 = vmatpush.msra.mxu0 0.0
    %2318 = vmatpush.msra.mxu0 0.0
    %2319 = vmatpush.msra.mxu0 0.0
    %2320 = vmatpush.msra.mxu0 0.0
    %2321 = vmatpush.msra.mxu0 0.0
    %2322 = vmatpush.msra.mxu0 0.0
    %2323 = vmatpush.msra.mxu0 0.0
    %2324 = vmatpush.msra.mxu0 0.0
    %2325 = vmatpush.msra.mxu0 0.0
    %2326 = vmatpush.msra.mxu0 0.0
    %2327 = vmatpush.msra.mxu0 0.0
    %2328 = vmatpush.msra.mxu0 %v2312
    %2329 = vmatpush.msra.mxu0 %v2311
    %2330 = vmatpush.msra.mxu0 %v2310
    %2331 = vmatpush.msra.mxu0 %v2309
    %2332 = vmatmul.f32.gmra.mxu0 %v2314
    %v2333 = vpop.f32.mrf.mxu0
    %v2334 = vadd.f32 0.0, %v2333
    %2335 = vdwg.mxu0
    %v2336 = vld [vmem:[#allocation2 + $0x6e0] sm:$0xff]
    %v2337 = vld [vmem:[#allocation2 + $0x6e8] sm:$0xff]
    %v2338 = vld [vmem:[#allocation2 + $0x6f0] sm:$0xff]
    %v2339 = vld [vmem:[#allocation2 + $0x6f8] sm:$0xff]
    %2340 = vmatpush.msra.mxu0 0.0
    %2341 = vmatpush.msra.mxu0 0.0
    %2342 = vmatpush.msra.mxu0 0.0
    %2343 = vmatpush.msra.mxu0 0.0
    %2344 = vmatpush.msra.mxu0 0.0
    %2345 = vmatpush.msra.mxu0 0.0
    %2346 = vmatpush.msra.mxu0 0.0
    %2347 = vmatpush.msra.mxu0 0.0
    %2348 = vmatpush.msra.mxu0 0.0
    %2349 = vmatpush.msra.mxu0 0.0
    %2350 = vmatpush.msra.mxu0 0.0
    %2351 = vmatpush.msra.mxu0 0.0
    %2352 = vmatpush.msra.mxu0 %v2339
    %2353 = vmatpush.msra.mxu0 %v2338
    %2354 = vmatpush.msra.mxu0 %v2337
    %2355 = vmatpush.msra.mxu0 %v2336
    %2356 = vmatmul.f32.gmra.mxu0 %v2314
    %v2357 = vpop.f32.mrf.mxu0
    %v2358 = vadd.f32 0.0, %v2357
    %2359 = vdwg.mxu0
    %2360 = vmatpush.msra.mxu0 0.0
    %2361 = vmatpush.msra.mxu0 0.0
    %2362 = vmatpush.msra.mxu0 0.0
    %2363 = vmatpush.msra.mxu0 0.0
    %2364 = vmatpush.msra.mxu0 0.0
    %2365 = vmatpush.msra.mxu0 0.0
    %2366 = vmatpush.msra.mxu0 0.0
    %2367 = vmatpush.msra.mxu0 0.0
    %2368 = vmatpush.msra.mxu0 0.0
    %2369 = vmatpush.msra.mxu0 0.0
    %2370 = vmatpush.msra.mxu0 0.0
    %2371 = vmatpush.msra.mxu0 0.0
    %2372 = vmatpush.msra.mxu0 0.0
    %2373 = vmatpush.msra.mxu0 0.0
    %2374 = vmatpush.msra.mxu0 0.0
    %2375 = vmatpush.msra.mxu0 %v2334
    %2376 = vmatmul.f32.gmra.mxu0 %v1010
    %v2377 = vpop.f32.mrf.mxu0
    %v2378 = vadd.f32 0.0, %v2377
    %2379 = vdwg.mxu0
    %2380 = vmatpush.msra.mxu0 0.0
    %2381 = vmatpush.msra.mxu0 0.0
    %2382 = vmatpush.msra.mxu0 0.0
    %2383 = vmatpush.msra.mxu0 0.0
    %2384 = vmatpush.msra.mxu0 0.0
    %2385 = vmatpush.msra.mxu0 0.0
    %2386 = vmatpush.msra.mxu0 0.0
    %2387 = vmatpush.msra.mxu0 0.0
    %2388 = vmatpush.msra.mxu0 0.0
    %2389 = vmatpush.msra.mxu0 0.0
    %2390 = vmatpush.msra.mxu0 0.0
    %2391 = vmatpush.msra.mxu0 0.0
    %2392 = vmatpush.msra.mxu0 %v2308
    %2393 = vmatpush.msra.mxu0 %v2307
    %2394 = vmatpush.msra.mxu0 %v2306
    %2395 = vmatpush.msra.mxu0 %v2305
    %2396 = vmatmul.f32.gmra.mxu0 %v2314
    %v2397 = vpop.f32.mrf.mxu0
    %v2398 = vadd.f32 %v2378, %v2397
    %2399 = vdwg.mxu0
    %2400 = vmatpush.msra.mxu0 0.0
    %2401 = vmatpush.msra.mxu0 0.0
    %2402 = vmatpush.msra.mxu0 0.0
    %2403 = vmatpush.msra.mxu0 0.0
    %2404 = vmatpush.msra.mxu0 0.0
    %2405 = vmatpush.msra.mxu0 0.0
    %2406 = vmatpush.msra.mxu0 0.0
    %2407 = vmatpush.msra.mxu0 0.0
    %2408 = vmatpush.msra.mxu0 0.0
    %2409 = vmatpush.msra.mxu0 0.0
    %2410 = vmatpush.msra.mxu0 0.0
    %2411 = vmatpush.msra.mxu0 0.0
    %2412 = vmatpush.msra.mxu0 0.0
    %2413 = vmatpush.msra.mxu0 0.0
    %2414 = vmatpush.msra.mxu0 0.0
    %2415 = vmatpush.msra.mxu0 %v2358
    %2416 = vmatmul.f32.gmra.mxu0 %v1054
    %v2417 = vpop.f32.mrf.mxu0
    %v2418 = vadd.f32 0.0, %v2417
    %2419 = vdwg.mxu0
    %v2420 = vadd.f32 %v2398, %v2418
    %v2421 = vsel %vm622, %v2420, 0.0
    %v2422 = vrot.slane %v2421, 4
    %v2423 = vadd.f32 %v2421, %v2422
    %v2424 = vrot.slane %v2423, 2
    %v2425 = vadd.f32 %v2423, %v2424
    %v2426 = vrot.slane %v2425, 1
    %v2427 = vadd.f32 %v2425, %v2426
    %v2428 = vmul.f32 %v2427, 0.125
    %v2429 = vmul.f32 %v2420, %v2420
    %v2430 = vsel %vm622, %v2429, 0.0
    %v2431 = vrot.slane %v2430, 4
    %v2432 = vadd.f32 %v2430, %v2431
    %v2433 = vrot.slane %v2432, 2
    %v2434 = vadd.f32 %v2432, %v2433
    %v2435 = vrot.slane %v2434, 1
    %v2436 = vadd.f32 %v2434, %v2435
    %v2437 = vmul.f32 %v2436, 0.125
    %v2438 = vmul.f32 %v2428, %v2428
    %v2439 = vsub.f32 %v2437, %v2438
    %v2440 = vmax.f32 %v2439, 0.0
    %v2441 = vld [vmem:[#allocation2 + $0x700] sm:$0x1]
    %v2442 = vadd.f32 %v2440, 1e-05
    %v2443 = vrsqrt.pop %v2442
    %v2444 = vmul.f32 %v2443, %v2442
    %v2445 = vmul.f32 %v2444, %v2443
    %v2446 = vmul.f32 0.5, %v2445
    %v2447 = vsub.f32 1.5, %v2446
    %v2448 = vmul.f32 %v2443, %v2447
    %vm2449 = vweird.f32 %v2442
    %vm2450 = vweird.f32 %v2443
    %vm2451 = vmor %vm2449, %vm2450
    %v2452 = vsel %vm2451, %v2443, %v2448
    %v2453 = vmul.f32 %v2441, %v2452
    %v2454 = vld [vmem:[#allocation2 + $0x708] sm:$0x1]
    %v2455 = vmul.f32 %v2428, %v2453
    %v2456 = vsub.f32 %v2454, %v2455
    %v2457 = vperm.slane %v2453, 0
    %v2458 = vmul.f32 %v2420, %v2457
    %v2459 = vperm.slane %v2456, 0
    %v2460 = vadd.f32 %v2458, %v2459
    %v2461 = vmax.f32 %v2460, 0.0
    %v2462 = vld [vmem:[#allocation2 + $0x730] sm:$0xff]
    %v2463 = vld [vmem:[#allocation2 + $0x738] sm:$0xff]
    %v2465 = vsel %vm622, %v2461, 0
    %2467 = vmatpush.msra.mxu0 0.0
    %2468 = vmatpush.msra.mxu0 0.0
    %2469 = vmatpush.msra.mxu0 0.0
    %2470 = vmatpush.msra.mxu0 0.0
    %2471 = vmatpush.msra.mxu0 0.0
    %2472 = vmatpush.msra.mxu0 0.0
    %2473 = vmatpush.msra.mxu0 0.0
    %2474 = vmatpush.msra.mxu0 0.0
    %2475 = vmatpush.msra.mxu0 0.0
    %2476 = vmatpush.msra.mxu0 0.0
    %2477 = vmatpush.msra.mxu0 0.0
    %2478 = vmatpush.msra.mxu0 0.0
    %2479 = vmatpush.msra.mxu0 0.0
    %2480 = vmatpush.msra.mxu0 0.0
    %2481 = vmatpush.msra.mxu0 %v2463
    %2482 = vmatpush.msra.mxu0 %v2462
    %2483 = vmatmul.f32.gmra.mxu0 %v2465
    %v2484 = vpop.f32.mrf.mxu0
    %v2485 = vadd.f32 0.0, %v2484
    %2486 = vdwg.mxu0
    %v2487 = vld [vmem:[#allocation2 + $0x710] sm:$0xff]
    %v2488 = vld [vmem:[#allocation2 + $0x718] sm:$0xff]
    %v2489 = vld [vmem:[#allocation2 + $0x720] sm:$0xff]
    %v2490 = vld [vmem:[#allocation2 + $0x728] sm:$0xff]
    %2492 = vrot.lane.b32.xlu0 %v2485, 112
    %v2493 = vpop.permute.xlu0 %2492
    %v2496 = vsel %vm239, %v2489, 0
    %v2499 = vsel %vm239, %v2490, 0
    %2501 = vmatpush.msra.mxu0 0.0
    %2502 = vmatpush.msra.mxu0 0.0
    %2503 = vmatpush.msra.mxu0 0.0
    %2504 = vmatpush.msra.mxu0 0.0
    %2505 = vmatpush.msra.mxu0 0.0
    %2506 = vmatpush.msra.mxu0 0.0
    %2507 = vmatpush.msra.mxu0 0.0
    %2508 = vmatpush.msra.mxu0 0.0
    %2509 = vmatpush.msra.mxu0 0.0
    %2510 = vmatpush.msra.mxu0 0.0
    %2511 = vmatpush.msra.mxu0 0.0
    %2512 = vmatpush.msra.mxu0 0.0
    %2513 = vmatpush.msra.mxu0 0.0
    %2514 = vmatpush.msra.mxu0 0.0
    %2515 = vmatpush.msra.mxu0 0.0
    %2516 = vmatpush.msra.mxu0 %v2493
    %2517 = vmatmul.f32.gmra.mxu0 %v2496
    %v2518 = vpop.f32.mrf.mxu0
    %v2519 = vadd.f32 0.0, %v2518
    %2520 = vmatmul.f32.gmra.mxu0 %v2499
    %v2521 = vpop.f32.mrf.mxu0
    %v2522 = vadd.f32 0.0, %v2521
    %2523 = vdwg.mxu0
    %v2525 = vsel %vm239, %v2487, 0
    %v2528 = vsel %vm239, %v2488, 0
    %2530 = vmatpush.msra.mxu0 0.0
    %2531 = vmatpush.msra.mxu0 0.0
    %2532 = vmatpush.msra.mxu0 0.0
    %2533 = vmatpush.msra.mxu0 0.0
    %2534 = vmatpush.msra.mxu0 0.0
    %2535 = vmatpush.msra.mxu0 0.0
    %2536 = vmatpush.msra.mxu0 0.0
    %2537 = vmatpush.msra.mxu0 0.0
    %2538 = vmatpush.msra.mxu0 0.0
    %2539 = vmatpush.msra.mxu0 0.0
    %2540 = vmatpush.msra.mxu0 0.0
    %2541 = vmatpush.msra.mxu0 0.0
    %2542 = vmatpush.msra.mxu0 0.0
    %2543 = vmatpush.msra.mxu0 0.0
    %2544 = vmatpush.msra.mxu0 0.0
    %2545 = vmatpush.msra.mxu0 %v2485
    %2546 = vmatmul.f32.gmra.mxu0 %v2525
    %v2547 = vpop.f32.mrf.mxu0
    %v2548 = vadd.f32 %v2519, %v2547
    %2549 = vmatmul.f32.gmra.mxu0 %v2528
    %v2550 = vpop.f32.mrf.mxu0
    %v2551 = vadd.f32 %v2522, %v2550
    %2552 = vdwg.mxu0
    %v2553 = vld [vmem:[#allocation2 + $0x740] sm:$0x1]
    %v2554 = vperm.slane %v2553, 0
    %v2555 = vadd.f32 %v2548, %v2554
    %v2556 = vadd.f32 %v2551, %v2554
    %v2557 = vld [vmem:[#allocation2 + $0x748] sm:$0xff]
    %v2558 = vld [vmem:[#allocation2 + $0x750] sm:$0xff]
    %v2559 = vld [vmem:[#allocation2 + $0x758] sm:$0xff]
    %v2560 = vld [vmem:[#allocation2 + $0x760] sm:$0xff]
    %v2562 = vsel %vm622, %v933, 0
    %v2565 = vsel %vm622, %v934, 0
    %2567 = vmatpush.msra.mxu0 0.0
    %2568 = vmatpush.msra.mxu0 0.0
    %2569 = vmatpush.msra.mxu0 0.0
    %2570 = vmatpush.msra.mxu0 0.0
    %2571 = vmatpush.msra.mxu0 0.0
    %2572 = vmatpush.msra.mxu0 0.0
    %2573 = vmatpush.msra.mxu0 0.0
    %2574 = vmatpush.msra.mxu0 0.0
    %2575 = vmatpush.msra.mxu0 0.0
    %2576 = vmatpush.msra.mxu0 0.0
    %2577 = vmatpush.msra.mxu0 0.0
    %2578 = vmatpush.msra.mxu0 0.0
    %2579 = vmatpush.msra.mxu0 0.0
    %2580 = vmatpush.msra.mxu0 0.0
    %2581 = vmatpush.msra.mxu0 %v2560
    %2582 = vmatpush.msra.mxu0 %v2559
    %2583 = vmatmul.f32.gmra.mxu0 %v2562
    %v2584 = vpop.f32.mrf.mxu0
    %v2585 = vadd.f32 0.0, %v2584
    %2586 = vmatmul.f32.gmra.mxu0 %v2565
    %v2587 = vpop.f32.mrf.mxu0
    %v2588 = vadd.f32 0.0, %v2587
    %2589 = vdwg.mxu0
    %v2591 = vsel %vm622, %v2555, 0
    %v2594 = vsel %vm622, %v2556, 0
    %2596 = vmatpush.msra.mxu0 0.0
    %2597 = vmatpush.msra.mxu0 0.0
    %2598 = vmatpush.msra.mxu0 0.0
    %2599 = vmatpush.msra.mxu0 0.0
    %2600 = vmatpush.msra.mxu0 0.0
    %2601 = vmatpush.msra.mxu0 0.0
    %2602 = vmatpush.msra.mxu0 0.0
    %2603 = vmatpush.msra.mxu0 0.0
    %2604 = vmatpush.msra.mxu0 0.0
    %2605 = vmatpush.msra.mxu0 0.0
    %2606 = vmatpush.msra.mxu0 0.0
    %2607 = vmatpush.msra.mxu0 0.0
    %2608 = vmatpush.msra.mxu0 0.0
    %2609 = vmatpush.msra.mxu0 0.0
    %2610 = vmatpush.msra.mxu0 %v2558
    %2611 = vmatpush.msra.mxu0 %v2557
    %2612 = vmatmul.f32.gmra.mxu0 %v2591
    %v2613 = vpop.f32.mrf.mxu0
    %v2614 = vadd.f32 %v2585, %v2613
    %2615 = vmatmul.f32.gmra.mxu0 %v2594
    %v2616 = vpop.f32.mrf.mxu0
    %v2617 = vadd.f32 %v2588, %v2616
    %2618 = vdwg.mxu0
    %v2619 = vld [vmem:[#allocation2 + $0x768] sm:$0x1]
    %v2620 = vperm.slane %v2619, 0
    %v2621 = vadd.f32 %v2614, %v2620
    %v2622 = vadd.f32 %v2617, %v2620
    %v2623 = vmax.f32 %v2621, 0.0
    %v2624 = vmax.f32 %v2622, 0.0
    %v2625 = vld [vmem:[#allocation2 + $0x770] sm:$0xff]
    %v2626 = vld [vmem:[#allocation2 + $0x778] sm:$0xff]
    %v2627 = vld [vmem:[#allocation2 + $0x780] sm:$0xff]
    %v2628 = vld [vmem:[#allocation2 + $0x788] sm:$0xff]
    %v2630 = vsel %vm622, %v2623, 0
    %v2633 = vsel %vm622, %v2624, 0
    %2635 = vmatpush.msra.mxu0 0.0
    %2636 = vmatpush.msra.mxu0 0.0
    %2637 = vmatpush.msra.mxu0 0.0
    %2638 = vmatpush.msra.mxu0 0.0
    %2639 = vmatpush.msra.mxu0 0.0
    %2640 = vmatpush.msra.mxu0 0.0
    %2641 = vmatpush.msra.mxu0 0.0
    %2642 = vmatpush.msra.mxu0 0.0
    %2643 = vmatpush.msra.mxu0 0.0
    %2644 = vmatpush.msra.mxu0 0.0
    %2645 = vmatpush.msra.mxu0 0.0
    %2646 = vmatpush.msra.mxu0 0.0
    %2647 = vmatpush.msra.mxu0 0.0
    %2648 = vmatpush.msra.mxu0 0.0
    %2649 = vmatpush.msra.mxu0 %v2628
    %2650 = vmatpush.msra.mxu0 %v2627
    %2651 = vmatmul.f32.gmra.mxu0 %v2630
    %v2652 = vpop.f32.mrf.mxu0
    %v2653 = vadd.f32 0.0, %v2652
    %2654 = vmatmul.f32.gmra.mxu0 %v2633
    %v2655 = vpop.f32.mrf.mxu0
    %v2656 = vadd.f32 0.0, %v2655
    %2657 = vdwg.mxu0
    %v2658 = vld [vmem:[#allocation2 + $0x790] sm:$0xff]
    %v2659 = vld [vmem:[#allocation2 + $0x798] sm:$0xff]
    %2660 = vmatpush.msra.mxu0 0.0
    %2661 = vmatpush.msra.mxu0 0.0
    %2662 = vmatpush.msra.mxu0 0.0
    %2663 = vmatpush.msra.mxu0 0.0
    %2664 = vmatpush.msra.mxu0 0.0
    %2665 = vmatpush.msra.mxu0 0.0
    %2666 = vmatpush.msra.mxu0 0.0
    %2667 = vmatpush.msra.mxu0 0.0
    %2668 = vmatpush.msra.mxu0 0.0
    %2669 = vmatpush.msra.mxu0 0.0
    %2670 = vmatpush.msra.mxu0 0.0
    %2671 = vmatpush.msra.mxu0 0.0
    %2672 = vmatpush.msra.mxu0 0.0
    %2673 = vmatpush.msra.mxu0 0.0
    %2674 = vmatpush.msra.mxu0 %v2659
    %2675 = vmatpush.msra.mxu0 %v2658
    %2676 = vmatmul.f32.gmra.mxu0 %v2630
    %v2677 = vpop.f32.mrf.mxu0
    %v2678 = vadd.f32 0.0, %v2677
    %2679 = vmatmul.f32.gmra.mxu0 %v2633
    %v2680 = vpop.f32.mrf.mxu0
    %v2681 = vadd.f32 0.0, %v2680
    %2682 = vdwg.mxu0
    %2683 = vmatpush.msra.mxu0 0.0
    %2684 = vmatpush.msra.mxu0 0.0
    %2685 = vmatpush.msra.mxu0 0.0
    %2686 = vmatpush.msra.mxu0 0.0
    %2687 = vmatpush.msra.mxu0 0.0
    %2688 = vmatpush.msra.mxu0 0.0
    %2689 = vmatpush.msra.mxu0 0.0
    %2690 = vmatpush.msra.mxu0 0.0
    %2691 = vmatpush.msra.mxu0 0.0
    %2692 = vmatpush.msra.mxu0 0.0
    %2693 = vmatpush.msra.mxu0 0.0
    %2694 = vmatpush.msra.mxu0 0.0
    %2695 = vmatpush.msra.mxu0 0.0
    %2696 = vmatpush.msra.mxu0 0.0
    %2697 = vmatpush.msra.mxu0 %v2656
    %2698 = vmatpush.msra.mxu0 %v2653
    %2699 = vmatmul.f32.gmra.mxu0 %v624
    %v2700 = vpop.f32.mrf.mxu0
    %v2701 = vadd.f32 0.0, %v2700
    %2702 = vmatmul.f32.gmra.mxu0 %v627
    %v2703 = vpop.f32.mrf.mxu0
    %v2704 = vadd.f32 0.0, %v2703
    %2705 = vdwg.mxu0
    %2706 = vmatpush.msra.mxu0 0.0
    %2707 = vmatpush.msra.mxu0 0.0
    %2708 = vmatpush.msra.mxu0 0.0
    %2709 = vmatpush.msra.mxu0 0.0
    %2710 = vmatpush.msra.mxu0 0.0
    %2711 = vmatpush.msra.mxu0 0.0
    %2712 = vmatpush.msra.mxu0 0.0
    %2713 = vmatpush.msra.mxu0 0.0
    %2714 = vmatpush.msra.mxu0 0.0
    %2715 = vmatpush.msra.mxu0 0.0
    %2716 = vmatpush.msra.mxu0 0.0
    %2717 = vmatpush.msra.mxu0 0.0
    %2718 = vmatpush.msra.mxu0 0.0
    %2719 = vmatpush.msra.mxu0 0.0
    %2720 = vmatpush.msra.mxu0 %v2626
    %2721 = vmatpush.msra.mxu0 %v2625
    %2722 = vmatmul.f32.gmra.mxu0 %v2630
    %v2723 = vpop.f32.mrf.mxu0
    %v2724 = vadd.f32 %v2701, %v2723
    %2725 = vmatmul.f32.gmra.mxu0 %v2633
    %v2726 = vpop.f32.mrf.mxu0
    %v2727 = vadd.f32 %v2704, %v2726
    %2728 = vdwg.mxu0
    %2729 = vmatpush.msra.mxu0 0.0
    %2730 = vmatpush.msra.mxu0 0.0
    %2731 = vmatpush.msra.mxu0 0.0
    %2732 = vmatpush.msra.mxu0 0.0
    %2733 = vmatpush.msra.mxu0 0.0
    %2734 = vmatpush.msra.mxu0 0.0
    %2735 = vmatpush.msra.mxu0 0.0
    %2736 = vmatpush.msra.mxu0 0.0
    %2737 = vmatpush.msra.mxu0 0.0
    %2738 = vmatpush.msra.mxu0 0.0
    %2739 = vmatpush.msra.mxu0 0.0
    %2740 = vmatpush.msra.mxu0 0.0
    %2741 = vmatpush.msra.mxu0 0.0
    %2742 = vmatpush.msra.mxu0 0.0
    %2743 = vmatpush.msra.mxu0 %v2681
    %2744 = vmatpush.msra.mxu0 %v2678
    %2745 = vmatmul.f32.gmra.mxu0 %v678
    %v2746 = vpop.f32.mrf.mxu0
    %v2747 = vadd.f32 0.0, %v2746
    %2748 = vmatmul.f32.gmra.mxu0 %v681
    %v2749 = vpop.f32.mrf.mxu0
    %v2750 = vadd.f32 0.0, %v2749
    %2751 = vdwg.mxu0
    %v2752 = vadd.f32 %v2724, %v2747
    %v2753 = vadd.f32 %v2727, %v2750
    %v2754 = vsel %vm239, %v2752, 0.0
    %v2755 = vsel %vm239, %v2753, 0.0
    %v2756 = vadd.f32 %v2754, %v2755
    %v2757 = vrot.slane %v2756, 4
    %v2758 = vadd.f32 %v2756, %v2757
    %v2759 = vrot.slane %v2758, 2
    %v2760 = vadd.f32 %v2758, %v2759
    %v2761 = vrot.slane %v2760, 1
    %v2762 = vadd.f32 %v2760, %v2761
    %v2763 = vmul.f32 %v2762, 0.0625
    %v2764 = vmul.f32 %v2752, %v2752
    %v2765 = vmul.f32 %v2753, %v2753
    %v2766 = vsel %vm239, %v2764, 0.0
    %v2767 = vsel %vm239, %v2765, 0.0
    %v2768 = vadd.f32 %v2766, %v2767
    %v2769 = vrot.slane %v2768, 4
    %v2770 = vadd.f32 %v2768, %v2769
    %v2771 = vrot.slane %v2770, 2
    %v2772 = vadd.f32 %v2770, %v2771
    %v2773 = vrot.slane %v2772, 1
    %v2774 = vadd.f32 %v2772, %v2773
    %v2775 = vmul.f32 %v2774, 0.0625
    %v2776 = vmul.f32 %v2763, %v2763
    %v2777 = vsub.f32 %v2775, %v2776
    %v2778 = vmax.f32 %v2777, 0.0
    %v2779 = vld [vmem:[#allocation2 + $0x7a0] sm:$0x1]
    %v2780 = vadd.f32 %v2778, 1e-05
    %v2781 = vrsqrt.pop %v2780
    %v2782 = vmul.f32 %v2781, %v2780
    %v2783 = vmul.f32 %v2782, %v2781
    %v2784 = vmul.f32 0.5, %v2783
    %v2785 = vsub.f32 1.5, %v2784
    %v2786 = vmul.f32 %v2781, %v2785
    %vm2787 = vweird.f32 %v2780
    %vm2788 = vweird.f32 %v2781
    %vm2789 = vmor %vm2787, %vm2788
    %v2790 = vsel %vm2789, %v2781, %v2786
    %v2791 = vmul.f32 %v2779, %v2790
    %v2792 = vld [vmem:[#allocation2 + $0x7a8] sm:$0x1]
    %v2793 = vmul.f32 %v2763, %v2791
    %v2794 = vsub.f32 %v2792, %v2793
    %v2795 = vperm.slane %v2791, 0
    %v2796 = vmul.f32 %v2752, %v2795
    %v2797 = vmul.f32 %v2753, %v2795
    %v2798 = vperm.slane %v2794, 0
    %v2799 = vadd.f32 %v2796, %v2798
    %v2800 = vadd.f32 %v2797, %v2798
    %v2801 = vmax.f32 %v2799, 0.0
    %v2802 = vmax.f32 %v2800, 0.0
    %v2803 = vld [vmem:[#allocation2 + $0x7f0] sm:$0xff]
    %v2805 = vsel %vm239, %v2801, 0
    %v2808 = vsel %vm239, %v2802, 0
    %2810 = vmatpush.msra.mxu0 0.0
    %2811 = vmatpush.msra.mxu0 0.0
    %2812 = vmatpush.msra.mxu0 0.0
    %2813 = vmatpush.msra.mxu0 0.0
    %2814 = vmatpush.msra.mxu0 0.0
    %2815 = vmatpush.msra.mxu0 0.0
    %2816 = vmatpush.msra.mxu0 0.0
    %2817 = vmatpush.msra.mxu0 0.0
    %2818 = vmatpush.msra.mxu0 0.0
    %2819 = vmatpush.msra.mxu0 0.0
    %2820 = vmatpush.msra.mxu0 0.0
    %2821 = vmatpush.msra.mxu0 0.0
    %2822 = vmatpush.msra.mxu0 0.0
    %2823 = vmatpush.msra.mxu0 0.0
    %2824 = vmatpush.msra.mxu0 0.0
    %2825 = vmatpush.msra.mxu0 %v2803
    %2826 = vmatmul.f32.gmra.mxu0 %v2805
    %v2827 = vpop.f32.mrf.mxu0
    %v2828 = vadd.f32 0.0, %v2827
    %2829 = vmatmul.f32.gmra.mxu0 %v2808
    %v2830 = vpop.f32.mrf.mxu0
    %v2831 = vadd.f32 0.0, %v2830
    %2832 = vdwg.mxu0
    %v2833 = vld [vmem:[#allocation2 + $0x7b0] sm:$0xff]
    %v2834 = vld [vmem:[#allocation2 + $0x7b8] sm:$0xff]
    %v2835 = vld [vmem:[#allocation2 + $0x7c0] sm:$0xff]
    %v2836 = vld [vmem:[#allocation2 + $0x7c8] sm:$0xff]
    %v2837 = vld [vmem:[#allocation2 + $0x7d0] sm:$0xff]
    %v2838 = vld [vmem:[#allocation2 + $0x7d8] sm:$0xff]
    %v2839 = vld [vmem:[#allocation2 + $0x7e0] sm:$0xff]
    %v2840 = vld [vmem:[#allocation2 + $0x7e8] sm:$0xff]
    %2843 = vrot.lane.b32.xlu0 %v2828, 120
    %v2844 = vpop.permute.xlu0 %2843
    %2845 = vrot.lane.b32.xlu0 %v2831, 120
    %v2846 = vpop.permute.xlu0 %2845
    %v2850 = vsel %vm622, %v2837, 0
    %v2853 = vsel %vm622, %v2838, 0
    %v2856 = vsel %vm622, %v2839, 0
    %v2859 = vsel %vm622, %v2840, 0
    %2861 = vmatpush.msra.mxu0 0.0
    %2862 = vmatpush.msra.mxu0 0.0
    %2863 = vmatpush.msra.mxu0 0.0
    %2864 = vmatpush.msra.mxu0 0.0
    %2865 = vmatpush.msra.mxu0 0.0
    %2866 = vmatpush.msra.mxu0 0.0
    %2867 = vmatpush.msra.mxu0 0.0
    %2868 = vmatpush.msra.mxu0 0.0
    %2869 = vmatpush.msra.mxu0 0.0
    %2870 = vmatpush.msra.mxu0 0.0
    %2871 = vmatpush.msra.mxu0 0.0
    %2872 = vmatpush.msra.mxu0 0.0
    %2873 = vmatpush.msra.mxu0 0.0
    %2874 = vmatpush.msra.mxu0 0.0
    %2875 = vmatpush.msra.mxu0 %v2846
    %2876 = vmatpush.msra.mxu0 %v2844
    %2877 = vmatmul.f32.gmra.mxu0 %v2850
    %v2878 = vpop.f32.mrf.mxu0
    %v2879 = vadd.f32 0.0, %v2878
    %2880 = vmatmul.f32.gmra.mxu0 %v2853
    %v2881 = vpop.f32.mrf.mxu0
    %v2882 = vadd.f32 0.0, %v2881
    %2883 = vmatmul.f32.gmra.mxu0 %v2856
    %v2884 = vpop.f32.mrf.mxu0
    %v2885 = vadd.f32 0.0, %v2884
    %2886 = vmatmul.f32.gmra.mxu0 %v2859
    %v2887 = vpop.f32.mrf.mxu0
    %v2888 = vadd.f32 0.0, %v2887
    %2889 = vdwg.mxu0
    %v2891 = vsel %vm622, %v2833, 0
    %v2894 = vsel %vm622, %v2834, 0
    %v2897 = vsel %vm622, %v2835, 0
    %v2900 = vsel %vm622, %v2836, 0
    %2902 = vmatpush.msra.mxu0 0.0
    %2903 = vmatpush.msra.mxu0 0.0
    %2904 = vmatpush.msra.mxu0 0.0
    %2905 = vmatpush.msra.mxu0 0.0
    %2906 = vmatpush.msra.mxu0 0.0
    %2907 = vmatpush.msra.mxu0 0.0
    %2908 = vmatpush.msra.mxu0 0.0
    %2909 = vmatpush.msra.mxu0 0.0
    %2910 = vmatpush.msra.mxu0 0.0
    %2911 = vmatpush.msra.mxu0 0.0
    %2912 = vmatpush.msra.mxu0 0.0
    %2913 = vmatpush.msra.mxu0 0.0
    %2914 = vmatpush.msra.mxu0 0.0
    %2915 = vmatpush.msra.mxu0 0.0
    %2916 = vmatpush.msra.mxu0 %v2831
    %2917 = vmatpush.msra.mxu0 %v2828
    %2918 = vmatmul.f32.gmra.mxu0 %v2891
    %v2919 = vpop.f32.mrf.mxu0
    %v2920 = vadd.f32 %v2879, %v2919
    %2921 = vmatmul.f32.gmra.mxu0 %v2894
    %v2922 = vpop.f32.mrf.mxu0
    %v2923 = vadd.f32 %v2882, %v2922
    %2924 = vmatmul.f32.gmra.mxu0 %v2897
    %v2925 = vpop.f32.mrf.mxu0
    %v2926 = vadd.f32 %v2885, %v2925
    %2927 = vmatmul.f32.gmra.mxu0 %v2900
    %v2928 = vpop.f32.mrf.mxu0
    %v2929 = vadd.f32 %v2888, %v2928
    %2930 = vdwg.mxu0
    %v2931 = vld [vmem:[#allocation2 + $0x7f8] sm:$0x1]
    %v2932 = vperm.slane %v2931, 0
    %v2933 = vadd.f32 %v2920, %v2932
    %v2934 = vadd.f32 %v2923, %v2932
    %v2935 = vadd.f32 %v2926, %v2932
    %v2936 = vadd.f32 %v2929, %v2932
    %v2937 = vld [vmem:[#allocation2 + $0x800] sm:$0xff]
    %v2938 = vld [vmem:[#allocation2 + $0x808] sm:$0xff]
    %v2939 = vld [vmem:[#allocation2 + $0x810] sm:$0xff]
    %v2940 = vld [vmem:[#allocation2 + $0x818] sm:$0xff]
    %v2942 = vsel %vm239, %v530, 0
    %v2945 = vsel %vm239, %v531, 0
    %v2948 = vsel %vm239, %v532, 0
    %v2951 = vsel %vm239, %v533, 0
    %2953 = vmatpush.msra.mxu0 0.0
    %2954 = vmatpush.msra.mxu0 0.0
    %2955 = vmatpush.msra.mxu0 0.0
    %2956 = vmatpush.msra.mxu0 0.0
    %2957 = vmatpush.msra.mxu0 0.0
    %2958 = vmatpush.msra.mxu0 0.0
    %2959 = vmatpush.msra.mxu0 0.0
    %2960 = vmatpush.msra.mxu0 0.0
    %2961 = vmatpush.msra.mxu0 0.0
    %2962 = vmatpush.msra.mxu0 0.0
    %2963 = vmatpush.msra.mxu0 0.0
    %2964 = vmatpush.msra.mxu0 0.0
    %2965 = vmatpush.msra.mxu0 0.0
    %2966 = vmatpush.msra.mxu0 0.0
    %2967 = vmatpush.msra.mxu0 0.0
    %2968 = vmatpush.msra.mxu0 %v2940
    %2969 = vmatmul.f32.gmra.mxu0 %v2942
    %v2970 = vpop.f32.mrf.mxu0
    %v2971 = vadd.f32 0.0, %v2970
    %2972 = vmatmul.f32.gmra.mxu0 %v2945
    %v2973 = vpop.f32.mrf.mxu0
    %v2974 = vadd.f32 0.0, %v2973
    %2975 = vmatmul.f32.gmra.mxu0 %v2948
    %v2976 = vpop.f32.mrf.mxu0
    %v2977 = vadd.f32 0.0, %v2976
    %2978 = vmatmul.f32.gmra.mxu0 %v2951
    %v2979 = vpop.f32.mrf.mxu0
    %v2980 = vadd.f32 0.0, %v2979
    %2981 = vdwg.mxu0
    %v2983 = vsel %vm239, %v2933, 0
    %v2986 = vsel %vm239, %v2934, 0
    %v2989 = vsel %vm239, %v2935, 0
    %v2992 = vsel %vm239, %v2936, 0
    %2994 = vmatpush.msra.mxu0 0.0
    %2995 = vmatpush.msra.mxu0 0.0
    %2996 = vmatpush.msra.mxu0 0.0
    %2997 = vmatpush.msra.mxu0 0.0
    %2998 = vmatpush.msra.mxu0 0.0
    %2999 = vmatpush.msra.mxu0 0.0
    %3000 = vmatpush.msra.mxu0 0.0
    %3001 = vmatpush.msra.mxu0 0.0
    %3002 = vmatpush.msra.mxu0 0.0
    %3003 = vmatpush.msra.mxu0 0.0
    %3004 = vmatpush.msra.mxu0 0.0
    %3005 = vmatpush.msra.mxu0 0.0
    %3006 = vmatpush.msra.mxu0 0.0
    %3007 = vmatpush.msra.mxu0 0.0
    %3008 = vmatpush.msra.mxu0 0.0
    %3009 = vmatpush.msra.mxu0 %v2937
    %3010 = vmatmul.f32.gmra.mxu0 %v2983
    %v3011 = vpop.f32.mrf.mxu0
    %v3012 = vadd.f32 %v2971, %v3011
    %3013 = vmatmul.f32.gmra.mxu0 %v2986
    %v3014 = vpop.f32.mrf.mxu0
    %v3015 = vadd.f32 %v2974, %v3014
    %3016 = vmatmul.f32.gmra.mxu0 %v2989
    %v3017 = vpop.f32.mrf.mxu0
    %v3018 = vadd.f32 %v2977, %v3017
    %3019 = vmatmul.f32.gmra.mxu0 %v2992
    %v3020 = vpop.f32.mrf.mxu0
    %v3021 = vadd.f32 %v2980, %v3020
    %3022 = vdwg.mxu0
    %v3023 = vld [vmem:[#allocation2 + $0x820] sm:$0xff]
    %3024 = vmatpush.msra.mxu0 0.0
    %3025 = vmatpush.msra.mxu0 0.0
    %3026 = vmatpush.msra.mxu0 0.0
    %3027 = vmatpush.msra.mxu0 0.0
    %3028 = vmatpush.msra.mxu0 0.0
    %3029 = vmatpush.msra.mxu0 0.0
    %3030 = vmatpush.msra.mxu0 0.0
    %3031 = vmatpush.msra.mxu0 0.0
    %3032 = vmatpush.msra.mxu0 0.0
    %3033 = vmatpush.msra.mxu0 0.0
    %3034 = vmatpush.msra.mxu0 0.0
    %3035 = vmatpush.msra.mxu0 0.0
    %3036 = vmatpush.msra.mxu0 0.0
    %3037 = vmatpush.msra.mxu0 0.0
    %3038 = vmatpush.msra.mxu0 0.0
    %3039 = vmatpush.msra.mxu0 %v3023
    %3040 = vmatmul.f32.gmra.mxu0 %v2942
    %v3041 = vpop.f32.mrf.mxu0
    %v3042 = vadd.f32 0.0, %v3041
    %3043 = vmatmul.f32.gmra.mxu0 %v2945
    %v3044 = vpop.f32.mrf.mxu0
    %v3045 = vadd.f32 0.0, %v3044
    %3046 = vmatmul.f32.gmra.mxu0 %v2948
    %v3047 = vpop.f32.mrf.mxu0
    %v3048 = vadd.f32 0.0, %v3047
    %3049 = vmatmul.f32.gmra.mxu0 %v2951
    %v3050 = vpop.f32.mrf.mxu0
    %v3051 = vadd.f32 0.0, %v3050
    %3052 = vdwg.mxu0
    %3053 = vmatpush.msra.mxu0 0.0
    %3054 = vmatpush.msra.mxu0 0.0
    %3055 = vmatpush.msra.mxu0 0.0
    %3056 = vmatpush.msra.mxu0 0.0
    %3057 = vmatpush.msra.mxu0 0.0
    %3058 = vmatpush.msra.mxu0 0.0
    %3059 = vmatpush.msra.mxu0 0.0
    %3060 = vmatpush.msra.mxu0 0.0
    %3061 = vmatpush.msra.mxu0 0.0
    %3062 = vmatpush.msra.mxu0 0.0
    %3063 = vmatpush.msra.mxu0 0.0
    %3064 = vmatpush.msra.mxu0 0.0
    %3065 = vmatpush.msra.mxu0 0.0
    %3066 = vmatpush.msra.mxu0 0.0
    %3067 = vmatpush.msra.mxu0 0.0
    %3068 = vmatpush.msra.mxu0 %v2938
    %3069 = vmatmul.f32.gmra.mxu0 %v2983
    %v3070 = vpop.f32.mrf.mxu0
    %v3071 = vadd.f32 %v3042, %v3070
    %3072 = vmatmul.f32.gmra.mxu0 %v2986
    %v3073 = vpop.f32.mrf.mxu0
    %v3074 = vadd.f32 %v3045, %v3073
    %3075 = vmatmul.f32.gmra.mxu0 %v2989
    %v3076 = vpop.f32.mrf.mxu0
    %v3077 = vadd.f32 %v3048, %v3076
    %3078 = vmatmul.f32.gmra.mxu0 %v2992
    %v3079 = vpop.f32.mrf.mxu0
    %v3080 = vadd.f32 %v3051, %v3079
    %3081 = vdwg.mxu0
    %v3082 = vld [vmem:[#allocation2 + $0x828] sm:$0xff]
    %3083 = vmatpush.msra.mxu0 0.0
    %3084 = vmatpush.msra.mxu0 0.0
    %3085 = vmatpush.msra.mxu0 0.0
    %3086 = vmatpush.msra.mxu0 0.0
    %3087 = vmatpush.msra.mxu0 0.0
    %3088 = vmatpush.msra.mxu0 0.0
    %3089 = vmatpush.msra.mxu0 0.0
    %3090 = vmatpush.msra.mxu0 0.0
    %3091 = vmatpush.msra.mxu0 0.0
    %3092 = vmatpush.msra.mxu0 0.0
    %3093 = vmatpush.msra.mxu0 0.0
    %3094 = vmatpush.msra.mxu0 0.0
    %3095 = vmatpush.msra.mxu0 0.0
    %3096 = vmatpush.msra.mxu0 0.0
    %3097 = vmatpush.msra.mxu0 0.0
    %3098 = vmatpush.msra.mxu0 %v3082
    %3099 = vmatmul.f32.gmra.mxu0 %v2942
    %v3100 = vpop.f32.mrf.mxu0
    %v3101 = vadd.f32 0.0, %v3100
    %3102 = vmatmul.f32.gmra.mxu0 %v2945
    %v3103 = vpop.f32.mrf.mxu0
    %v3104 = vadd.f32 0.0, %v3103
    %3105 = vmatmul.f32.gmra.mxu0 %v2948
    %v3106 = vpop.f32.mrf.mxu0
    %v3107 = vadd.f32 0.0, %v3106
    %3108 = vmatmul.f32.gmra.mxu0 %v2951
    %v3109 = vpop.f32.mrf.mxu0
    %v3110 = vadd.f32 0.0, %v3109
    %3111 = vdwg.mxu0
    %3112 = vmatpush.msra.mxu0 0.0
    %3113 = vmatpush.msra.mxu0 0.0
    %3114 = vmatpush.msra.mxu0 0.0
    %3115 = vmatpush.msra.mxu0 0.0
    %3116 = vmatpush.msra.mxu0 0.0
    %3117 = vmatpush.msra.mxu0 0.0
    %3118 = vmatpush.msra.mxu0 0.0
    %3119 = vmatpush.msra.mxu0 0.0
    %3120 = vmatpush.msra.mxu0 0.0
    %3121 = vmatpush.msra.mxu0 0.0
    %3122 = vmatpush.msra.mxu0 0.0
    %3123 = vmatpush.msra.mxu0 0.0
    %3124 = vmatpush.msra.mxu0 0.0
    %3125 = vmatpush.msra.mxu0 0.0
    %3126 = vmatpush.msra.mxu0 0.0
    %3127 = vmatpush.msra.mxu0 %v2939
    %3128 = vmatmul.f32.gmra.mxu0 %v2983
    %v3129 = vpop.f32.mrf.mxu0
    %v3130 = vadd.f32 %v3101, %v3129
    %3131 = vmatmul.f32.gmra.mxu0 %v2986
    %v3132 = vpop.f32.mrf.mxu0
    %v3133 = vadd.f32 %v3104, %v3132
    %3134 = vmatmul.f32.gmra.mxu0 %v2989
    %v3135 = vpop.f32.mrf.mxu0
    %v3136 = vadd.f32 %v3107, %v3135
    %3137 = vmatmul.f32.gmra.mxu0 %v2992
    %v3138 = vpop.f32.mrf.mxu0
    %v3139 = vadd.f32 %v3110, %v3138
    %3140 = vdwg.mxu0
    %3141 = vmatpush.msra.mxu0 0.0
    %3142 = vmatpush.msra.mxu0 0.0
    %3143 = vmatpush.msra.mxu0 0.0
    %3144 = vmatpush.msra.mxu0 0.0
    %3145 = vmatpush.msra.mxu0 0.0
    %3146 = vmatpush.msra.mxu0 0.0
    %3147 = vmatpush.msra.mxu0 0.0
    %3148 = vmatpush.msra.mxu0 0.0
    %3149 = vmatpush.msra.mxu0 0.0
    %3150 = vmatpush.msra.mxu0 0.0
    %3151 = vmatpush.msra.mxu0 0.0
    %3152 = vmatpush.msra.mxu0 0.0
    %3153 = vmatpush.msra.mxu0 %v3080
    %3154 = vmatpush.msra.mxu0 %v3077
    %3155 = vmatpush.msra.mxu0 %v3074
    %3156 = vmatpush.msra.mxu0 %v3071
    %3157 = vmatmul.f32.gmra.mxu0 %v118
    %v3158 = vpop.f32.mrf.mxu0
    %v3159 = vadd.f32 0.0, %v3158
    %3160 = vmatmul.f32.gmra.mxu0 %v121
    %v3161 = vpop.f32.mrf.mxu0
    %v3162 = vadd.f32 0.0, %v3161
    %3163 = vmatmul.f32.gmra.mxu0 %v124
    %v3164 = vpop.f32.mrf.mxu0
    %v3165 = vadd.f32 0.0, %v3164
    %3166 = vmatmul.f32.gmra.mxu0 %v127
    %v3167 = vpop.f32.mrf.mxu0
    %v3168 = vadd.f32 0.0, %v3167
    %3169 = vdwg.mxu0
    %v3170 = vadd.f32 %v3012, %v3159
    %v3171 = vadd.f32 %v3015, %v3162
    %v3172 = vadd.f32 %v3018, %v3165
    %v3173 = vadd.f32 %v3021, %v3168
    %3174 = vmatpush.msra.mxu0 0.0
    %3175 = vmatpush.msra.mxu0 0.0
    %3176 = vmatpush.msra.mxu0 0.0
    %3177 = vmatpush.msra.mxu0 0.0
    %3178 = vmatpush.msra.mxu0 0.0
    %3179 = vmatpush.msra.mxu0 0.0
    %3180 = vmatpush.msra.mxu0 0.0
    %3181 = vmatpush.msra.mxu0 0.0
    %3182 = vmatpush.msra.mxu0 0.0
    %3183 = vmatpush.msra.mxu0 0.0
    %3184 = vmatpush.msra.mxu0 0.0
    %3185 = vmatpush.msra.mxu0 0.0
    %3186 = vmatpush.msra.mxu0 %v3139
    %3187 = vmatpush.msra.mxu0 %v3136
    %3188 = vmatpush.msra.mxu0 %v3133
    %3189 = vmatpush.msra.mxu0 %v3130
    %3190 = vmatmul.f32.gmra.mxu0 %v195
    %v3191 = vpop.f32.mrf.mxu0
    %v3192 = vadd.f32 0.0, %v3191
    %3193 = vmatmul.f32.gmra.mxu0 %v198
    %v3194 = vpop.f32.mrf.mxu0
    %v3195 = vadd.f32 0.0, %v3194
    %3196 = vmatmul.f32.gmra.mxu0 %v201
    %v3197 = vpop.f32.mrf.mxu0
    %v3198 = vadd.f32 0.0, %v3197
    %3199 = vmatmul.f32.gmra.mxu0 %v204
    %v3200 = vpop.f32.mrf.mxu0
    %v3201 = vadd.f32 0.0, %v3200
    %3202 = vdwg.mxu0
    %v3203 = vadd.f32 %v3170, %v3192
    %v3204 = vadd.f32 %v3171, %v3195
    %v3205 = vadd.f32 %v3172, %v3198
    %v3206 = vadd.f32 %v3173, %v3201
    %v3207 = vsel %vm239, %v3203, 0.0
    %v3208 = vsel %vm239, %v3204, 0.0
    %v3209 = vadd.f32 %v3207, %v3208
    %v3210 = vsel %vm239, %v3205, 0.0
    %v3211 = vadd.f32 %v3209, %v3210
    %v3212 = vsel %vm239, %v3206, 0.0
    %v3213 = vadd.f32 %v3211, %v3212
    %v3214 = vrot.slane %v3213, 4
    %v3215 = vadd.f32 %v3213, %v3214
    %v3216 = vrot.slane %v3215, 2
    %v3217 = vadd.f32 %v3215, %v3216
    %v3218 = vrot.slane %v3217, 1
    %v3219 = vadd.f32 %v3217, %v3218
    %v3220 = vmul.f32 %v3219, 0.03125
    %v3221 = vmul.f32 %v3203, %v3203
    %v3222 = vmul.f32 %v3204, %v3204
    %v3223 = vmul.f32 %v3205, %v3205
    %v3224 = vmul.f32 %v3206, %v3206
    %v3225 = vsel %vm239, %v3221, 0.0
    %v3226 = vsel %vm239, %v3222, 0.0
    %v3227 = vadd.f32 %v3225, %v3226
    %v3228 = vsel %vm239, %v3223, 0.0
    %v3229 = vadd.f32 %v3227, %v3228
    %v3230 = vsel %vm239, %v3224, 0.0
    %v3231 = vadd.f32 %v3229, %v3230
    %v3232 = vrot.slane %v3231, 4
    %v3233 = vadd.f32 %v3231, %v3232
    %v3234 = vrot.slane %v3233, 2
    %v3235 = vadd.f32 %v3233, %v3234
    %v3236 = vrot.slane %v3235, 1
    %v3237 = vadd.f32 %v3235, %v3236
    %v3238 = vmul.f32 %v3237, 0.03125
    %v3239 = vmul.f32 %v3220, %v3220
    %v3240 = vsub.f32 %v3238, %v3239
    %v3241 = vmax.f32 %v3240, 0.0
    %v3242 = vld [vmem:[#allocation2 + $0x830] sm:$0x1]
    %v3243 = vadd.f32 %v3241, 1e-05
    %v3244 = vrsqrt.pop %v3243
    %v3245 = vmul.f32 %v3244, %v3243
    %v3246 = vmul.f32 %v3245, %v3244
    %v3247 = vmul.f32 0.5, %v3246
    %v3248 = vsub.f32 1.5, %v3247
    %v3249 = vmul.f32 %v3244, %v3248
    %vm3250 = vweird.f32 %v3243
    %vm3251 = vweird.f32 %v3244
    %vm3252 = vmor %vm3250, %vm3251
    %v3253 = vsel %vm3252, %v3244, %v3249
    %v3254 = vmul.f32 %v3242, %v3253
    %v3255 = vld [vmem:[#allocation2 + $0x838] sm:$0x1]
    %v3256 = vmul.f32 %v3220, %v3254
    %v3257 = vsub.f32 %v3255, %v3256
    %v3258 = vperm.slane %v3254, 0
    %v3259 = vmul.f32 %v3203, %v3258
    %v3260 = vmul.f32 %v3204, %v3258
    %v3261 = vmul.f32 %v3205, %v3258
    %v3262 = vmul.f32 %v3206, %v3258
    %v3263 = vperm.slane %v3257, 0
    %v3264 = vadd.f32 %v3259, %v3263
    %v3265 = vadd.f32 %v3260, %v3263
    %v3266 = vadd.f32 %v3261, %v3263
    %v3267 = vadd.f32 %v3262, %v3263
    %v3268 = vmax.f32 %v3264, 0.0
    %v3269 = vmax.f32 %v3265, 0.0
    %v3270 = vmax.f32 %v3266, 0.0
    %v3271 = vmax.f32 %v3267, 0.0
    %v3272 = vld [vmem:[#allocation2 + $0x840] sm:$0xff]
    %v3273 = vld [vmem:[#allocation2 + $0x848] sm:$0x1]
    %v3274 = vperm.slane %v3273, 0
    %v3276 = vsel %vm239, %v3268, 0
    %v3279 = vsel %vm239, %v3269, 0
    %v3282 = vsel %vm239, %v3270, 0
    %v3285 = vsel %vm239, %v3271, 0
    %3287 = vmatpush.msra.mxu0 0.0
    %3288 = vmatpush.msra.mxu0 0.0
    %3289 = vmatpush.msra.mxu0 0.0
    %3290 = vmatpush.msra.mxu0 0.0
    %3291 = vmatpush.msra.mxu0 0.0
    %3292 = vmatpush.msra.mxu0 0.0
    %3293 = vmatpush.msra.mxu0 0.0
    %3294 = vmatpush.msra.mxu0 0.0
    %3295 = vmatpush.msra.mxu0 0.0
    %3296 = vmatpush.msra.mxu0 0.0
    %3297 = vmatpush.msra.mxu0 0.0
    %3298 = vmatpush.msra.mxu0 0.0
    %3299 = vmatpush.msra.mxu0 0.0
    %3300 = vmatpush.msra.mxu0 0.0
    %3301 = vmatpush.msra.mxu0 0.0
    %3302 = vmatpush.msra.mxu0 %v3272
    %3303 = vmatmul.f32.gmra.mxu0 %v3276
    %v3304 = vpop.f32.mrf.mxu0
    %v3305 = vadd.f32 %v3274, %v3304
    %3306 = vmatmul.f32.gmra.mxu0 %v3279
    %v3307 = vpop.f32.mrf.mxu0
    %v3308 = vadd.f32 %v3274, %v3307
    %3309 = vmatmul.f32.gmra.mxu0 %v3282
    %v3310 = vpop.f32.mrf.mxu0
    %v3311 = vadd.f32 %v3274, %v3310
    %3312 = vmatmul.f32.gmra.mxu0 %v3285
    %v3313 = vpop.f32.mrf.mxu0
    %v3314 = vadd.f32 %v3274, %v3313
    %3315 = vdwg.mxu0
    %3316 = vst.msk [vmem:[%s2] sm:$0xff] %vm1867, %v3305
    %3317 = vst.msk [vmem:[%s2 + $0x8] sm:$0xff] %vm1867, %v3308
    %3318 = vst.msk [vmem:[%s2 + $0x10] sm:$0xff] %vm1867, %v3311
    %3319 = vst.msk [vmem:[%s2 + $0x18] sm:$0xff] %vm1867, %v3314
    // Predicated region
    $region14: #{forward.1} parent=1 // pred_check
      _
    $region15: #{forward.1} parent=1 // pred_check_branch
      %3321 = sbr.rel (0) target = $region17
    $region16: #{forward.1} parent=1 // pred_region
      _
    $region17: #{forward.1} parent=1 // pred_fallthru
      _
    // Predicated region
    $region18: #{forward.1} parent=1 // pred_check
      _
    $region19: #{forward.1} parent=1 // pred_check_branch
      %3323 = sbr.rel (0) target = $region21
    $region20: #{forward.1} parent=1 // pred_region
      _
    $region21: #{forward.1} parent=1 // pred_fallthru
      _
    %3324 = vsyncpa [#allocation3], 1

</llo_original>
